<compile_context>
chip_gen: v6e
topology: v6e:2x2x1
jax: 0.10.0
libtpu: 0.0.40
codegen_flags: <defaults>
</compile_context>

<pallas_src>
import functools

import jax
import jax.numpy as jnp
from jax.experimental import pallas as pl
from jax.experimental.pallas import tpu as pltpu

# ---------------- model hyper-params (small, consistent with the module; d_model scaled down) ----
D_MODEL = 64
N_HEADS = 8
D_K = D_MODEL // N_HEADS
D_FF = D_MODEL                      # spec: FeedForward(d_model, d_model, dropout)
LN_EPS = 1e-5                       # torch nn.LayerNorm default
NEG_INF = -1e30                     # finite "masked" value (no -inf / NaN risk)
SCALE = 1.0 / (D_K ** 0.5)


# ---------------- host-side helpers ----------------
def _pack(named):
    """Concat (name, (r, cols)) arrays along lanes; return slab + {name: (start, stop)}."""
    offs, o = {}, 0
    for name, a in named:
        offs[name] = (o, o + a.shape[-1])
        o += a.shape[-1]
    return jnp.concatenate([a for _, a in named], axis=-1), offs


def _head_rowmask(nk):
    # (H*nk, D): row h*nk + j has ones on columns h*D_K : (h+1)*D_K (head h's channels).
    h_idx = jnp.repeat(jnp.arange(N_HEADS), nk)            # (H*nk,)
    d_idx = jnp.arange(D_MODEL) // D_K                      # (D,)
    return (h_idx[:, None] == d_idx[None, :]).astype(jnp.float32)


def _block_ones(nk):
    # (H*nk, H*nk): ones inside each (nk, nk) diagonal block (per-head denominator matmul).
    h_idx = jnp.repeat(jnp.arange(N_HEADS), nk)
    return (h_idx[:, None] == h_idx[None, :]).astype(jnp.float32)


# ---------------- fused layer: single pallas_call, whole batch in one body ----------------
def concat_attention_layer(x, y, mask_x, mask_y, mask_pad, params):
    # mask_pad only applies in training mode (eval semantics here -> unused).
    del mask_pad
    B, NQ, D = x.shape
    NK = y.shape[1]
    assert D == D_MODEL

    p_s, p_c, p_f = params["self_att"], params["vis_att"], params["pwff"]

    # ---- pack all weights / biases / LN params into two lane-concatenated slabs ----
    w_slab, w_off = _pack([
        ("qkv_s", p_s["w_qkv"]), ("o_s", p_s["w_o"]),
        ("q_c", p_c["w_q"]), ("kv_c", p_c["w_kv"]), ("o_c", p_c["w_o"]),
        ("ff1", p_f["w1"]), ("ff2", p_f["w2"]),
    ])                                                       # (D, 640)
    b_slab, b_off = _pack([
        ("qkv_s", p_s["b_qkv"]), ("o_s", p_s["b_o"]),
        ("ln_g_s", p_s["ln_g"]), ("ln_b_s", p_s["ln_b"]),
        ("q_c", p_c["b_q"]), ("kv_c", p_c["b_kv"]), ("o_c", p_c["b_o"]),
        ("ln_g_c", p_c["ln_g"]), ("ln_b_c", p_c["ln_b"]),
        ("ff1", p_f["b1"]), ("ff2", p_f["b2"]),
        ("ln_g_f", p_f["ln_g"]), ("ln_b_f", p_f["ln_b"]),
    ])                                                       # (1, 1024)

    # ---- additive masks, pre-tiled per head -> lane-dense (B*NQ, H*NK) ----
    mx_add = jnp.where(mask_x.reshape(B, NQ, NQ), NEG_INF, 0.0).astype(jnp.float32)
    mx_add = jnp.tile(mx_add, (1, 1, N_HEADS)).reshape(B * NQ, N_HEADS * NQ)
    my_add = jnp.where(mask_y.reshape(B, NQ, NK), NEG_INF, 0.0).astype(jnp.float32)
    my_add = jnp.tile(my_add, (1, 1, N_HEADS)).reshape(B * NQ, N_HEADS * NK)

    # ---- precomputed block-structure constants (loaded once; no per-step iota rebuild) ----
    rm_s, ones_s = _head_rowmask(NQ), _block_ones(NQ)        # self attention (keys = NQ)
    rm_c, ones_c = _head_rowmask(NK), _block_ones(NK)        # cross attention (keys = NK)

    # ---- fold batch into sublanes for all row-wise ops ----
    x2 = x.reshape(B * NQ, D_MODEL)
    y2 = y.reshape(B * NK, D_MODEL)

    def kernel(x_ref, y_ref, mx_ref, my_ref, w_ref, b_ref,
               rm_s_ref, ones_s_ref, rm_c_ref, ones_c_ref,
               out_ref, attn_ref):

        def wseg(name):
            a, b = w_off[name]
            return w_ref[:, a:b]                             # static lane slice of the slab

        def bseg(name):
            a, b = b_off[name]
            return b_ref[:, a:b]

        def layer_norm(r, g, beta):
            mu = jnp.mean(r, axis=-1, keepdims=True)
            d = r - mu
            var = jnp.mean(d * d, axis=-1, keepdims=True)
            return d * jax.lax.rsqrt(var + LN_EPS) * g + beta

        def attention(q, k, v, mask_add, rowmask, ones_bd):
            """Block-diagonal all-heads attention: 3 MXU pushes, no per-head loop.

            q: (NQ, D); k, v: (nk, D); mask_add: (NQ, H*nk) additive;
            rowmask: (H*nk, D) 0/1 head mask; ones_bd: (H*nk, H*nk) block-ones."""
            k_exp = jnp.concatenate([k] * N_HEADS, axis=0) * rowmask   # (H*nk, D) block-diag
            v_exp = jnp.concatenate([v] * N_HEADS, axis=0) * rowmask   # (H*nk, D) block-diag
            # scores: column h*nk + j = <q[:, head h], k[j, head h]>; contraction over D folds
            # the transpose into the MXU feed (no explicit k.T).
            s = jax.lax.dot_general(q, k_exp, (((1,), (1,)), ((), ())),
                                    preferred_element_type=jnp.float32) * SCALE
            s = s + mask_add                                  # additive mask: plain VPU add
            s = s - jnp.max(s, axis=-1, keepdims=True)        # full-row max; cancels per head
            e = jnp.exp(s)
            denom = jnp.dot(e, ones_bd, preferred_element_type=jnp.float32)  # per-head sums
            p = e / denom                                     # exact softmax (rows sum to 1)
            ctx = jnp.dot(p, v_exp, preferred_element_type=jnp.float32)      # (NQ, D), heads concat'd
            return ctx, p

        x_all = x_ref[...]                                    # (B*NQ, D)
        y_all = y_ref[...]                                    # (B*NK, D)
        mx = mx_ref[...]                                      # (B*NQ, H*NQ) additive
        my = my_ref[...]                                      # (B*NQ, H*NK) additive
        rm_s_v, ones_s_v = rm_s_ref[...], ones_s_ref[...]
        rm_c_v, ones_c_v = rm_c_ref[...], ones_c_ref[...]

        # ---- self attention + residual + LayerNorm ----
        qkv = jnp.dot(x_all, wseg("qkv_s"),
                      preferred_element_type=jnp.float32) + bseg("qkv_s")   # (B*NQ, 3D) fused
        ctx_parts, p_parts = [], []
        for bi in range(B):                                   # static 2-way unroll over batch
            r = slice(bi * NQ, (bi + 1) * NQ)
            c, p = attention(qkv[r, 0:D_MODEL],
                             qkv[r, D_MODEL:2 * D_MODEL],
                             qkv[r, 2 * D_MODEL:3 * D_MODEL],
                             mx[r, :], rm_s_v, ones_s_v)
            ctx_parts.append(c)
            p_parts.append(p)
        attn_ref[...] = jnp.concatenate(p_parts, axis=0)      # ONE lane-dense (B*NQ, H*NQ) store
        ctx = jnp.concatenate(ctx_parts, axis=0)              # (B*NQ, D)
        o_s = jnp.dot(ctx, wseg("o_s"), preferred_element_type=jnp.float32) + bseg("o_s")
        h1 = layer_norm(x_all + o_s, bseg("ln_g_s"), bseg("ln_b_s"))

        # ---- cross (visual) attention + residual + LayerNorm ----
        qc = jnp.dot(h1, wseg("q_c"), preferred_element_type=jnp.float32) + bseg("q_c")
        kvc = jnp.dot(y_all, wseg("kv_c"),
                      preferred_element_type=jnp.float32) + bseg("kv_c")    # (B*NK, 2D) fused
        ctx_parts = []
        for bi in range(B):
            rq = slice(bi * NQ, (bi + 1) * NQ)
            rk = slice(bi * NK, (bi + 1) * NK)
            c, _ = attention(qc[rq, :],
                             kvc[rk, 0:D_MODEL],
                             kvc[rk, D_MODEL:2 * D_MODEL],
                             my[rq, :], rm_c_v, ones_c_v)
            ctx_parts.append(c)
        ctx_c = jnp.concatenate(ctx_parts, axis=0)
        o_c = jnp.dot(ctx_c, wseg("o_c"), preferred_element_type=jnp.float32) + bseg("o_c")
        h2 = layer_norm(h1 + o_c, bseg("ln_g_c"), bseg("ln_b_c"))

        # ---- position-wise FFN + residual + LayerNorm ----
        f = jnp.dot(h2, wseg("ff1"), preferred_element_type=jnp.float32) + bseg("ff1")
        f = jnp.maximum(f, 0.0)
        f = jnp.dot(f, wseg("ff2"), preferred_element_type=jnp.float32) + bseg("ff2")
        o = layer_norm(h2 + f, bseg("ln_g_f"), bseg("ln_b_f"))

        # lane-dense (NQ, B*D) = (16, 128) output slab -> unmasked vst; wrapper unpacks.
        out_ref[...] = jnp.concatenate([o[bi * NQ:(bi + 1) * NQ, :] for bi in range(B)], axis=1)

    def full2d(a):
        return pl.BlockSpec(a.shape, lambda i: (0, 0))

    inputs = (x2, y2, mx_add, my_add, w_slab, b_slab, rm_s, ones_s, rm_c, ones_c)

    out_slab, attn_flat = pl.pallas_call(
        kernel,
        out_shape=(jax.ShapeDtypeStruct((NQ, B * D_MODEL), jnp.float32),
                   jax.ShapeDtypeStruct((B * NQ, N_HEADS * NQ), jnp.float32)),
        grid=(1,),                                            # single invocation; batch folded
        in_specs=[full2d(a) for a in inputs],
        out_specs=(pl.BlockSpec((NQ, B * D_MODEL), lambda i: (0, 0)),
                   pl.BlockSpec((B * NQ, N_HEADS * NQ), lambda i: (0, 0))),
        compiler_params=pltpu.CompilerParams(dimension_semantics=("arbitrary",)),
    )(*inputs)

    # (NQ, B*D) -> (B, NQ, D); (B*NQ, H*NQ) -> (B, H, NQ, NQ). Cheap XLA reshapes outside kernel.
    out = out_slab.reshape(NQ, B, D_MODEL).transpose(1, 0, 2)
    attn = attn_flat.reshape(B, NQ, N_HEADS, NQ).transpose(0, 2, 1, 3)
    return out, attn


# ---------------- deterministic parameter init (weights stored (in, out), QKV / KV fused) -------
def _init_linear(key, in_dim, out_dim):
    k1, k2 = jax.random.split(key)
    w = jax.random.normal(k1, (in_dim, out_dim), jnp.float32) * 0.05
    b = jax.random.normal(k2, (1, out_dim), jnp.float32) * 0.05
    return w, b


def _init_self_mha(key):
    ks = jax.random.split(key, 4)
    wq, bq = _init_linear(ks[0], D_MODEL, D_MODEL)
    wk, bk = _init_linear(ks[1], D_MODEL, D_MODEL)
    wv, bv = _init_linear(ks[2], D_MODEL, D_MODEL)
    wo, bo = _init_linear(ks[3], D_MODEL, D_MODEL)
    return dict(w_qkv=jnp.concatenate([wq, wk, wv], axis=1),   # (D, 3D) fused
                b_qkv=jnp.concatenate([bq, bk, bv], axis=1),   # (1, 3D)
                w_o=wo, b_o=bo,
                ln_g=jnp.ones((1, D_MODEL), jnp.float32),
                ln_b=jnp.zeros((1, D_MODEL), jnp.float32))


def _init_cross_mha(key):
    ks = jax.random.split(key, 4)
    wq, bq = _init_linear(ks[0], D_MODEL, D_MODEL)
    wk, bk = _init_linear(ks[1], D_MODEL, D_MODEL)
    wv, bv = _init_linear(ks[2], D_MODEL, D_MODEL)
    wo, bo = _init_linear(ks[3], D_MODEL, D_MODEL)
    return dict(w_q=wq, b_q=bq,
                w_kv=jnp.concatenate([wk, wv], axis=1),        # (D, 2D) fused K/V
                b_kv=jnp.concatenate([bk, bv], axis=1),        # (1, 2D)
                w_o=wo, b_o=bo,
                ln_g=jnp.ones((1, D_MODEL), jnp.float32),
                ln_b=jnp.zeros((1, D_MODEL), jnp.float32))


def _init_ffn(key):
    k1, k2 = jax.random.split(key)
    w1, b1 = _init_linear(k1, D_MODEL, D_FF)
    w2, b2 = _init_linear(k2, D_FF, D_MODEL)
    return dict(w1=w1, b1=b1, w2=w2, b2=b2,
                ln_g=jnp.ones((1, D_MODEL), jnp.float32),
                ln_b=jnp.zeros((1, D_MODEL), jnp.float32))


def init_params(key):
    k1, k2, k3 = jax.random.split(key, 3)
    return dict(self_att=_init_self_mha(k1), vis_att=_init_cross_mha(k2), pwff=_init_ffn(k3))


# ---------------- pure-JAX reference (eval mode) for correctness check ----------------
def reference_forward(x, y, mask_x, mask_y, params):
    def layer_norm(r, g, b):
        mu = r.mean(-1, keepdims=True)
        var = ((r - mu) ** 2).mean(-1, keepdims=True)
        return (r - mu) / jnp.sqrt(var + LN_EPS) * g + b

    def split_heads(t):
        b, n, _ = t.shape
        return t.reshape(b, n, N_HEADS, D_K).transpose(0, 2, 1, 3)

    def mha(q_in, kv_in, mask, wq, bq, wk, bk, wv, bv, wo, bo, g, be):
        q = split_heads(q_in @ wq + bq)
        k = split_heads(kv_in @ wk + bk)
        v = split_heads(kv_in @ wv + bv)
        s = jnp.einsum("bhqd,bhkd->bhqk", q, k) * SCALE
        s = jnp.where(mask, NEG_INF, s)
        p = jax.nn.softmax(s, axis=-1)
        ctx = jnp.einsum("bhqk,bhkd->bhqd", p, v)
        ctx = ctx.transpose(0, 2, 1, 3).reshape(q_in.shape[0], q_in.shape[1], D_MODEL)
        return layer_norm(q_in + ctx @ wo + bo, g, be), p

    ps, pc, pf = params["self_att"], params["vis_att"], params["pwff"]
    wq, wk, wv = (ps["w_qkv"][:, :D_MODEL], ps["w_qkv"][:, D_MODEL:2 * D_MODEL],
                  ps["w_qkv"][:, 2 * D_MODEL:])
    bq, bk, bv = (ps["b_qkv"][:, :D_MODEL], ps["b_qkv"][:, D_MODEL:2 * D_MODEL],
                  ps["b_qkv"][:, 2 * D_MODEL:])
    h1, attn = mha(x, x, mask_x, wq, bq, wk, bk, wv, bv,
                   ps["w_o"], ps["b_o"], ps["ln_g"], ps["ln_b"])
    wkc, wvc = pc["w_kv"][:, :D_MODEL], pc["w_kv"][:, D_MODEL:]
    bkc, bvc = pc["b_kv"][:, :D_MODEL], pc["b_kv"][:, D_MODEL:]
    h2, _ = mha(h1, y, mask_y, pc["w_q"], pc["b_q"], wkc, bkc, wvc, bvc,
                pc["w_o"], pc["b_o"], pc["ln_g"], pc["ln_b"])
    f = jnp.maximum(h2 @ pf["w1"] + pf["b1"], 0.0) @ pf["w2"] + pf["b2"]
    return layer_norm(h2 + f, pf["ln_g"], pf["ln_b"]), attn


# ---------------- main ----------------
if __name__ == "__main__":
    B, NQ, NK = 2, 16, 16

    root = jax.random.PRNGKey(0)
    k_par, k_x, k_y = jax.random.split(root, 3)
    params = init_params(k_par)

    x = jax.random.normal(k_x, (B, NQ, D_MODEL), jnp.float32)
    y = jax.random.normal(k_y, (B, NK, D_MODEL), jnp.float32)

    # self-attention mask: causal (True == masked, above diagonal)
    causal = jnp.triu(jnp.ones((NQ, NQ), jnp.bool_), k=1)
    mask_x = jnp.broadcast_to(causal[None, None], (B, 1, NQ, NQ))
    # visual mask: last 3 key positions padded out
    key_pad = jnp.arange(NK) >= NK - 3
    mask_y = jnp.broadcast_to(key_pad[None, None, None], (B, 1, NQ, NK))
    # mask_pad (used only in training mode)
    mask_pad = jnp.ones((B, NQ, 1), jnp.float32)

    fwd = jax.jit(functools.partial(concat_attention_layer, params=params))
    out, self_attn_weights = fwd(x, y, mask_x, mask_y, mask_pad)
    jax.block_until_ready((out, self_attn_weights))

    assert out.shape == (B, NQ, D_MODEL)
    assert self_attn_weights.shape == (B, N_HEADS, NQ, NQ)
    assert bool(jnp.all(jnp.isfinite(out)))
    # exact softmax division -> rows sum to 1 at f32 accuracy
    assert bool(jnp.allclose(jnp.sum(self_attn_weights, axis=-1), 1.0, atol=1e-3))

    # compare against the pure-JAX reference (highest matmul precision for a fair f32 baseline)
    with jax.default_matmul_precision("highest"):
        ref_out, ref_attn = reference_forward(x, y, mask_x, mask_y, params)
    assert bool(jnp.allclose(out, ref_out, atol=2e-3, rtol=2e-3))
    assert bool(jnp.allclose(self_attn_weights, ref_attn, atol=1e-3))

    print("KERNEL_OK")
</pallas_src>

<mosaic_0001>
module attributes {stable_mosaic.version = 11 : i64} {
  func.func @kernel(%arg0: i32, %arg1: memref<32x64xf32, #tpu.memory_space<vmem>>, %arg2: memref<32x64xf32, #tpu.memory_space<vmem>>, %arg3: memref<32x128xf32, #tpu.memory_space<vmem>>, %arg4: memref<32x128xf32, #tpu.memory_space<vmem>>, %arg5: memref<64x640xf32, #tpu.memory_space<vmem>>, %arg6: memref<1x1024xf32, #tpu.memory_space<vmem>>, %arg7: memref<128x64xf32, #tpu.memory_space<vmem>>, %arg8: memref<128x128xf32, #tpu.memory_space<vmem>>, %arg9: memref<128x64xf32, #tpu.memory_space<vmem>>, %arg10: memref<128x128xf32, #tpu.memory_space<vmem>>, %arg11: memref<16x128xf32, #tpu.memory_space<vmem>>, %arg12: memref<32x128xf32, #tpu.memory_space<vmem>>) attributes {dimension_semantics = [#tpu.dimension_semantics<arbitrary>], iteration_bounds = array<i64: 1>, scalar_prefetch = 0 : i64, scratch_operands = 0 : i64, tpu.core_type = #tpu.core_type<tc>, window_params = [{pipeline_mode = #tpu.pipeline_mode<synchronous>, transform_indices = @transform_0, window_bounds = array<i64: 32, 64>}, {pipeline_mode = #tpu.pipeline_mode<synchronous>, transform_indices = @transform_1, window_bounds = array<i64: 32, 64>}, {pipeline_mode = #tpu.pipeline_mode<synchronous>, transform_indices = @transform_2, window_bounds = array<i64: 32, 128>}, {pipeline_mode = #tpu.pipeline_mode<synchronous>, transform_indices = @transform_3, window_bounds = array<i64: 32, 128>}, {pipeline_mode = #tpu.pipeline_mode<synchronous>, transform_indices = @transform_4, window_bounds = array<i64: 64, 640>}, {pipeline_mode = #tpu.pipeline_mode<synchronous>, transform_indices = @transform_5, window_bounds = array<i64: 1, 1024>}, {pipeline_mode = #tpu.pipeline_mode<synchronous>, transform_indices = @transform_6, window_bounds = array<i64: 128, 64>}, {pipeline_mode = #tpu.pipeline_mode<synchronous>, transform_indices = @transform_7, window_bounds = array<i64: 128, 128>}, {pipeline_mode = #tpu.pipeline_mode<synchronous>, transform_indices = @transform_8, window_bounds = array<i64: 128, 64>}, {pipeline_mode = #tpu.pipeline_mode<synchronous>, transform_indices = @transform_9, window_bounds = array<i64: 128, 128>}, {pipeline_mode = #tpu.pipeline_mode<synchronous>, transform_indices = @transform_10, window_bounds = array<i64: 16, 128>}, {pipeline_mode = #tpu.pipeline_mode<synchronous>, transform_indices = @transform_11, window_bounds = array<i64: 32, 128>}]} {
    %c0 = arith.constant 0 : index
    %c0_0 = arith.constant 0 : index
    %0 = vector.load %arg1[%c0, %c0_0] : memref<32x64xf32, #tpu.memory_space<vmem>>, vector<32x64xf32>
    %c0_1 = arith.constant 0 : index
    %c0_2 = arith.constant 0 : index
    %1 = vector.load %arg2[%c0_1, %c0_2] : memref<32x64xf32, #tpu.memory_space<vmem>>, vector<32x64xf32>
    %c0_3 = arith.constant 0 : index
    %c0_4 = arith.constant 0 : index
    %2 = vector.load %arg3[%c0_3, %c0_4] : memref<32x128xf32, #tpu.memory_space<vmem>>, vector<32x128xf32>
    %c0_5 = arith.constant 0 : index
    %c0_6 = arith.constant 0 : index
    %3 = vector.load %arg4[%c0_5, %c0_6] : memref<32x128xf32, #tpu.memory_space<vmem>>, vector<32x128xf32>
    %c0_7 = arith.constant 0 : index
    %c0_8 = arith.constant 0 : index
    %4 = vector.load %arg7[%c0_7, %c0_8] : memref<128x64xf32, #tpu.memory_space<vmem>>, vector<128x64xf32>
    %c0_9 = arith.constant 0 : index
    %c0_10 = arith.constant 0 : index
    %5 = vector.load %arg8[%c0_9, %c0_10] : memref<128x128xf32, #tpu.memory_space<vmem>>, vector<128x128xf32>
    %c0_11 = arith.constant 0 : index
    %c0_12 = arith.constant 0 : index
    %6 = vector.load %arg9[%c0_11, %c0_12] : memref<128x64xf32, #tpu.memory_space<vmem>>, vector<128x64xf32>
    %c0_13 = arith.constant 0 : index
    %c0_14 = arith.constant 0 : index
    %7 = vector.load %arg10[%c0_13, %c0_14] : memref<128x128xf32, #tpu.memory_space<vmem>>, vector<128x128xf32>
    %c0_15 = arith.constant 0 : index
    %c0_16 = arith.constant 0 : index
    %8 = vector.load %arg5[%c0_15, %c0_16] : memref<64x640xf32, #tpu.memory_space<vmem>>, vector<64x192xf32>
    %cst = arith.constant dense<0.000000e+00> : vector<32x192xf32>
    %9 = tpu.matmul %0, %8, %cst {dimension_numbers = #tpu.dot_dimension_numbers<[1], [0], [0], [1], [0, 0, 1, 1], [], []>} : vector<32x64xf32>, vector<64x192xf32>, vector<32x192xf32> -> vector<32x192xf32>
    %c0_17 = arith.constant 0 : index
    %c0_18 = arith.constant 0 : index
    %10 = vector.load %arg6[%c0_17, %c0_18] : memref<1x1024xf32, #tpu.memory_space<vmem>>, vector<1x192xf32>
    %11 = vector.broadcast %10 : vector<1x192xf32> to vector<32x192xf32>
    %12 = arith.addf %9, %11 : vector<32x192xf32>
    %13 = vector.extract_strided_slice %12 {offsets = [0, 0], sizes = [16, 64], strides = [1, 1]} : vector<32x192xf32> to vector<16x64xf32>
    %14 = vector.extract_strided_slice %12 {offsets = [0, 64], sizes = [16, 64], strides = [1, 1]} : vector<32x192xf32> to vector<16x64xf32>
    %15 = vector.extract_strided_slice %12 {offsets = [0, 128], sizes = [16, 64], strides = [1, 1]} : vector<32x192xf32> to vector<16x64xf32>
    %16 = vector.extract_strided_slice %2 {offsets = [0, 0], sizes = [16, 128], strides = [1, 1]} : vector<32x128xf32> to vector<16x128xf32>
    %17 = tpu.concatenate %14, %14, %14, %14, %14, %14, %14, %14 in 0 : vector<16x64xf32>, vector<16x64xf32>, vector<16x64xf32>, vector<16x64xf32>, vector<16x64xf32>, vector<16x64xf32>, vector<16x64xf32>, vector<16x64xf32> -> vector<128x64xf32>
    %18 = arith.mulf %17, %4 : vector<128x64xf32>
    %19 = tpu.concatenate %15, %15, %15, %15, %15, %15, %15, %15 in 0 : vector<16x64xf32>, vector<16x64xf32>, vector<16x64xf32>, vector<16x64xf32>, vector<16x64xf32>, vector<16x64xf32>, vector<16x64xf32>, vector<16x64xf32> -> vector<128x64xf32>
    %20 = arith.mulf %19, %4 : vector<128x64xf32>
    %cst_19 = arith.constant dense<0.000000e+00> : vector<16x128xf32>
    %21 = tpu.matmul %13, %18, %cst_19 {dimension_numbers = #tpu.dot_dimension_numbers<[1], [1], [0], [0], [0, 0, 1, 0], [], []>} : vector<16x64xf32>, vector<128x64xf32>, vector<16x128xf32> -> vector<16x128xf32>
    %cst_20 = arith.constant 0.353553385 : f32
    %22 = vector.broadcast %cst_20 : f32 to vector<16x128xf32>
    %23 = arith.mulf %21, %22 : vector<16x128xf32>
    %24 = arith.addf %23, %16 : vector<16x128xf32>
    %cst_21 = arith.constant dense<0xFF800000> : vector<16xf32>
    %25 = vector.multi_reduction <maximumf>, %24, %cst_21 [1] : vector<16x128xf32> to vector<16xf32>
    %26 = vector.shape_cast %25 : vector<16xf32> to vector<16x1xf32>
    %27 = vector.broadcast %26 : vector<16x1xf32> to vector<16x128xf32>
    %28 = arith.subf %24, %27 : vector<16x128xf32>
    %29 = math.exp %28 : vector<16x128xf32>
    %cst_22 = arith.constant dense<0.000000e+00> : vector<16x128xf32>
    %30 = tpu.matmul %29, %5, %cst_22 {dimension_numbers = #tpu.dot_dimension_numbers<[1], [0], [0], [1], [0, 0, 1, 1], [], []>} : vector<16x128xf32>, vector<128x128xf32>, vector<16x128xf32> -> vector<16x128xf32>
    %31 = arith.divf %29, %30 : vector<16x128xf32>
    %cst_23 = arith.constant dense<0.000000e+00> : vector<16x64xf32>
    %32 = tpu.matmul %31, %20, %cst_23 {dimension_numbers = #tpu.dot_dimension_numbers<[1], [0], [0], [1], [0, 0, 1, 1], [], []>} : vector<16x128xf32>, vector<128x64xf32>, vector<16x64xf32> -> vector<16x64xf32>
    %33 = vector.extract_strided_slice %12 {offsets = [16, 0], sizes = [16, 64], strides = [1, 1]} : vector<32x192xf32> to vector<16x64xf32>
    %34 = vector.extract_strided_slice %12 {offsets = [16, 64], sizes = [16, 64], strides = [1, 1]} : vector<32x192xf32> to vector<16x64xf32>
    %35 = vector.extract_strided_slice %12 {offsets = [16, 128], sizes = [16, 64], strides = [1, 1]} : vector<32x192xf32> to vector<16x64xf32>
    %36 = vector.extract_strided_slice %2 {offsets = [16, 0], sizes = [16, 128], strides = [1, 1]} : vector<32x128xf32> to vector<16x128xf32>
    %37 = tpu.concatenate %34, %34, %34, %34, %34, %34, %34, %34 in 0 : vector<16x64xf32>, vector<16x64xf32>, vector<16x64xf32>, vector<16x64xf32>, vector<16x64xf32>, vector<16x64xf32>, vector<16x64xf32>, vector<16x64xf32> -> vector<128x64xf32>
    %38 = arith.mulf %37, %4 : vector<128x64xf32>
    %39 = tpu.concatenate %35, %35, %35, %35, %35, %35, %35, %35 in 0 : vector<16x64xf32>, vector<16x64xf32>, vector<16x64xf32>, vector<16x64xf32>, vector<16x64xf32>, vector<16x64xf32>, vector<16x64xf32>, vector<16x64xf32> -> vector<128x64xf32>
    %40 = arith.mulf %39, %4 : vector<128x64xf32>
    %cst_24 = arith.constant dense<0.000000e+00> : vector<16x128xf32>
    %41 = tpu.matmul %33, %38, %cst_24 {dimension_numbers = #tpu.dot_dimension_numbers<[1], [1], [0], [0], [0, 0, 1, 0], [], []>} : vector<16x64xf32>, vector<128x64xf32>, vector<16x128xf32> -> vector<16x128xf32>
    %cst_25 = arith.constant 0.353553385 : f32
    %42 = vector.broadcast %cst_25 : f32 to vector<16x128xf32>
    %43 = arith.mulf %41, %42 : vector<16x128xf32>
    %44 = arith.addf %43, %36 : vector<16x128xf32>
    %cst_26 = arith.constant dense<0xFF800000> : vector<16xf32>
    %45 = vector.multi_reduction <maximumf>, %44, %cst_26 [1] : vector<16x128xf32> to vector<16xf32>
    %46 = vector.shape_cast %45 : vector<16xf32> to vector<16x1xf32>
    %47 = vector.broadcast %46 : vector<16x1xf32> to vector<16x128xf32>
    %48 = arith.subf %44, %47 : vector<16x128xf32>
    %49 = math.exp %48 : vector<16x128xf32>
    %cst_27 = arith.constant dense<0.000000e+00> : vector<16x128xf32>
    %50 = tpu.matmul %49, %5, %cst_27 {dimension_numbers = #tpu.dot_dimension_numbers<[1], [0], [0], [1], [0, 0, 1, 1], [], []>} : vector<16x128xf32>, vector<128x128xf32>, vector<16x128xf32> -> vector<16x128xf32>
    %51 = arith.divf %49, %50 : vector<16x128xf32>
    %cst_28 = arith.constant dense<0.000000e+00> : vector<16x64xf32>
    %52 = tpu.matmul %51, %40, %cst_28 {dimension_numbers = #tpu.dot_dimension_numbers<[1], [0], [0], [1], [0, 0, 1, 1], [], []>} : vector<16x128xf32>, vector<128x64xf32>, vector<16x64xf32> -> vector<16x64xf32>
    %53 = tpu.concatenate %31, %51 in 0 : vector<16x128xf32>, vector<16x128xf32> -> vector<32x128xf32>
    %c0_29 = arith.constant 0 : index
    %c0_30 = arith.constant 0 : index
    %54 = vector.load %arg12[%c0_29, %c0_30] : memref<32x128xf32, #tpu.memory_space<vmem>>, vector<32x128xf32>
    tpu.vector_store %arg12[%c0_29, %c0_30], %53 {strides = array<i32>} : memref<32x128xf32, #tpu.memory_space<vmem>>, vector<32x128xf32>,
    %55 = tpu.concatenate %32, %52 in 0 : vector<16x64xf32>, vector<16x64xf32> -> vector<32x64xf32>
    %c0_31 = arith.constant 0 : index
    %c192 = arith.constant 192 : index
    %56 = vector.load %arg5[%c0_31, %c192] : memref<64x640xf32, #tpu.memory_space<vmem>>, vector<64x64xf32>
    %cst_32 = arith.constant dense<0.000000e+00> : vector<32x64xf32>
    %57 = tpu.matmul %55, %56, %cst_32 {dimension_numbers = #tpu.dot_dimension_numbers<[1], [0], [0], [1], [0, 0, 1, 1], [], []>} : vector<32x64xf32>, vector<64x64xf32>, vector<32x64xf32> -> vector<32x64xf32>
    %c0_33 = arith.constant 0 : index
    %c192_34 = arith.constant 192 : index
    %58 = vector.load %arg6[%c0_33, %c192_34] : memref<1x1024xf32, #tpu.memory_space<vmem>>, vector<1x64xf32>
    %59 = vector.broadcast %58 : vector<1x64xf32> to vector<32x64xf32>
    %60 = arith.addf %57, %59 : vector<32x64xf32>
    %61 = arith.addf %0, %60 : vector<32x64xf32>
    %c0_35 = arith.constant 0 : index
    %c256 = arith.constant 256 : index
    %62 = vector.load %arg6[%c0_35, %c256] : memref<1x1024xf32, #tpu.memory_space<vmem>>, vector<1x64xf32>
    %c0_36 = arith.constant 0 : index
    %c320 = arith.constant 320 : index
    %63 = vector.load %arg6[%c0_36, %c320] : memref<1x1024xf32, #tpu.memory_space<vmem>>, vector<1x64xf32>
    %cst_37 = arith.constant dense<0.000000e+00> : vector<32xf32>
    %64 = vector.multi_reduction <add>, %61, %cst_37 [1] : vector<32x64xf32> to vector<32xf32>
    %65 = vector.shape_cast %64 : vector<32xf32> to vector<32x1xf32>
    %cst_38 = arith.constant 6.400000e+01 : f32
    %66 = vector.broadcast %cst_38 : f32 to vector<32x1xf32>
    %67 = arith.divf %65, %66 : vector<32x1xf32>
    %68 = vector.broadcast %67 : vector<32x1xf32> to vector<32x64xf32>
    %69 = arith.subf %61, %68 : vector<32x64xf32>
    %70 = arith.mulf %69, %69 : vector<32x64xf32>
    %cst_39 = arith.constant dense<0.000000e+00> : vector<32xf32>
    %71 = vector.multi_reduction <add>, %70, %cst_39 [1] : vector<32x64xf32> to vector<32xf32>
    %72 = vector.shape_cast %71 : vector<32xf32> to vector<32x1xf32>
    %cst_40 = arith.constant 6.400000e+01 : f32
    %73 = vector.broadcast %cst_40 : f32 to vector<32x1xf32>
    %74 = arith.divf %72, %73 : vector<32x1xf32>
    %cst_41 = arith.constant 9.99999974E-6 : f32
    %75 = vector.broadcast %cst_41 : f32 to vector<32x1xf32>
    %76 = arith.addf %74, %75 : vector<32x1xf32>
    %77 = math.rsqrt %76 : vector<32x1xf32>
    %78 = vector.broadcast %77 : vector<32x1xf32> to vector<32x64xf32>
    %79 = arith.mulf %69, %78 : vector<32x64xf32>
    %80 = vector.broadcast %62 : vector<1x64xf32> to vector<32x64xf32>
    %81 = arith.mulf %79, %80 : vector<32x64xf32>
    %82 = vector.broadcast %63 : vector<1x64xf32> to vector<32x64xf32>
    %83 = arith.addf %81, %82 : vector<32x64xf32>
    %c0_42 = arith.constant 0 : index
    %c256_43 = arith.constant 256 : index
    %84 = vector.load %arg5[%c0_42, %c256_43] : memref<64x640xf32, #tpu.memory_space<vmem>>, vector<64x64xf32>
    %cst_44 = arith.constant dense<0.000000e+00> : vector<32x64xf32>
    %85 = tpu.matmul %83, %84, %cst_44 {dimension_numbers = #tpu.dot_dimension_numbers<[1], [0], [0], [1], [0, 0, 1, 1], [], []>} : vector<32x64xf32>, vector<64x64xf32>, vector<32x64xf32> -> vector<32x64xf32>
    %c0_45 = arith.constant 0 : index
    %c384 = arith.constant 384 : index
    %86 = vector.load %arg6[%c0_45, %c384] : memref<1x1024xf32, #tpu.memory_space<vmem>>, vector<1x64xf32>
    %87 = vector.broadcast %86 : vector<1x64xf32> to vector<32x64xf32>
    %88 = arith.addf %85, %87 : vector<32x64xf32>
    %c0_46 = arith.constant 0 : index
    %c320_47 = arith.constant 320 : index
    %89 = vector.load %arg5[%c0_46, %c320_47] : memref<64x640xf32, #tpu.memory_space<vmem>>, vector<64x128xf32>
    %cst_48 = arith.constant dense<0.000000e+00> : vector<32x128xf32>
    %90 = tpu.matmul %1, %89, %cst_48 {dimension_numbers = #tpu.dot_dimension_numbers<[1], [0], [0], [1], [0, 0, 1, 1], [], []>} : vector<32x64xf32>, vector<64x128xf32>, vector<32x128xf32> -> vector<32x128xf32>
    %c0_49 = arith.constant 0 : index
    %c448 = arith.constant 448 : index
    %91 = vector.load %arg6[%c0_49, %c448] : memref<1x1024xf32, #tpu.memory_space<vmem>>, vector<1x128xf32>
    %92 = vector.broadcast %91 : vector<1x128xf32> to vector<32x128xf32>
    %93 = arith.addf %90, %92 : vector<32x128xf32>
    %94 = vector.extract_strided_slice %88 {offsets = [0, 0], sizes = [16, 64], strides = [1, 1]} : vector<32x64xf32> to vector<16x64xf32>
    %95 = vector.extract_strided_slice %93 {offsets = [0, 0], sizes = [16, 64], strides = [1, 1]} : vector<32x128xf32> to vector<16x64xf32>
    %96 = vector.extract_strided_slice %93 {offsets = [0, 64], sizes = [16, 64], strides = [1, 1]} : vector<32x128xf32> to vector<16x64xf32>
    %97 = vector.extract_strided_slice %3 {offsets = [0, 0], sizes = [16, 128], strides = [1, 1]} : vector<32x128xf32> to vector<16x128xf32>
    %98 = tpu.concatenate %95, %95, %95, %95, %95, %95, %95, %95 in 0 : vector<16x64xf32>, vector<16x64xf32>, vector<16x64xf32>, vector<16x64xf32>, vector<16x64xf32>, vector<16x64xf32>, vector<16x64xf32>, vector<16x64xf32> -> vector<128x64xf32>
    %99 = arith.mulf %98, %6 : vector<128x64xf32>
    %100 = tpu.concatenate %96, %96, %96, %96, %96, %96, %96, %96 in 0 : vector<16x64xf32>, vector<16x64xf32>, vector<16x64xf32>, vector<16x64xf32>, vector<16x64xf32>, vector<16x64xf32>, vector<16x64xf32>, vector<16x64xf32> -> vector<128x64xf32>
    %101 = arith.mulf %100, %6 : vector<128x64xf32>
    %cst_50 = arith.constant dense<0.000000e+00> : vector<16x128xf32>
    %102 = tpu.matmul %94, %99, %cst_50 {dimension_numbers = #tpu.dot_dimension_numbers<[1], [1], [0], [0], [0, 0, 1, 0], [], []>} : vector<16x64xf32>, vector<128x64xf32>, vector<16x128xf32> -> vector<16x128xf32>
    %cst_51 = arith.constant 0.353553385 : f32
    %103 = vector.broadcast %cst_51 : f32 to vector<16x128xf32>
    %104 = arith.mulf %102, %103 : vector<16x128xf32>
    %105 = arith.addf %104, %97 : vector<16x128xf32>
    %cst_52 = arith.constant dense<0xFF800000> : vector<16xf32>
    %106 = vector.multi_reduction <maximumf>, %105, %cst_52 [1] : vector<16x128xf32> to vector<16xf32>
    %107 = vector.shape_cast %106 : vector<16xf32> to vector<16x1xf32>
    %108 = vector.broadcast %107 : vector<16x1xf32> to vector<16x128xf32>
    %109 = arith.subf %105, %108 : vector<16x128xf32>
    %110 = math.exp %109 : vector<16x128xf32>
    %cst_53 = arith.constant dense<0.000000e+00> : vector<16x128xf32>
    %111 = tpu.matmul %110, %7, %cst_53 {dimension_numbers = #tpu.dot_dimension_numbers<[1], [0], [0], [1], [0, 0, 1, 1], [], []>} : vector<16x128xf32>, vector<128x128xf32>, vector<16x128xf32> -> vector<16x128xf32>
    %112 = arith.divf %110, %111 : vector<16x128xf32>
    %cst_54 = arith.constant dense<0.000000e+00> : vector<16x64xf32>
    %113 = tpu.matmul %112, %101, %cst_54 {dimension_numbers = #tpu.dot_dimension_numbers<[1], [0], [0], [1], [0, 0, 1, 1], [], []>} : vector<16x128xf32>, vector<128x64xf32>, vector<16x64xf32> -> vector<16x64xf32>
    %114 = vector.extract_strided_slice %88 {offsets = [16, 0], sizes = [16, 64], strides = [1, 1]} : vector<32x64xf32> to vector<16x64xf32>
    %115 = vector.extract_strided_slice %93 {offsets = [16, 0], sizes = [16, 64], strides = [1, 1]} : vector<32x128xf32> to vector<16x64xf32>
    %116 = vector.extract_strided_slice %93 {offsets = [16, 64], sizes = [16, 64], strides = [1, 1]} : vector<32x128xf32> to vector<16x64xf32>
    %117 = vector.extract_strided_slice %3 {offsets = [16, 0], sizes = [16, 128], strides = [1, 1]} : vector<32x128xf32> to vector<16x128xf32>
    %118 = tpu.concatenate %115, %115, %115, %115, %115, %115, %115, %115 in 0 : vector<16x64xf32>, vector<16x64xf32>, vector<16x64xf32>, vector<16x64xf32>, vector<16x64xf32>, vector<16x64xf32>, vector<16x64xf32>, vector<16x64xf32> -> vector<128x64xf32>
    %119 = arith.mulf %118, %6 : vector<128x64xf32>
    %120 = tpu.concatenate %116, %116, %116, %116, %116, %116, %116, %116 in 0 : vector<16x64xf32>, vector<16x64xf32>, vector<16x64xf32>, vector<16x64xf32>, vector<16x64xf32>, vector<16x64xf32>, vector<16x64xf32>, vector<16x64xf32> -> vector<128x64xf32>
    %121 = arith.mulf %120, %6 : vector<128x64xf32>
    %cst_55 = arith.constant dense<0.000000e+00> : vector<16x128xf32>
    %122 = tpu.matmul %114, %119, %cst_55 {dimension_numbers = #tpu.dot_dimension_numbers<[1], [1], [0], [0], [0, 0, 1, 0], [], []>} : vector<16x64xf32>, vector<128x64xf32>, vector<16x128xf32> -> vector<16x128xf32>
    %cst_56 = arith.constant 0.353553385 : f32
    %123 = vector.broadcast %cst_56 : f32 to vector<16x128xf32>
    %124 = arith.mulf %122, %123 : vector<16x128xf32>
    %125 = arith.addf %124, %117 : vector<16x128xf32>
    %cst_57 = arith.constant dense<0xFF800000> : vector<16xf32>
    %126 = vector.multi_reduction <maximumf>, %125, %cst_57 [1] : vector<16x128xf32> to vector<16xf32>
    %127 = vector.shape_cast %126 : vector<16xf32> to vector<16x1xf32>
    %128 = vector.broadcast %127 : vector<16x1xf32> to vector<16x128xf32>
    %129 = arith.subf %125, %128 : vector<16x128xf32>
    %130 = math.exp %129 : vector<16x128xf32>
    %cst_58 = arith.constant dense<0.000000e+00> : vector<16x128xf32>
    %131 = tpu.matmul %130, %7, %cst_58 {dimension_numbers = #tpu.dot_dimension_numbers<[1], [0], [0], [1], [0, 0, 1, 1], [], []>} : vector<16x128xf32>, vector<128x128xf32>, vector<16x128xf32> -> vector<16x128xf32>
    %132 = arith.divf %130, %131 : vector<16x128xf32>
    %cst_59 = arith.constant dense<0.000000e+00> : vector<16x64xf32>
    %133 = tpu.matmul %132, %121, %cst_59 {dimension_numbers = #tpu.dot_dimension_numbers<[1], [0], [0], [1], [0, 0, 1, 1], [], []>} : vector<16x128xf32>, vector<128x64xf32>, vector<16x64xf32> -> vector<16x64xf32>
    %134 = tpu.concatenate %113, %133 in 0 : vector<16x64xf32>, vector<16x64xf32> -> vector<32x64xf32>
    %c0_60 = arith.constant 0 : index
    %c448_61 = arith.constant 448 : index
    %135 = vector.load %arg5[%c0_60, %c448_61] : memref<64x640xf32, #tpu.memory_space<vmem>>, vector<64x64xf32>
    %cst_62 = arith.constant dense<0.000000e+00> : vector<32x64xf32>
    %136 = tpu.matmul %134, %135, %cst_62 {dimension_numbers = #tpu.dot_dimension_numbers<[1], [0], [0], [1], [0, 0, 1, 1], [], []>} : vector<32x64xf32>, vector<64x64xf32>, vector<32x64xf32> -> vector<32x64xf32>
    %c0_63 = arith.constant 0 : index
    %c576 = arith.constant 576 : index
    %137 = vector.load %arg6[%c0_63, %c576] : memref<1x1024xf32, #tpu.memory_space<vmem>>, vector<1x64xf32>
    %138 = vector.broadcast %137 : vector<1x64xf32> to vector<32x64xf32>
    %139 = arith.addf %136, %138 : vector<32x64xf32>
    %140 = arith.addf %83, %139 : vector<32x64xf32>
    %c0_64 = arith.constant 0 : index
    %c640 = arith.constant 640 : index
    %141 = vector.load %arg6[%c0_64, %c640] : memref<1x1024xf32, #tpu.memory_space<vmem>>, vector<1x64xf32>
    %c0_65 = arith.constant 0 : index
    %c704 = arith.constant 704 : index
    %142 = vector.load %arg6[%c0_65, %c704] : memref<1x1024xf32, #tpu.memory_space<vmem>>, vector<1x64xf32>
    %cst_66 = arith.constant dense<0.000000e+00> : vector<32xf32>
    %143 = vector.multi_reduction <add>, %140, %cst_66 [1] : vector<32x64xf32> to vector<32xf32>
    %144 = vector.shape_cast %143 : vector<32xf32> to vector<32x1xf32>
    %cst_67 = arith.constant 6.400000e+01 : f32
    %145 = vector.broadcast %cst_67 : f32 to vector<32x1xf32>
    %146 = arith.divf %144, %145 : vector<32x1xf32>
    %147 = vector.broadcast %146 : vector<32x1xf32> to vector<32x64xf32>
    %148 = arith.subf %140, %147 : vector<32x64xf32>
    %149 = arith.mulf %148, %148 : vector<32x64xf32>
    %cst_68 = arith.constant dense<0.000000e+00> : vector<32xf32>
    %150 = vector.multi_reduction <add>, %149, %cst_68 [1] : vector<32x64xf32> to vector<32xf32>
    %151 = vector.shape_cast %150 : vector<32xf32> to vector<32x1xf32>
    %cst_69 = arith.constant 6.400000e+01 : f32
    %152 = vector.broadcast %cst_69 : f32 to vector<32x1xf32>
    %153 = arith.divf %151, %152 : vector<32x1xf32>
    %cst_70 = arith.constant 9.99999974E-6 : f32
    %154 = vector.broadcast %cst_70 : f32 to vector<32x1xf32>
    %155 = arith.addf %153, %154 : vector<32x1xf32>
    %156 = math.rsqrt %155 : vector<32x1xf32>
    %157 = vector.broadcast %156 : vector<32x1xf32> to vector<32x64xf32>
    %158 = arith.mulf %148, %157 : vector<32x64xf32>
    %159 = vector.broadcast %141 : vector<1x64xf32> to vector<32x64xf32>
    %160 = arith.mulf %158, %159 : vector<32x64xf32>
    %161 = vector.broadcast %142 : vector<1x64xf32> to vector<32x64xf32>
    %162 = arith.addf %160, %161 : vector<32x64xf32>
    %c0_71 = arith.constant 0 : index
    %c512 = arith.constant 512 : index
    %163 = vector.load %arg5[%c0_71, %c512] : memref<64x640xf32, #tpu.memory_space<vmem>>, vector<64x64xf32>
    %cst_72 = arith.constant dense<0.000000e+00> : vector<32x64xf32>
    %164 = tpu.matmul %162, %163, %cst_72 {dimension_numbers = #tpu.dot_dimension_numbers<[1], [0], [0], [1], [0, 0, 1, 1], [], []>} : vector<32x64xf32>, vector<64x64xf32>, vector<32x64xf32> -> vector<32x64xf32>
    %c0_73 = arith.constant 0 : index
    %c768 = arith.constant 768 : index
    %165 = vector.load %arg6[%c0_73, %c768] : memref<1x1024xf32, #tpu.memory_space<vmem>>, vector<1x64xf32>
    %166 = vector.broadcast %165 : vector<1x64xf32> to vector<32x64xf32>
    %167 = arith.addf %164, %166 : vector<32x64xf32>
    %cst_74 = arith.constant 0.000000e+00 : f32
    %168 = vector.broadcast %cst_74 : f32 to vector<32x64xf32>
    %169 = arith.maximumf %167, %168 : vector<32x64xf32>
    %c0_75 = arith.constant 0 : index
    %c576_76 = arith.constant 576 : index
    %170 = vector.load %arg5[%c0_75, %c576_76] : memref<64x640xf32, #tpu.memory_space<vmem>>, vector<64x64xf32>
    %cst_77 = arith.constant dense<0.000000e+00> : vector<32x64xf32>
    %171 = tpu.matmul %169, %170, %cst_77 {dimension_numbers = #tpu.dot_dimension_numbers<[1], [0], [0], [1], [0, 0, 1, 1], [], []>} : vector<32x64xf32>, vector<64x64xf32>, vector<32x64xf32> -> vector<32x64xf32>
    %c0_78 = arith.constant 0 : index
    %c832 = arith.constant 832 : index
    %172 = vector.load %arg6[%c0_78, %c832] : memref<1x1024xf32, #tpu.memory_space<vmem>>, vector<1x64xf32>
    %173 = vector.broadcast %172 : vector<1x64xf32> to vector<32x64xf32>
    %174 = arith.addf %171, %173 : vector<32x64xf32>
    %175 = arith.addf %162, %174 : vector<32x64xf32>
    %c0_79 = arith.constant 0 : index
    %c896 = arith.constant 896 : index
    %176 = vector.load %arg6[%c0_79, %c896] : memref<1x1024xf32, #tpu.memory_space<vmem>>, vector<1x64xf32>
    %c0_80 = arith.constant 0 : index
    %c960 = arith.constant 960 : index
    %177 = vector.load %arg6[%c0_80, %c960] : memref<1x1024xf32, #tpu.memory_space<vmem>>, vector<1x64xf32>
    %cst_81 = arith.constant dense<0.000000e+00> : vector<32xf32>
    %178 = vector.multi_reduction <add>, %175, %cst_81 [1] : vector<32x64xf32> to vector<32xf32>
    %179 = vector.shape_cast %178 : vector<32xf32> to vector<32x1xf32>
    %cst_82 = arith.constant 6.400000e+01 : f32
    %180 = vector.broadcast %cst_82 : f32 to vector<32x1xf32>
    %181 = arith.divf %179, %180 : vector<32x1xf32>
    %182 = vector.broadcast %181 : vector<32x1xf32> to vector<32x64xf32>
    %183 = arith.subf %175, %182 : vector<32x64xf32>
    %184 = arith.mulf %183, %183 : vector<32x64xf32>
    %cst_83 = arith.constant dense<0.000000e+00> : vector<32xf32>
    %185 = vector.multi_reduction <add>, %184, %cst_83 [1] : vector<32x64xf32> to vector<32xf32>
    %186 = vector.shape_cast %185 : vector<32xf32> to vector<32x1xf32>
    %cst_84 = arith.constant 6.400000e+01 : f32
    %187 = vector.broadcast %cst_84 : f32 to vector<32x1xf32>
    %188 = arith.divf %186, %187 : vector<32x1xf32>
    %cst_85 = arith.constant 9.99999974E-6 : f32
    %189 = vector.broadcast %cst_85 : f32 to vector<32x1xf32>
    %190 = arith.addf %188, %189 : vector<32x1xf32>
    %191 = math.rsqrt %190 : vector<32x1xf32>
    %192 = vector.broadcast %191 : vector<32x1xf32> to vector<32x64xf32>
    %193 = arith.mulf %183, %192 : vector<32x64xf32>
    %194 = vector.broadcast %176 : vector<1x64xf32> to vector<32x64xf32>
    %195 = arith.mulf %193, %194 : vector<32x64xf32>
    %196 = vector.broadcast %177 : vector<1x64xf32> to vector<32x64xf32>
    %197 = arith.addf %195, %196 : vector<32x64xf32>
    %198 = vector.extract_strided_slice %197 {offsets = [0, 0], sizes = [16, 64], strides = [1, 1]} : vector<32x64xf32> to vector<16x64xf32>
    %199 = vector.extract_strided_slice %197 {offsets = [16, 0], sizes = [16, 64], strides = [1, 1]} : vector<32x64xf32> to vector<16x64xf32>
    %200 = tpu.concatenate %198, %199 in 1 : vector<16x64xf32>, vector<16x64xf32> -> vector<16x128xf32>
    %c0_86 = arith.constant 0 : index
    %c0_87 = arith.constant 0 : index
    %201 = vector.load %arg11[%c0_86, %c0_87] : memref<16x128xf32, #tpu.memory_space<vmem>>, vector<16x128xf32>
    tpu.vector_store %arg11[%c0_86, %c0_87], %200 {strides = array<i32>} : memref<16x128xf32, #tpu.memory_space<vmem>>, vector<16x128xf32>,
    return
  }
  func.func @transform_0(%arg0: i32) -> (i32, i32) {
    %c0_i32 = arith.constant 0 : i32
    %c0_i32_0 = arith.constant 0 : i32
    %c0_i32_1 = arith.constant 0 : i32
    return %c0_i32, %c0_i32_0 : i32, i32
  }
  func.func @transform_1(%arg0: i32) -> (i32, i32) {
    %c0_i32 = arith.constant 0 : i32
    %c0_i32_0 = arith.constant 0 : i32
    %c0_i32_1 = arith.constant 0 : i32
    return %c0_i32, %c0_i32_0 : i32, i32
  }
  func.func @transform_2(%arg0: i32) -> (i32, i32) {
    %c0_i32 = arith.constant 0 : i32
    %c0_i32_0 = arith.constant 0 : i32
    %c0_i32_1 = arith.constant 0 : i32
    return %c0_i32, %c0_i32_0 : i32, i32
  }
  func.func @transform_3(%arg0: i32) -> (i32, i32) {
    %c0_i32 = arith.constant 0 : i32
    %c0_i32_0 = arith.constant 0 : i32
    %c0_i32_1 = arith.constant 0 : i32
    return %c0_i32, %c0_i32_0 : i32, i32
  }
  func.func @transform_4(%arg0: i32) -> (i32, i32) {
    %c0_i32 = arith.constant 0 : i32
    %c0_i32_0 = arith.constant 0 : i32
    %c0_i32_1 = arith.constant 0 : i32
    return %c0_i32, %c0_i32_0 : i32, i32
  }
  func.func @transform_5(%arg0: i32) -> (i32, i32) {
    %c0_i32 = arith.constant 0 : i32
    %c0_i32_0 = arith.constant 0 : i32
    %c0_i32_1 = arith.constant 0 : i32
    return %c0_i32, %c0_i32_0 : i32, i32
  }
  func.func @transform_6(%arg0: i32) -> (i32, i32) {
    %c0_i32 = arith.constant 0 : i32
    %c0_i32_0 = arith.constant 0 : i32
    %c0_i32_1 = arith.constant 0 : i32
    return %c0_i32, %c0_i32_0 : i32, i32
  }
  func.func @transform_7(%arg0: i32) -> (i32, i32) {
    %c0_i32 = arith.constant 0 : i32
    %c0_i32_0 = arith.constant 0 : i32
    %c0_i32_1 = arith.constant 0 : i32
    return %c0_i32, %c0_i32_0 : i32, i32
  }
  func.func @transform_8(%arg0: i32) -> (i32, i32) {
    %c0_i32 = arith.constant 0 : i32
    %c0_i32_0 = arith.constant 0 : i32
    %c0_i32_1 = arith.constant 0 : i32
    return %c0_i32, %c0_i32_0 : i32, i32
  }
  func.func @transform_9(%arg0: i32) -> (i32, i32) {
    %c0_i32 = arith.constant 0 : i32
    %c0_i32_0 = arith.constant 0 : i32
    %c0_i32_1 = arith.constant 0 : i32
    return %c0_i32, %c0_i32_0 : i32, i32
  }
  func.func @transform_10(%arg0: i32) -> (i32, i32) {
    %c0_i32 = arith.constant 0 : i32
    %c0_i32_0 = arith.constant 0 : i32
    %c0_i32_1 = arith.constant 0 : i32
    return %c0_i32, %c0_i32_0 : i32, i32
  }
  func.func @transform_11(%arg0: i32) -> (i32, i32) {
    %c0_i32 = arith.constant 0 : i32
    %c0_i32_0 = arith.constant 0 : i32
    %c0_i32_1 = arith.constant 0 : i32
    return %c0_i32, %c0_i32_0 : i32, i32
  }
}

</mosaic_0001>

<llo_original>
// kernel: tile.14
$region0: #{tile.14}
  %s0 = inlined_call_operand.vmem [shape: f32[2,1,16,8,16], index: 0, kind: input, shape index: {}]
  %s1 = inlined_call_operand.vmem [shape: f32[32,128], index: 1, kind: output, shape index: {}]
  %v2 = vld [vmem:[%s0] ss:$8 sm:$0xf]
  %v3 = vld [vmem:[%s0] ss:$8 sm:$0xf0]
  %vm4 = vcmask 1047556
  %v5 = vsel %vm4, %v3, %v2
  %vm6 = vcmask 130048
  %7 = vst.msk [vmem:[%s1] sm:$0xff] %vm6, %v5
  %s8 = scalar_lea.vmem %s0, 64
  %v9 = vld [vmem:[%s8] ss:$8 sm:$0xf]
  %s10 = scalar_lea.vmem %s0, 64
  %v11 = vld [vmem:[%s10] ss:$8 sm:$0xf0]
  %vm12 = vcmask 1047556
  %v13 = vsel %vm12, %v11, %v9
  %vm14 = vcmask 130048
  %s15 = scalar_lea.vmem %s1, 8
  %16 = vst.msk [vmem:[%s15] sm:$0xff] %vm14, %v13
  %s17 = scalar_lea.vmem %s0, 128
  %v18 = vld [vmem:[%s17] ss:$8 sm:$0xf]
  %s19 = scalar_lea.vmem %s0, 128
  %v20 = vld [vmem:[%s19] ss:$8 sm:$0xf0]
  %vm21 = vcmask 1047556
  %v22 = vsel %vm21, %v20, %v18
  %vm23 = vcmask 130048
  %s24 = scalar_lea.vmem %s1, 16
  %25 = vst.msk [vmem:[%s24] sm:$0xff] %vm23, %v22
  %s26 = scalar_lea.vmem %s0, 192
  %v27 = vld [vmem:[%s26] ss:$8 sm:$0xf]
  %s28 = scalar_lea.vmem %s0, 192
  %v29 = vld [vmem:[%s28] ss:$8 sm:$0xf0]
  %vm30 = vcmask 1047556
  %v31 = vsel %vm30, %v29, %v27
  %vm32 = vcmask 130048
  %s33 = scalar_lea.vmem %s1, 24
  %34 = vst.msk [vmem:[%s33] sm:$0xff] %vm32, %v31
  %s35 = scalar_lea.vmem %s0, 7
  %v36 = vld [vmem:[%s35] ss:$8 sm:$0xf]
  %s37 = scalar_lea.vmem %s0, 7
  %v38 = vld [vmem:[%s37] ss:$8 sm:$0xf0]
  %vm39 = vcmask 1047556
  %v40 = vsel %vm39, %v38, %v36
  %41 = vrot.lane.b32.xlu0 %v40, 112
  %v42 = vpop.permute.xlu0 %41
  %vm43 = vcmask 1048448
  %44 = vst.msk [vmem:[%s1] sm:$0xff] %vm43, %v42
  %s45 = scalar_lea.vmem %s0, 71
  %v46 = vld [vmem:[%s45] ss:$8 sm:$0xf]
  %s47 = scalar_lea.vmem %s0, 71
  %v48 = vld [vmem:[%s47] ss:$8 sm:$0xf0]
  %vm49 = vcmask 1047556
  %v50 = vsel %vm49, %v48, %v46
  %51 = vrot.lane.b32.xlu0 %v50, 112
  %v52 = vpop.permute.xlu0 %51
  %vm53 = vcmask 1048448
  %s54 = scalar_lea.vmem %s1, 8
  %55 = vst.msk [vmem:[%s54] sm:$0xff] %vm53, %v52
  %s56 = scalar_lea.vmem %s0, 135
  %v57 = vld [vmem:[%s56] ss:$8 sm:$0xf]
  %s58 = scalar_lea.vmem %s0, 135
  %v59 = vld [vmem:[%s58] ss:$8 sm:$0xf0]
  %vm60 = vcmask 1047556
  %v61 = vsel %vm60, %v59, %v57
  %62 = vrot.lane.b32.xlu0 %v61, 112
  %v63 = vpop.permute.xlu0 %62
  %vm64 = vcmask 1048448
  %s65 = scalar_lea.vmem %s1, 16
  %66 = vst.msk [vmem:[%s65] sm:$0xff] %vm64, %v63
  %s67 = scalar_lea.vmem %s0, 199
  %v68 = vld [vmem:[%s67] ss:$8 sm:$0xf]
  %s69 = scalar_lea.vmem %s0, 199
  %v70 = vld [vmem:[%s69] ss:$8 sm:$0xf0]
  %vm71 = vcmask 1047556
  %v72 = vsel %vm71, %v70, %v68
  %73 = vrot.lane.b32.xlu0 %v72, 112
  %v74 = vpop.permute.xlu0 %73
  %vm75 = vcmask 1048448
  %s76 = scalar_lea.vmem %s1, 24
  %77 = vst.msk [vmem:[%s76] sm:$0xff] %vm75, %v74
  %s78 = scalar_lea.vmem %s0, 6
  %v79 = vld [vmem:[%s78] ss:$8 sm:$0xf]
  %s80 = scalar_lea.vmem %s0, 6
  %v81 = vld [vmem:[%s80] ss:$8 sm:$0xf0]
  %vm82 = vcmask 1047556
  %v83 = vsel %vm82, %v81, %v79
  %84 = vrot.lane.b32.xlu0 %v83, 96
  %v85 = vpop.permute.xlu0 %84
  %vm86 = vcmask 917248
  %87 = vst.msk [vmem:[%s1] sm:$0xff] %vm86, %v85
  %s88 = scalar_lea.vmem %s0, 70
  %v89 = vld [vmem:[%s88] ss:$8 sm:$0xf]
  %s90 = scalar_lea.vmem %s0, 70
  %v91 = vld [vmem:[%s90] ss:$8 sm:$0xf0]
  %vm92 = vcmask 1047556
  %v93 = vsel %vm92, %v91, %v89
  %94 = vrot.lane.b32.xlu0 %v93, 96
  %v95 = vpop.permute.xlu0 %94
  %vm96 = vcmask 917248
  %s97 = scalar_lea.vmem %s1, 8
  %98 = vst.msk [vmem:[%s97] sm:$0xff] %vm96, %v95
  %s99 = scalar_lea.vmem %s0, 134
  %v100 = vld [vmem:[%s99] ss:$8 sm:$0xf]
  %s101 = scalar_lea.vmem %s0, 134
  %v102 = vld [vmem:[%s101] ss:$8 sm:$0xf0]
  %vm103 = vcmask 1047556
  %v104 = vsel %vm103, %v102, %v100
  %105 = vrot.lane.b32.xlu0 %v104, 96
  %v106 = vpop.permute.xlu0 %105
  %vm107 = vcmask 917248
  %s108 = scalar_lea.vmem %s1, 16
  %109 = vst.msk [vmem:[%s108] sm:$0xff] %vm107, %v106
  %s110 = scalar_lea.vmem %s0, 198
  %v111 = vld [vmem:[%s110] ss:$8 sm:$0xf]
  %s112 = scalar_lea.vmem %s0, 198
  %v113 = vld [vmem:[%s112] ss:$8 sm:$0xf0]
  %vm114 = vcmask 1047556
  %v115 = vsel %vm114, %v113, %v111
  %116 = vrot.lane.b32.xlu0 %v115, 96
  %v117 = vpop.permute.xlu0 %116
  %vm118 = vcmask 917248
  %s119 = scalar_lea.vmem %s1, 24
  %120 = vst.msk [vmem:[%s119] sm:$0xff] %vm118, %v117
  %s121 = scalar_lea.vmem %s0, 5
  %v122 = vld [vmem:[%s121] ss:$8 sm:$0xf]
  %s123 = scalar_lea.vmem %s0, 5
  %v124 = vld [vmem:[%s123] ss:$8 sm:$0xf0]
  %vm125 = vcmask 1047556
  %v126 = vsel %vm125, %v124, %v122
  %127 = vrot.lane.b32.xlu0 %v126, 80
  %v128 = vpop.permute.xlu0 %127
  %vm129 = vcmask 786048
  %130 = vst.msk [vmem:[%s1] sm:$0xff] %vm129, %v128
  %s131 = scalar_lea.vmem %s0, 69
  %v132 = vld [vmem:[%s131] ss:$8 sm:$0xf]
  %s133 = scalar_lea.vmem %s0, 69
  %v134 = vld [vmem:[%s133] ss:$8 sm:$0xf0]
  %vm135 = vcmask 1047556
  %v136 = vsel %vm135, %v134, %v132
  %137 = vrot.lane.b32.xlu0 %v136, 80
  %v138 = vpop.permute.xlu0 %137
  %vm139 = vcmask 786048
  %s140 = scalar_lea.vmem %s1, 8
  %141 = vst.msk [vmem:[%s140] sm:$0xff] %vm139, %v138
  %s142 = scalar_lea.vmem %s0, 133
  %v143 = vld [vmem:[%s142] ss:$8 sm:$0xf]
  %s144 = scalar_lea.vmem %s0, 133
  %v145 = vld [vmem:[%s144] ss:$8 sm:$0xf0]
  %vm146 = vcmask 1047556
  %v147 = vsel %vm146, %v145, %v143
  %148 = vrot.lane.b32.xlu0 %v147, 80
  %v149 = vpop.permute.xlu0 %148
  %vm150 = vcmask 786048
  %s151 = scalar_lea.vmem %s1, 16
  %152 = vst.msk [vmem:[%s151] sm:$0xff] %vm150, %v149
  %s153 = scalar_lea.vmem %s0, 197
  %v154 = vld [vmem:[%s153] ss:$8 sm:$0xf]
  %s155 = scalar_lea.vmem %s0, 197
  %v156 = vld [vmem:[%s155] ss:$8 sm:$0xf0]
  %vm157 = vcmask 1047556
  %v158 = vsel %vm157, %v156, %v154
  %159 = vrot.lane.b32.xlu0 %v158, 80
  %v160 = vpop.permute.xlu0 %159
  %vm161 = vcmask 786048
  %s162 = scalar_lea.vmem %s1, 24
  %163 = vst.msk [vmem:[%s162] sm:$0xff] %vm161, %v160
  %s164 = scalar_lea.vmem %s0, 4
  %v165 = vld [vmem:[%s164] ss:$8 sm:$0xf]
  %s166 = scalar_lea.vmem %s0, 4
  %v167 = vld [vmem:[%s166] ss:$8 sm:$0xf0]
  %vm168 = vcmask 1047556
  %v169 = vsel %vm168, %v167, %v165
  %170 = vrot.lane.b32.xlu0 %v169, 64
  %v171 = vpop.permute.xlu0 %170
  %vm172 = vcmask 654848
  %173 = vst.msk [vmem:[%s1] sm:$0xff] %vm172, %v171
  %s174 = scalar_lea.vmem %s0, 68
  %v175 = vld [vmem:[%s174] ss:$8 sm:$0xf]
  %s176 = scalar_lea.vmem %s0, 68
  %v177 = vld [vmem:[%s176] ss:$8 sm:$0xf0]
  %vm178 = vcmask 1047556
  %v179 = vsel %vm178, %v177, %v175
  %180 = vrot.lane.b32.xlu0 %v179, 64
  %v181 = vpop.permute.xlu0 %180
  %vm182 = vcmask 654848
  %s183 = scalar_lea.vmem %s1, 8
  %184 = vst.msk [vmem:[%s183] sm:$0xff] %vm182, %v181
  %s185 = scalar_lea.vmem %s0, 132
  %v186 = vld [vmem:[%s185] ss:$8 sm:$0xf]
  %s187 = scalar_lea.vmem %s0, 132
  %v188 = vld [vmem:[%s187] ss:$8 sm:$0xf0]
  %vm189 = vcmask 1047556
  %v190 = vsel %vm189, %v188, %v186
  %191 = vrot.lane.b32.xlu0 %v190, 64
  %v192 = vpop.permute.xlu0 %191
  %vm193 = vcmask 654848
  %s194 = scalar_lea.vmem %s1, 16
  %195 = vst.msk [vmem:[%s194] sm:$0xff] %vm193, %v192
  %s196 = scalar_lea.vmem %s0, 196
  %v197 = vld [vmem:[%s196] ss:$8 sm:$0xf]
  %s198 = scalar_lea.vmem %s0, 196
  %v199 = vld [vmem:[%s198] ss:$8 sm:$0xf0]
  %vm200 = vcmask 1047556
  %v201 = vsel %vm200, %v199, %v197
  %202 = vrot.lane.b32.xlu0 %v201, 64
  %v203 = vpop.permute.xlu0 %202
  %vm204 = vcmask 654848
  %s205 = scalar_lea.vmem %s1, 24
  %206 = vst.msk [vmem:[%s205] sm:$0xff] %vm204, %v203
  %s207 = scalar_lea.vmem %s0, 3
  %v208 = vld [vmem:[%s207] ss:$8 sm:$0xf]
  %s209 = scalar_lea.vmem %s0, 3
  %v210 = vld [vmem:[%s209] ss:$8 sm:$0xf0]
  %vm211 = vcmask 1047556
  %v212 = vsel %vm211, %v210, %v208
  %213 = vrot.lane.b32.xlu0 %v212, 48
  %v214 = vpop.permute.xlu0 %213
  %vm215 = vcmask 523648
  %216 = vst.msk [vmem:[%s1] sm:$0xff] %vm215, %v214
  %s217 = scalar_lea.vmem %s0, 67
  %v218 = vld [vmem:[%s217] ss:$8 sm:$0xf]
  %s219 = scalar_lea.vmem %s0, 67
  %v220 = vld [vmem:[%s219] ss:$8 sm:$0xf0]
  %vm221 = vcmask 1047556
  %v222 = vsel %vm221, %v220, %v218
  %223 = vrot.lane.b32.xlu0 %v222, 48
  %v224 = vpop.permute.xlu0 %223
  %vm225 = vcmask 523648
  %s226 = scalar_lea.vmem %s1, 8
  %227 = vst.msk [vmem:[%s226] sm:$0xff] %vm225, %v224
  %s228 = scalar_lea.vmem %s0, 131
  %v229 = vld [vmem:[%s228] ss:$8 sm:$0xf]
  %s230 = scalar_lea.vmem %s0, 131
  %v231 = vld [vmem:[%s230] ss:$8 sm:$0xf0]
  %vm232 = vcmask 1047556
  %v233 = vsel %vm232, %v231, %v229
  %234 = vrot.lane.b32.xlu0 %v233, 48
  %v235 = vpop.permute.xlu0 %234
  %vm236 = vcmask 523648
  %s237 = scalar_lea.vmem %s1, 16
  %238 = vst.msk [vmem:[%s237] sm:$0xff] %vm236, %v235
  %s239 = scalar_lea.vmem %s0, 195
  %v240 = vld [vmem:[%s239] ss:$8 sm:$0xf]
  %s241 = scalar_lea.vmem %s0, 195
  %v242 = vld [vmem:[%s241] ss:$8 sm:$0xf0]
  %vm243 = vcmask 1047556
  %v244 = vsel %vm243, %v242, %v240
  %245 = vrot.lane.b32.xlu0 %v244, 48
  %v246 = vpop.permute.xlu0 %245
  %vm247 = vcmask 523648
  %s248 = scalar_lea.vmem %s1, 24
  %249 = vst.msk [vmem:[%s248] sm:$0xff] %vm247, %v246
  %s250 = scalar_lea.vmem %s0, 2
  %v251 = vld [vmem:[%s250] ss:$8 sm:$0xf]
  %s252 = scalar_lea.vmem %s0, 2
  %v253 = vld [vmem:[%s252] ss:$8 sm:$0xf0]
  %vm254 = vcmask 1047556
  %v255 = vsel %vm254, %v253, %v251
  %256 = vrot.lane.b32.xlu0 %v255, 32
  %v257 = vpop.permute.xlu0 %256
  %vm258 = vcmask 392448
  %259 = vst.msk [vmem:[%s1] sm:$0xff] %vm258, %v257
  %s260 = scalar_lea.vmem %s0, 66
  %v261 = vld [vmem:[%s260] ss:$8 sm:$0xf]
  %s262 = scalar_lea.vmem %s0, 66
  %v263 = vld [vmem:[%s262] ss:$8 sm:$0xf0]
  %vm264 = vcmask 1047556
  %v265 = vsel %vm264, %v263, %v261
  %266 = vrot.lane.b32.xlu0 %v265, 32
  %v267 = vpop.permute.xlu0 %266
  %vm268 = vcmask 392448
  %s269 = scalar_lea.vmem %s1, 8
  %270 = vst.msk [vmem:[%s269] sm:$0xff] %vm268, %v267
  %s271 = scalar_lea.vmem %s0, 130
  %v272 = vld [vmem:[%s271] ss:$8 sm:$0xf]
  %s273 = scalar_lea.vmem %s0, 130
  %v274 = vld [vmem:[%s273] ss:$8 sm:$0xf0]
  %vm275 = vcmask 1047556
  %v276 = vsel %vm275, %v274, %v272
  %277 = vrot.lane.b32.xlu0 %v276, 32
  %v278 = vpop.permute.xlu0 %277
  %vm279 = vcmask 392448
  %s280 = scalar_lea.vmem %s1, 16
  %281 = vst.msk [vmem:[%s280] sm:$0xff] %vm279, %v278
  %s282 = scalar_lea.vmem %s0, 194
  %v283 = vld [vmem:[%s282] ss:$8 sm:$0xf]
  %s284 = scalar_lea.vmem %s0, 194
  %v285 = vld [vmem:[%s284] ss:$8 sm:$0xf0]
  %vm286 = vcmask 1047556
  %v287 = vsel %vm286, %v285, %v283
  %288 = vrot.lane.b32.xlu0 %v287, 32
  %v289 = vpop.permute.xlu0 %288
  %vm290 = vcmask 392448
  %s291 = scalar_lea.vmem %s1, 24
  %292 = vst.msk [vmem:[%s291] sm:$0xff] %vm290, %v289
  %s293 = scalar_lea.vmem %s0, 1
  %v294 = vld [vmem:[%s293] ss:$8 sm:$0xf]
  %s295 = scalar_lea.vmem %s0, 1
  %v296 = vld [vmem:[%s295] ss:$8 sm:$0xf0]
  %vm297 = vcmask 1047556
  %v298 = vsel %vm297, %v296, %v294
  %299 = vrot.lane.b32.xlu0 %v298, 16
  %v300 = vpop.permute.xlu0 %299
  %vm301 = vcmask 261248
  %302 = vst.msk [vmem:[%s1] sm:$0xff] %vm301, %v300
  %s303 = scalar_lea.vmem %s0, 65
  %v304 = vld [vmem:[%s303] ss:$8 sm:$0xf]
  %s305 = scalar_lea.vmem %s0, 65
  %v306 = vld [vmem:[%s305] ss:$8 sm:$0xf0]
  %vm307 = vcmask 1047556
  %v308 = vsel %vm307, %v306, %v304
  %309 = vrot.lane.b32.xlu0 %v308, 16
  %v310 = vpop.permute.xlu0 %309
  %vm311 = vcmask 261248
  %s312 = scalar_lea.vmem %s1, 8
  %313 = vst.msk [vmem:[%s312] sm:$0xff] %vm311, %v310
  %s314 = scalar_lea.vmem %s0, 129
  %v315 = vld [vmem:[%s314] ss:$8 sm:$0xf]
  %s316 = scalar_lea.vmem %s0, 129
  %v317 = vld [vmem:[%s316] ss:$8 sm:$0xf0]
  %vm318 = vcmask 1047556
  %v319 = vsel %vm318, %v317, %v315
  %320 = vrot.lane.b32.xlu0 %v319, 16
  %v321 = vpop.permute.xlu0 %320
  %vm322 = vcmask 261248
  %s323 = scalar_lea.vmem %s1, 16
  %324 = vst.msk [vmem:[%s323] sm:$0xff] %vm322, %v321
  %s325 = scalar_lea.vmem %s0, 193
  %v326 = vld [vmem:[%s325] ss:$8 sm:$0xf]
  %s327 = scalar_lea.vmem %s0, 193
  %v328 = vld [vmem:[%s327] ss:$8 sm:$0xf0]
  %vm329 = vcmask 1047556
  %v330 = vsel %vm329, %v328, %v326
  %331 = vrot.lane.b32.xlu0 %v330, 16
  %v332 = vpop.permute.xlu0 %331
  %vm333 = vcmask 261248
  %s334 = scalar_lea.vmem %s1, 24
  %335 = vst.msk [vmem:[%s334] sm:$0xff] %vm333, %v332

// kernel: eq.29
$region0: #{eq.29}
  %s0 = inlined_call_operand.vmem [shape: s32[8,16], index: 0, kind: input, shape index: {}]
  %s1 = inlined_call_operand.vmem [shape: s32[128], index: 1, kind: output, shape index: {}]
  $region1: #{eq.29} parent=0
    #allocation0 [shape = 'u8[4096]{0}', space=vmem, size = 0x1000, scoped, tag = 'scoped mem for output reshape']
    %v2 = vld [vmem:[%s0] sm:$0x1]
    %vm3 = vcmask 130048
    %4 = vst.msk [vmem:[#allocation0] sm:$0x1] %vm3, %v2
    %s5 = scalar_lea.vmem %s0, 7
    %v6 = vld [vmem:[%s5] sm:$0x1]
    %7 = vrot.lane.b32.xlu0 %v6, 112
    %v8 = vpop.permute.xlu0 %7
    %vm9 = vcmask 1048448
    %10 = vst.msk [vmem:[#allocation0] sm:$0x1] %vm9, %v8
    %s11 = scalar_lea.vmem %s0, 6
    %v12 = vld [vmem:[%s11] sm:$0x1]
    %13 = vrot.lane.b32.xlu0 %v12, 96
    %v14 = vpop.permute.xlu0 %13
    %vm15 = vcmask 917248
    %16 = vst.msk [vmem:[#allocation0] sm:$0x1] %vm15, %v14
    %s17 = scalar_lea.vmem %s0, 5
    %v18 = vld [vmem:[%s17] sm:$0x1]
    %19 = vrot.lane.b32.xlu0 %v18, 80
    %v20 = vpop.permute.xlu0 %19
    %vm21 = vcmask 786048
    %22 = vst.msk [vmem:[#allocation0] sm:$0x1] %vm21, %v20
    %s23 = scalar_lea.vmem %s0, 4
    %v24 = vld [vmem:[%s23] sm:$0x1]
    %25 = vrot.lane.b32.xlu0 %v24, 64
    %v26 = vpop.permute.xlu0 %25
    %vm27 = vcmask 654848
    %28 = vst.msk [vmem:[#allocation0] sm:$0x1] %vm27, %v26
    %s29 = scalar_lea.vmem %s0, 3
    %v30 = vld [vmem:[%s29] sm:$0x1]
    %31 = vrot.lane.b32.xlu0 %v30, 48
    %v32 = vpop.permute.xlu0 %31
    %vm33 = vcmask 523648
    %34 = vst.msk [vmem:[#allocation0] sm:$0x1] %vm33, %v32
    %s35 = scalar_lea.vmem %s0, 2
    %v36 = vld [vmem:[%s35] sm:$0x1]
    %37 = vrot.lane.b32.xlu0 %v36, 32
    %v38 = vpop.permute.xlu0 %37
    %vm39 = vcmask 392448
    %40 = vst.msk [vmem:[#allocation0] sm:$0x1] %vm39, %v38
    %s41 = scalar_lea.vmem %s0, 1
    %v42 = vld [vmem:[%s41] sm:$0x1]
    %43 = vrot.lane.b32.xlu0 %v42, 16
    %v44 = vpop.permute.xlu0 %43
    %vm45 = vcmask 261248
    %46 = vst.msk [vmem:[#allocation0] sm:$0x1] %vm45, %v44
    %s48 = sshll.u32 1, 1
    %s49 = ssub.s32 %s48, 1
    %v51 = vld [vmem:[#allocation0] sm:%s49]
    %s52 = sshll.u32 1, 1
    %s53 = ssub.s32 %s52, 1
    %54 = vst [vmem:[%s1] sm:%s53] %v51

// kernel: concat_attention_layer.1
$region0: #{concat_attention_layer.1}
  #allocation0 [shape = 'u32[]', space=smem, size = 0x4, offset = 0x4, fixed_abs, tag = 'smem constant byte address 0x4 - core index']
  #allocation1 [shape = 'u32[144,128]{1,0:T(1,128)}', space=vmem, size = 0x12000, scoped, tag = 'internal scratch']
  %s0 = inlined_call_operand.vmem [shape: f32[32,64], index: 0, kind: input, shape index: {}]
  %s1 = inlined_call_operand.vmem [shape: f32[32,64], index: 1, kind: input, shape index: {}]
  %s2 = inlined_call_operand.vmem [shape: f32[32,128], index: 2, kind: input, shape index: {}]
  %s3 = inlined_call_operand.vmem [shape: f32[32,128], index: 3, kind: input, shape index: {}]
  %s4 = inlined_call_operand.vmem [shape: f32[64,640], index: 4, kind: input, shape index: {}]
  %s5 = inlined_call_operand.vmem [shape: f32[1,1024], index: 5, kind: input, shape index: {}]
  %s6 = inlined_call_operand.vmem [shape: f32[128,64], index: 6, kind: input, shape index: {}, may-alias: {6,8}]
  %s7 = inlined_call_operand.vmem [shape: f32[128,128], index: 7, kind: input, shape index: {}, may-alias: {7,9}]
  %s8 = inlined_call_operand.vmem [shape: f32[128,64], index: 8, kind: input, shape index: {}, may-alias: {6,8}]
  %s9 = inlined_call_operand.vmem [shape: f32[128,128], index: 9, kind: input, shape index: {}, may-alias: {7,9}]
  %s10 = inlined_call_operand.vmem [shape: f32[16,128], index: 10, kind: output, shape index: {0}]
  %s11 = inlined_call_operand.vmem [shape: f32[32,128], index: 11, kind: output, shape index: {1}]
  %12 = xla_tuple %s10, %s11
  %s13 = sld [smem:[#allocation0]]
  $region58: #{concat_attention_layer.1} parent=0
    _
  %s15 = ssub.s32 1, %s13
  %s16 = scalar_select 0, %s15, %s13
  // Predicated region
  $region2: #{concat_attention_layer.1} parent=0 // pred_check
    _
  $region3: #{concat_attention_layer.1} parent=0 // pred_check_branch
    %18 = sbr.rel (0) target = $region5
  $region4: #{concat_attention_layer.1} parent=0 // pred_region
    _
  $region5: #{concat_attention_layer.1} parent=0 // pred_fallthru
    _
  // Predicated region
  $region6: #{concat_attention_layer.1} parent=0 // pred_check
    _
  $region7: #{concat_attention_layer.1} parent=0 // pred_check_branch
    %20 = sbr.rel (0) target = $region9
  $region8: #{concat_attention_layer.1} parent=0 // pred_region
    _
  $region9: #{concat_attention_layer.1} parent=0 // pred_fallthru
    _
  // Predicated region
  $region10: #{concat_attention_layer.1} parent=0 // pred_check
    _
  $region11: #{concat_attention_layer.1} parent=0 // pred_check_branch
    %22 = sbr.rel (0) target = $region13
  $region12: #{concat_attention_layer.1} parent=0 // pred_region
    _
  $region13: #{concat_attention_layer.1} parent=0 // pred_fallthru
    _
  // Predicated region
  $region14: #{concat_attention_layer.1} parent=0 // pred_check
    _
  $region15: #{concat_attention_layer.1} parent=0 // pred_check_branch
    %24 = sbr.rel (0) target = $region17
  $region16: #{concat_attention_layer.1} parent=0 // pred_region
    _
  $region17: #{concat_attention_layer.1} parent=0 // pred_fallthru
    _
  // Predicated region
  $region18: #{concat_attention_layer.1} parent=0 // pred_check
    _
  $region19: #{concat_attention_layer.1} parent=0 // pred_check_branch
    %26 = sbr.rel (0) target = $region21
  $region20: #{concat_attention_layer.1} parent=0 // pred_region
    _
  $region21: #{concat_attention_layer.1} parent=0 // pred_fallthru
    _
  // Predicated region
  $region22: #{concat_attention_layer.1} parent=0 // pred_check
    _
  $region23: #{concat_attention_layer.1} parent=0 // pred_check_branch
    %28 = sbr.rel (0) target = $region25
  $region24: #{concat_attention_layer.1} parent=0 // pred_region
    _
  $region25: #{concat_attention_layer.1} parent=0 // pred_fallthru
    _
  // Predicated region
  $region26: #{concat_attention_layer.1} parent=0 // pred_check
    _
  $region27: #{concat_attention_layer.1} parent=0 // pred_check_branch
    %30 = sbr.rel (0) target = $region29
  $region28: #{concat_attention_layer.1} parent=0 // pred_region
    _
  $region29: #{concat_attention_layer.1} parent=0 // pred_fallthru
    _
  // Predicated region
  $region30: #{concat_attention_layer.1} parent=0 // pred_check
    _
  $region31: #{concat_attention_layer.1} parent=0 // pred_check_branch
    %32 = sbr.rel (0) target = $region33
  $region32: #{concat_attention_layer.1} parent=0 // pred_region
    _
  $region33: #{concat_attention_layer.1} parent=0 // pred_fallthru
    _
  // Predicated region
  $region34: #{concat_attention_layer.1} parent=0 // pred_check
    _
  $region35: #{concat_attention_layer.1} parent=0 // pred_check_branch
    %34 = sbr.rel (0) target = $region37
  $region36: #{concat_attention_layer.1} parent=0 // pred_region
    _
  $region37: #{concat_attention_layer.1} parent=0 // pred_fallthru
    _
  // Predicated region
  $region38: #{concat_attention_layer.1} parent=0 // pred_check
    _
  $region39: #{concat_attention_layer.1} parent=0 // pred_check_branch
    %36 = sbr.rel (0) target = $region41
  $region40: #{concat_attention_layer.1} parent=0 // pred_region
    _
  $region41: #{concat_attention_layer.1} parent=0 // pred_fallthru
    _
  %v37 = vld [vmem:[%s0] sm:$0xff]
  %v38 = vld [vmem:[%s0 + $0x8] sm:$0xff]
  %v39 = vld [vmem:[%s0 + $0x10] sm:$0xff]
  %v40 = vld [vmem:[%s0 + $0x18] sm:$0xff]
  %v41 = vld [vmem:[%s1] sm:$0xff]
  %v42 = vld [vmem:[%s1 + $0x8] sm:$0xff]
  %v43 = vld [vmem:[%s1 + $0x10] sm:$0xff]
  %v44 = vld [vmem:[%s1 + $0x18] sm:$0xff]
  %v45 = vld [vmem:[%s2] sm:$0xff]
  %v46 = vld [vmem:[%s2 + $0x8] sm:$0xff]
  %v47 = vld [vmem:[%s2 + $0x10] sm:$0xff]
  %v48 = vld [vmem:[%s2 + $0x18] sm:$0xff]
  %v49 = vld [vmem:[%s3] sm:$0xff]
  %v50 = vld [vmem:[%s3 + $0x8] sm:$0xff]
  %v51 = vld [vmem:[%s3 + $0x10] sm:$0xff]
  %v52 = vld [vmem:[%s3 + $0x18] sm:$0xff]
  %v53 = vld [vmem:[%s6] sm:$0xff]
  %v54 = vld [vmem:[%s6 + $0x8] sm:$0xff]
  %v55 = vld [vmem:[%s6 + $0x10] sm:$0xff]
  %v56 = vld [vmem:[%s6 + $0x18] sm:$0xff]
  %v57 = vld [vmem:[%s6 + $0x20] sm:$0xff]
  %v58 = vld [vmem:[%s6 + $0x28] sm:$0xff]
  %v59 = vld [vmem:[%s6 + $0x30] sm:$0xff]
  %v60 = vld [vmem:[%s6 + $0x38] sm:$0xff]
  %v61 = vld [vmem:[%s6 + $0x40] sm:$0xff]
  %v62 = vld [vmem:[%s6 + $0x48] sm:$0xff]
  %v63 = vld [vmem:[%s6 + $0x50] sm:$0xff]
  %v64 = vld [vmem:[%s6 + $0x58] sm:$0xff]
  %v65 = vld [vmem:[%s6 + $0x60] sm:$0xff]
  %v66 = vld [vmem:[%s6 + $0x68] sm:$0xff]
  %v67 = vld [vmem:[%s6 + $0x70] sm:$0xff]
  %v68 = vld [vmem:[%s6 + $0x78] sm:$0xff]
  %v69 = vld [vmem:[%s7] sm:$0xff]
  %v70 = vld [vmem:[%s7 + $0x8] sm:$0xff]
  %v71 = vld [vmem:[%s7 + $0x10] sm:$0xff]
  %v72 = vld [vmem:[%s7 + $0x18] sm:$0xff]
  %v73 = vld [vmem:[%s7 + $0x20] sm:$0xff]
  %v74 = vld [vmem:[%s7 + $0x28] sm:$0xff]
  %v75 = vld [vmem:[%s7 + $0x30] sm:$0xff]
  %v76 = vld [vmem:[%s7 + $0x38] sm:$0xff]
  %v77 = vld [vmem:[%s7 + $0x40] sm:$0xff]
  %v78 = vld [vmem:[%s7 + $0x48] sm:$0xff]
  %v79 = vld [vmem:[%s7 + $0x50] sm:$0xff]
  %v80 = vld [vmem:[%s7 + $0x58] sm:$0xff]
  %v81 = vld [vmem:[%s7 + $0x60] sm:$0xff]
  %v82 = vld [vmem:[%s7 + $0x68] sm:$0xff]
  %v83 = vld [vmem:[%s7 + $0x70] sm:$0xff]
  %v84 = vld [vmem:[%s7 + $0x78] sm:$0xff]
  %v85 = vld [vmem:[%s8] sm:$0xff]
  %v86 = vld [vmem:[%s8 + $0x8] sm:$0xff]
  %v87 = vld [vmem:[%s8 + $0x10] sm:$0xff]
  %v88 = vld [vmem:[%s8 + $0x18] sm:$0xff]
  %v89 = vld [vmem:[%s8 + $0x20] sm:$0xff]
  %v90 = vld [vmem:[%s8 + $0x28] sm:$0xff]
  %v91 = vld [vmem:[%s8 + $0x30] sm:$0xff]
  %v92 = vld [vmem:[%s8 + $0x38] sm:$0xff]
  %v93 = vld [vmem:[%s8 + $0x40] sm:$0xff]
  %v94 = vld [vmem:[%s8 + $0x48] sm:$0xff]
  %v95 = vld [vmem:[%s8 + $0x50] sm:$0xff]
  %v96 = vld [vmem:[%s8 + $0x58] sm:$0xff]
  %v97 = vld [vmem:[%s8 + $0x60] sm:$0xff]
  %v98 = vld [vmem:[%s8 + $0x68] sm:$0xff]
  %v99 = vld [vmem:[%s8 + $0x70] sm:$0xff]
  %v100 = vld [vmem:[%s8 + $0x78] sm:$0xff]
  %v101 = vld [vmem:[%s9] sm:$0xff]
  %v102 = vld [vmem:[%s9 + $0x8] sm:$0xff]
  %v103 = vld [vmem:[%s9 + $0x10] sm:$0xff]
  %v104 = vld [vmem:[%s9 + $0x18] sm:$0xff]
  %v105 = vld [vmem:[%s9 + $0x20] sm:$0xff]
  %v106 = vld [vmem:[%s9 + $0x28] sm:$0xff]
  %v107 = vld [vmem:[%s9 + $0x30] sm:$0xff]
  %v108 = vld [vmem:[%s9 + $0x38] sm:$0xff]
  %v109 = vld [vmem:[%s9 + $0x40] sm:$0xff]
  %v110 = vld [vmem:[%s9 + $0x48] sm:$0xff]
  %v111 = vld [vmem:[%s9 + $0x50] sm:$0xff]
  %v112 = vld [vmem:[%s9 + $0x58] sm:$0xff]
  %v113 = vld [vmem:[%s9 + $0x60] sm:$0xff]
  %v114 = vld [vmem:[%s9 + $0x68] sm:$0xff]
  %v115 = vld [vmem:[%s9 + $0x70] sm:$0xff]
  %v116 = vld [vmem:[%s9 + $0x78] sm:$0xff]
  %v117 = vld [vmem:[%s4] sm:$0xff]
  %v118 = vld [vmem:[%s4 + $0x8] sm:$0xff]
  %v119 = vld [vmem:[%s4 + $0x28] sm:$0xff]
  %v120 = vld [vmem:[%s4 + $0x30] sm:$0xff]
  %v121 = vld [vmem:[%s4 + $0x50] sm:$0xff]
  %v122 = vld [vmem:[%s4 + $0x58] sm:$0xff]
  %v123 = vld [vmem:[%s4 + $0x78] sm:$0xff]
  %v124 = vld [vmem:[%s4 + $0x80] sm:$0xff]
  %v125 = vld [vmem:[%s4 + $0xa0] sm:$0xff]
  %v126 = vld [vmem:[%s4 + $0xa8] sm:$0xff]
  %v127 = vld [vmem:[%s4 + $0xc8] sm:$0xff]
  %v128 = vld [vmem:[%s4 + $0xd0] sm:$0xff]
  %v129 = vld [vmem:[%s4 + $0xf0] sm:$0xff]
  %v130 = vld [vmem:[%s4 + $0xf8] sm:$0xff]
  %v131 = vld [vmem:[%s4 + $0x118] sm:$0xff]
  %v132 = vld [vmem:[%s4 + $0x120] sm:$0xff]
  %v133 = vld [vmem:[%s5] sm:$0x3]
  %v135 = vlaneseq
  %v136 = vshrl.u32 %v135, 7
  %v137 = vsub.s32 0, %v136
  %v138 = vrot.slane %v133, %v137
  %v139 = vlaneseq
  %v140 = vshrl.u32 %v139, 7
  %v141 = vsub.s32 1, %v140
  %v142 = vrot.slane %v133, %v141
  %vm145 = vcmask 523264
  %v147 = vsel %vm145, %v37, 0
  %v150 = vsel %vm145, %v38, 0
  %v153 = vsel %vm145, %v39, 0
  %v156 = vsel %vm145, %v40, 0
  %158 = vmatprep.subr.mxu0 0.0
  %159 = vmatpush1.msra.mxu0 0.0
  %160 = vmatprep.subr.mxu0 0.0
  %161 = vmatpush1.msra.mxu0 0.0
  %162 = vmatprep.subr.mxu0 0.0
  %163 = vmatpush1.msra.mxu0 0.0
  %164 = vmatprep.subr.mxu0 0.0
  %165 = vmatpush1.msra.mxu0 0.0
  %166 = vmatprep.subr.mxu0 0.0
  %167 = vmatpush1.msra.mxu0 0.0
  %168 = vmatprep.subr.mxu0 0.0
  %169 = vmatpush1.msra.mxu0 0.0
  %170 = vmatprep.subr.mxu0 0.0
  %171 = vmatpush1.msra.mxu0 0.0
  %172 = vmatprep.subr.mxu0 0.0
  %173 = vmatpush1.msra.mxu0 0.0
  %174 = vmatprep.subr.mxu0 %v132
  %175 = vmatpush1.msra.mxu0 %v131
  %176 = vmatprep.subr.mxu0 %v130
  %177 = vmatpush1.msra.mxu0 %v129
  %178 = vmatprep.subr.mxu0 %v128
  %179 = vmatpush1.msra.mxu0 %v127
  %180 = vmatprep.subr.mxu0 %v126
  %181 = vmatpush1.msra.mxu0 %v125
  %182 = vmatprep.subr.mxu0 %v124
  %183 = vmatpush1.msra.mxu0 %v123
  %184 = vmatprep.subr.mxu0 %v122
  %185 = vmatpush1.msra.mxu0 %v121
  %186 = vmatprep.subr.mxu0 %v120
  %187 = vmatpush1.msra.mxu0 %v119
  %188 = vmatprep.subr.mxu0 %v118
  %189 = vmatpush1.msra.mxu0 %v117
  %190 = vmatprep.subr.mxu0 0.0
  %191 = vmatpush2.msra.mxu0 0.0
  %192 = vmatprep.subr.mxu0 0.0
  %193 = vmatpush2.msra.mxu0 0.0
  %194 = vmatprep.subr.mxu0 0.0
  %195 = vmatpush2.msra.mxu0 0.0
  %196 = vmatprep.subr.mxu0 0.0
  %197 = vmatpush2.msra.mxu0 0.0
  %198 = vmatprep.subr.mxu0 0.0
  %199 = vmatpush2.msra.mxu0 0.0
  %200 = vmatprep.subr.mxu0 0.0
  %201 = vmatpush2.msra.mxu0 0.0
  %202 = vmatprep.subr.mxu0 0.0
  %203 = vmatpush2.msra.mxu0 0.0
  %204 = vmatprep.subr.mxu0 0.0
  %205 = vmatpush2.msra.mxu0 0.0
  %206 = vmatprep.subr.mxu0 0.0
  %207 = vmatpush2.msra.mxu0 0.0
  %208 = vmatprep.subr.mxu0 0.0
  %209 = vmatpush2.msra.mxu0 0.0
  %210 = vmatprep.subr.mxu0 0.0
  %211 = vmatpush2.msra.mxu0 0.0
  %212 = vmatprep.subr.mxu0 0.0
  %213 = vmatpush2.msra.mxu0 0.0
  %214 = vmatprep.subr.mxu0 0.0
  %215 = vmatpush2.msra.mxu0 0.0
  %216 = vmatprep.subr.mxu0 0.0
  %217 = vmatpush2.msra.mxu0 0.0
  %218 = vmatprep.subr.mxu0 0.0
  %219 = vmatpush2.msra.mxu0 0.0
  %220 = vmatprep.subr.mxu0 0.0
  %221 = vmatpush2.msra.mxu0 0.0
  %222 = vmatprep.mubr.f32.mxu0 0.0
  %223 = vmatmul.mubr.f32.gmra.mxu0 %v147
  %v224 = vpop.f32.mrf.mxu0
  %v225 = vadd.f32 %v138, %v224
  %v226 = vpop.f32.mrf.mxu0
  %v227 = vadd.f32 %v142, %v226
  %228 = vmatprep.mubr.f32.mxu0 0.0
  %229 = vmatmul.mubr.f32.gmra.mxu0 %v150
  %v230 = vpop.f32.mrf.mxu0
  %v231 = vadd.f32 %v138, %v230
  %v232 = vpop.f32.mrf.mxu0
  %v233 = vadd.f32 %v142, %v232
  %234 = vmatprep.mubr.f32.mxu0 0.0
  %235 = vmatmul.mubr.f32.gmra.mxu0 %v153
  %v236 = vpop.f32.mrf.mxu0
  %v237 = vadd.f32 %v138, %v236
  %v238 = vpop.f32.mrf.mxu0
  %v239 = vadd.f32 %v142, %v238
  %240 = vmatprep.mubr.f32.mxu0 0.0
  %241 = vmatmul.mubr.f32.gmra.mxu0 %v156
  %v242 = vpop.f32.mrf.mxu0
  %v243 = vadd.f32 %v138, %v242
  %v244 = vpop.f32.mrf.mxu0
  %v245 = vadd.f32 %v142, %v244
  %246 = vdwg.mxu0
  %263 = vrot.lane.b32.xlu0 %v53, 64
  %v264 = vpop.permute.xlu0 %263
  %265 = vrot.lane.b32.xlu0 %v54, 64
  %v266 = vpop.permute.xlu0 %265
  %267 = vrot.lane.b32.xlu0 %v55, 64
  %v268 = vpop.permute.xlu0 %267
  %269 = vrot.lane.b32.xlu0 %v56, 64
  %v270 = vpop.permute.xlu0 %269
  %271 = vrot.lane.b32.xlu0 %v57, 64
  %v272 = vpop.permute.xlu0 %271
  %273 = vrot.lane.b32.xlu0 %v58, 64
  %v274 = vpop.permute.xlu0 %273
  %275 = vrot.lane.b32.xlu0 %v59, 64
  %v276 = vpop.permute.xlu0 %275
  %277 = vrot.lane.b32.xlu0 %v60, 64
  %v278 = vpop.permute.xlu0 %277
  %279 = vrot.lane.b32.xlu0 %v61, 64
  %v280 = vpop.permute.xlu0 %279
  %281 = vrot.lane.b32.xlu0 %v62, 64
  %v282 = vpop.permute.xlu0 %281
  %283 = vrot.lane.b32.xlu0 %v63, 64
  %v284 = vpop.permute.xlu0 %283
  %285 = vrot.lane.b32.xlu0 %v64, 64
  %v286 = vpop.permute.xlu0 %285
  %287 = vrot.lane.b32.xlu0 %v65, 64
  %v288 = vpop.permute.xlu0 %287
  %289 = vrot.lane.b32.xlu0 %v66, 64
  %v290 = vpop.permute.xlu0 %289
  %291 = vrot.lane.b32.xlu0 %v67, 64
  %v292 = vpop.permute.xlu0 %291
  %293 = vrot.lane.b32.xlu0 %v68, 64
  %v294 = vpop.permute.xlu0 %293
  %v311 = vmul.f32 %v225, %v264
  %v312 = vmul.f32 %v231, %v266
  %v313 = vmul.f32 %v225, %v268
  %v314 = vmul.f32 %v231, %v270
  %v315 = vmul.f32 %v225, %v272
  %v316 = vmul.f32 %v231, %v274
  %v317 = vmul.f32 %v225, %v276
  %v318 = vmul.f32 %v231, %v278
  %v319 = vmul.f32 %v225, %v280
  %v320 = vmul.f32 %v231, %v282
  %v321 = vmul.f32 %v225, %v284
  %v322 = vmul.f32 %v231, %v286
  %v323 = vmul.f32 %v225, %v288
  %v324 = vmul.f32 %v231, %v290
  %v325 = vmul.f32 %v225, %v292
  %v326 = vmul.f32 %v231, %v294
  %v327 = vmul.f32 %v227, %v53
  %v328 = vmul.f32 %v233, %v54
  %v329 = vmul.f32 %v227, %v55
  %v330 = vmul.f32 %v233, %v56
  %v331 = vmul.f32 %v227, %v57
  %v332 = vmul.f32 %v233, %v58
  %v333 = vmul.f32 %v227, %v59
  %v334 = vmul.f32 %v233, %v60
  %v335 = vmul.f32 %v227, %v61
  %v336 = vmul.f32 %v233, %v62
  %v337 = vmul.f32 %v227, %v63
  %v338 = vmul.f32 %v233, %v64
  %v339 = vmul.f32 %v227, %v65
  %v340 = vmul.f32 %v233, %v66
  %v341 = vmul.f32 %v227, %v67
  %v342 = vmul.f32 %v233, %v68
  %359 = vrot.lane.b32.xlu0 %v311, 64
  %v360 = vpop.permute.xlu0 %359
  %361 = vrot.lane.b32.xlu0 %v312, 64
  %v362 = vpop.permute.xlu0 %361
  %363 = vrot.lane.b32.xlu0 %v313, 64
  %v364 = vpop.permute.xlu0 %363
  %365 = vrot.lane.b32.xlu0 %v314, 64
  %v366 = vpop.permute.xlu0 %365
  %367 = vrot.lane.b32.xlu0 %v315, 64
  %v368 = vpop.permute.xlu0 %367
  %369 = vrot.lane.b32.xlu0 %v316, 64
  %v370 = vpop.permute.xlu0 %369
  %371 = vrot.lane.b32.xlu0 %v317, 64
  %v372 = vpop.permute.xlu0 %371
  %373 = vrot.lane.b32.xlu0 %v318, 64
  %v374 = vpop.permute.xlu0 %373
  %375 = vrot.lane.b32.xlu0 %v319, 64
  %v376 = vpop.permute.xlu0 %375
  %377 = vrot.lane.b32.xlu0 %v320, 64
  %v378 = vpop.permute.xlu0 %377
  %379 = vrot.lane.b32.xlu0 %v321, 64
  %v380 = vpop.permute.xlu0 %379
  %381 = vrot.lane.b32.xlu0 %v322, 64
  %v382 = vpop.permute.xlu0 %381
  %383 = vrot.lane.b32.xlu0 %v323, 64
  %v384 = vpop.permute.xlu0 %383
  %385 = vrot.lane.b32.xlu0 %v324, 64
  %v386 = vpop.permute.xlu0 %385
  %387 = vrot.lane.b32.xlu0 %v325, 64
  %v388 = vpop.permute.xlu0 %387
  %389 = vrot.lane.b32.xlu0 %v326, 64
  %v390 = vpop.permute.xlu0 %389
  %v392 = vsel %vm145, %v225, 0
  %v395 = vsel %vm145, %v231, 0
  %v397 = vsel %vm145, %v360, 0
  %v399 = vsel %vm145, %v362, 0
  %v401 = vsel %vm145, %v364, 0
  %v403 = vsel %vm145, %v366, 0
  %v405 = vsel %vm145, %v368, 0
  %v407 = vsel %vm145, %v370, 0
  %v409 = vsel %vm145, %v372, 0
  %v411 = vsel %vm145, %v374, 0
  %v413 = vsel %vm145, %v376, 0
  %v415 = vsel %vm145, %v378, 0
  %v417 = vsel %vm145, %v380, 0
  %v419 = vsel %vm145, %v382, 0
  %v421 = vsel %vm145, %v384, 0
  %v423 = vsel %vm145, %v386, 0
  %v425 = vsel %vm145, %v388, 0
  %v427 = vsel %vm145, %v390, 0
  %429 = vmatprep.subr.mxu0 0.0
  %430 = vmatpush1.xpose.msra.mxu0 %v427
  %431 = vmatprep.subr.mxu0 0.0
  %432 = vmatpush1.xpose.msra.mxu0 %v425
  %433 = vmatprep.subr.mxu0 0.0
  %434 = vmatpush1.xpose.msra.mxu0 %v423
  %435 = vmatprep.subr.mxu0 0.0
  %436 = vmatpush1.xpose.msra.mxu0 %v421
  %437 = vmatprep.subr.mxu0 0.0
  %438 = vmatpush1.xpose.msra.mxu0 %v419
  %439 = vmatprep.subr.mxu0 0.0
  %440 = vmatpush1.xpose.msra.mxu0 %v417
  %441 = vmatprep.subr.mxu0 0.0
  %442 = vmatpush1.xpose.msra.mxu0 %v415
  %443 = vmatprep.subr.mxu0 0.0
  %444 = vmatpush1.xpose.msra.mxu0 %v413
  %445 = vmatprep.subr.mxu0 0.0
  %446 = vmatpush1.xpose.msra.mxu0 %v411
  %447 = vmatprep.subr.mxu0 0.0
  %448 = vmatpush1.xpose.msra.mxu0 %v409
  %449 = vmatprep.subr.mxu0 0.0
  %450 = vmatpush1.xpose.msra.mxu0 %v407
  %451 = vmatprep.subr.mxu0 0.0
  %452 = vmatpush1.xpose.msra.mxu0 %v405
  %453 = vmatprep.subr.mxu0 0.0
  %454 = vmatpush1.xpose.msra.mxu0 %v403
  %455 = vmatprep.subr.mxu0 0.0
  %456 = vmatpush1.xpose.msra.mxu0 %v401
  %457 = vmatprep.subr.mxu0 0.0
  %458 = vmatpush1.xpose.msra.mxu0 %v399
  %459 = vmatprep.subr.mxu0 0.0
  %460 = vmatpush1.xpose.msra.mxu0 %v397
  %461 = vmatprep.subr.mxu0 0.0
  %462 = vmatpush2.xpose.msra.mxu0 0.0
  %463 = vmatprep.subr.mxu0 0.0
  %464 = vmatpush2.xpose.msra.mxu0 0.0
  %465 = vmatprep.subr.mxu0 0.0
  %466 = vmatpush2.xpose.msra.mxu0 0.0
  %467 = vmatprep.subr.mxu0 0.0
  %468 = vmatpush2.xpose.msra.mxu0 0.0
  %469 = vmatprep.subr.mxu0 0.0
  %470 = vmatpush2.xpose.msra.mxu0 0.0
  %471 = vmatprep.subr.mxu0 0.0
  %472 = vmatpush2.xpose.msra.mxu0 0.0
  %473 = vmatprep.subr.mxu0 0.0
  %474 = vmatpush2.xpose.msra.mxu0 0.0
  %475 = vmatprep.subr.mxu0 0.0
  %476 = vmatpush2.xpose.msra.mxu0 0.0
  %477 = vmatprep.subr.mxu0 0.0
  %478 = vmatpush2.xpose.msra.mxu0 0.0
  %479 = vmatprep.subr.mxu0 0.0
  %480 = vmatpush2.xpose.msra.mxu0 0.0
  %481 = vmatprep.subr.mxu0 0.0
  %482 = vmatpush2.xpose.msra.mxu0 0.0
  %483 = vmatprep.subr.mxu0 0.0
  %484 = vmatpush2.xpose.msra.mxu0 0.0
  %485 = vmatprep.subr.mxu0 0.0
  %486 = vmatpush2.xpose.msra.mxu0 0.0
  %487 = vmatprep.subr.mxu0 0.0
  %488 = vmatpush2.xpose.msra.mxu0 0.0
  %489 = vmatprep.subr.mxu0 0.0
  %490 = vmatpush2.xpose.msra.mxu0 0.0
  %491 = vmatprep.subr.mxu0 0.0
  %492 = vmatpush2.xpose.msra.mxu0 0.0
  %493 = vmatprep.mubr.f32.mxu0 0.0
  %494 = vmatmul.mubr.f32.gmra.mxu0 %v392
  %v495 = vpop.f32.mrf.mxu0
  %v496 = vadd.f32 0.0, %v495
  %v497 = vpop.f32.mrf.mxu0
  %498 = vmatprep.mubr.f32.mxu0 0.0
  %499 = vmatmul.mubr.f32.gmra.mxu0 %v395
  %v500 = vpop.f32.mrf.mxu0
  %v501 = vadd.f32 0.0, %v500
  %v502 = vpop.f32.mrf.mxu0
  %503 = vdwg.mxu0
  %v504 = vmul.f32 %v496, 0.35355338
  %v505 = vmul.f32 %v501, 0.35355338
  %v506 = vadd.f32 %v504, %v45
  %v507 = vadd.f32 %v505, %v46
  %508 = vmax.xlane.f32.xlu0 %v506
  %v509 = vpop.xlane.xlu0 %508
  %510 = vmax.xlane.f32.xlu0 %v507
  %v511 = vpop.xlane.xlu0 %510
  %v512 = vsub.f32 %v506, %v509
  %v513 = vsub.f32 %v507, %v511
  %v514 = vmul.f32 %v512, 1.442695
  %v515 = vpow.pop %v514
  %v516 = vmul.f32 %v513, 1.442695
  %v517 = vpow.pop %v516
  %518 = vmatprep.subr.mxu0 0.0
  %519 = vmatpush1.msra.mxu0 %v84
  %520 = vmatprep.subr.mxu0 0.0
  %521 = vmatpush1.msra.mxu0 %v83
  %522 = vmatprep.subr.mxu0 0.0
  %523 = vmatpush1.msra.mxu0 %v82
  %524 = vmatprep.subr.mxu0 0.0
  %525 = vmatpush1.msra.mxu0 %v81
  %526 = vmatprep.subr.mxu0 0.0
  %527 = vmatpush1.msra.mxu0 %v80
  %528 = vmatprep.subr.mxu0 0.0
  %529 = vmatpush1.msra.mxu0 %v79
  %530 = vmatprep.subr.mxu0 0.0
  %531 = vmatpush1.msra.mxu0 %v78
  %532 = vmatprep.subr.mxu0 0.0
  %533 = vmatpush1.msra.mxu0 %v77
  %534 = vmatprep.subr.mxu0 0.0
  %535 = vmatpush1.msra.mxu0 %v76
  %536 = vmatprep.subr.mxu0 0.0
  %537 = vmatpush1.msra.mxu0 %v75
  %538 = vmatprep.subr.mxu0 0.0
  %539 = vmatpush1.msra.mxu0 %v74
  %540 = vmatprep.subr.mxu0 0.0
  %541 = vmatpush1.msra.mxu0 %v73
  %542 = vmatprep.subr.mxu0 0.0
  %543 = vmatpush1.msra.mxu0 %v72
  %544 = vmatprep.subr.mxu0 0.0
  %545 = vmatpush1.msra.mxu0 %v71
  %546 = vmatprep.subr.mxu0 0.0
  %547 = vmatpush1.msra.mxu0 %v70
  %548 = vmatprep.subr.mxu0 0.0
  %549 = vmatpush1.msra.mxu0 %v69
  %550 = vmatprep.subr.mxu0 0.0
  %551 = vmatpush2.msra.mxu0 0.0
  %552 = vmatprep.subr.mxu0 0.0
  %553 = vmatpush2.msra.mxu0 0.0
  %554 = vmatprep.subr.mxu0 0.0
  %555 = vmatpush2.msra.mxu0 0.0
  %556 = vmatprep.subr.mxu0 0.0
  %557 = vmatpush2.msra.mxu0 0.0
  %558 = vmatprep.subr.mxu0 0.0
  %559 = vmatpush2.msra.mxu0 0.0
  %560 = vmatprep.subr.mxu0 0.0
  %561 = vmatpush2.msra.mxu0 0.0
  %562 = vmatprep.subr.mxu0 0.0
  %563 = vmatpush2.msra.mxu0 0.0
  %564 = vmatprep.subr.mxu0 0.0
  %565 = vmatpush2.msra.mxu0 0.0
  %566 = vmatprep.subr.mxu0 0.0
  %567 = vmatpush2.msra.mxu0 0.0
  %568 = vmatprep.subr.mxu0 0.0
  %569 = vmatpush2.msra.mxu0 0.0
  %570 = vmatprep.subr.mxu0 0.0
  %571 = vmatpush2.msra.mxu0 0.0
  %572 = vmatprep.subr.mxu0 0.0
  %573 = vmatpush2.msra.mxu0 0.0
  %574 = vmatprep.subr.mxu0 0.0
  %575 = vmatpush2.msra.mxu0 0.0
  %576 = vmatprep.subr.mxu0 0.0
  %577 = vmatpush2.msra.mxu0 0.0
  %578 = vmatprep.subr.mxu0 0.0
  %579 = vmatpush2.msra.mxu0 0.0
  %580 = vmatprep.subr.mxu0 0.0
  %581 = vmatpush2.msra.mxu0 0.0
  %582 = vmatprep.mubr.f32.mxu0 0.0
  %583 = vmatmul.mubr.f32.gmra.mxu0 %v515
  %v584 = vpop.f32.mrf.mxu0
  %v585 = vadd.f32 0.0, %v584
  %v586 = vpop.f32.mrf.mxu0
  %587 = vmatprep.mubr.f32.mxu0 0.0
  %588 = vmatmul.mubr.f32.gmra.mxu0 %v517
  %v589 = vpop.f32.mrf.mxu0
  %v590 = vadd.f32 0.0, %v589
  %v591 = vpop.f32.mrf.mxu0
  %592 = vdwg.mxu0
  %v593 = vrcp.pop %v585
  %v594 = vmul.f32 %v515, %v593
  %v595 = vrcp.pop %v590
  %v596 = vmul.f32 %v517, %v595
  %597 = vmatprep.subr.mxu0 0.0
  %598 = vmatpush1.msra.mxu0 %v342
  %599 = vmatprep.subr.mxu0 0.0
  %600 = vmatpush1.msra.mxu0 %v341
  %601 = vmatprep.subr.mxu0 0.0
  %602 = vmatpush1.msra.mxu0 %v340
  %603 = vmatprep.subr.mxu0 0.0
  %604 = vmatpush1.msra.mxu0 %v339
  %605 = vmatprep.subr.mxu0 0.0
  %606 = vmatpush1.msra.mxu0 %v338
  %607 = vmatprep.subr.mxu0 0.0
  %608 = vmatpush1.msra.mxu0 %v337
  %609 = vmatprep.subr.mxu0 0.0
  %610 = vmatpush1.msra.mxu0 %v336
  %611 = vmatprep.subr.mxu0 0.0
  %612 = vmatpush1.msra.mxu0 %v335
  %613 = vmatprep.subr.mxu0 0.0
  %614 = vmatpush1.msra.mxu0 %v334
  %615 = vmatprep.subr.mxu0 0.0
  %616 = vmatpush1.msra.mxu0 %v333
  %617 = vmatprep.subr.mxu0 0.0
  %618 = vmatpush1.msra.mxu0 %v332
  %619 = vmatprep.subr.mxu0 0.0
  %620 = vmatpush1.msra.mxu0 %v331
  %621 = vmatprep.subr.mxu0 0.0
  %622 = vmatpush1.msra.mxu0 %v330
  %623 = vmatprep.subr.mxu0 0.0
  %624 = vmatpush1.msra.mxu0 %v329
  %625 = vmatprep.subr.mxu0 0.0
  %626 = vmatpush1.msra.mxu0 %v328
  %627 = vmatprep.subr.mxu0 0.0
  %628 = vmatpush1.msra.mxu0 %v327
  %629 = vmatprep.subr.mxu0 0.0
  %630 = vmatpush2.msra.mxu0 0.0
  %631 = vmatprep.subr.mxu0 0.0
  %632 = vmatpush2.msra.mxu0 0.0
  %633 = vmatprep.subr.mxu0 0.0
  %634 = vmatpush2.msra.mxu0 0.0
  %635 = vmatprep.subr.mxu0 0.0
  %636 = vmatpush2.msra.mxu0 0.0
  %637 = vmatprep.subr.mxu0 0.0
  %638 = vmatpush2.msra.mxu0 0.0
  %639 = vmatprep.subr.mxu0 0.0
  %640 = vmatpush2.msra.mxu0 0.0
  %641 = vmatprep.subr.mxu0 0.0
  %642 = vmatpush2.msra.mxu0 0.0
  %643 = vmatprep.subr.mxu0 0.0
  %644 = vmatpush2.msra.mxu0 0.0
  %645 = vmatprep.subr.mxu0 0.0
  %646 = vmatpush2.msra.mxu0 0.0
  %647 = vmatprep.subr.mxu0 0.0
  %648 = vmatpush2.msra.mxu0 0.0
  %649 = vmatprep.subr.mxu0 0.0
  %650 = vmatpush2.msra.mxu0 0.0
  %651 = vmatprep.subr.mxu0 0.0
  %652 = vmatpush2.msra.mxu0 0.0
  %653 = vmatprep.subr.mxu0 0.0
  %654 = vmatpush2.msra.mxu0 0.0
  %655 = vmatprep.subr.mxu0 0.0
  %656 = vmatpush2.msra.mxu0 0.0
  %657 = vmatprep.subr.mxu0 0.0
  %658 = vmatpush2.msra.mxu0 0.0
  %659 = vmatprep.subr.mxu0 0.0
  %660 = vmatpush2.msra.mxu0 0.0
  %661 = vmatprep.mubr.f32.mxu0 0.0
  %662 = vmatmul.mubr.f32.gmra.mxu0 %v594
  %v663 = vpop.f32.mrf.mxu0
  %v664 = vadd.f32 0.0, %v663
  %v665 = vpop.f32.mrf.mxu0
  %666 = vmatprep.mubr.f32.mxu0 0.0
  %667 = vmatmul.mubr.f32.gmra.mxu0 %v596
  %v668 = vpop.f32.mrf.mxu0
  %v669 = vadd.f32 0.0, %v668
  %v670 = vpop.f32.mrf.mxu0
  %671 = vdwg.mxu0
  %v672 = vmul.f32 %v237, %v264
  %v673 = vmul.f32 %v243, %v266
  %v674 = vmul.f32 %v237, %v268
  %v675 = vmul.f32 %v243, %v270
  %v676 = vmul.f32 %v237, %v272
  %v677 = vmul.f32 %v243, %v274
  %v678 = vmul.f32 %v237, %v276
  %v679 = vmul.f32 %v243, %v278
  %v680 = vmul.f32 %v237, %v280
  %v681 = vmul.f32 %v243, %v282
  %v682 = vmul.f32 %v237, %v284
  %v683 = vmul.f32 %v243, %v286
  %v684 = vmul.f32 %v237, %v288
  %v685 = vmul.f32 %v243, %v290
  %v686 = vmul.f32 %v237, %v292
  %v687 = vmul.f32 %v243, %v294
  %v688 = vmul.f32 %v239, %v53
  %v689 = vmul.f32 %v245, %v54
  %v690 = vmul.f32 %v239, %v55
  %v691 = vmul.f32 %v245, %v56
  %v692 = vmul.f32 %v239, %v57
  %v693 = vmul.f32 %v245, %v58
  %v694 = vmul.f32 %v239, %v59
  %v695 = vmul.f32 %v245, %v60
  %v696 = vmul.f32 %v239, %v61
  %v697 = vmul.f32 %v245, %v62
  %v698 = vmul.f32 %v239, %v63
  %v699 = vmul.f32 %v245, %v64
  %v700 = vmul.f32 %v239, %v65
  %v701 = vmul.f32 %v245, %v66
  %v702 = vmul.f32 %v239, %v67
  %v703 = vmul.f32 %v245, %v68
  %720 = vrot.lane.b32.xlu0 %v672, 64
  %v721 = vpop.permute.xlu0 %720
  %722 = vrot.lane.b32.xlu0 %v673, 64
  %v723 = vpop.permute.xlu0 %722
  %724 = vrot.lane.b32.xlu0 %v674, 64
  %v725 = vpop.permute.xlu0 %724
  %726 = vrot.lane.b32.xlu0 %v675, 64
  %v727 = vpop.permute.xlu0 %726
  %728 = vrot.lane.b32.xlu0 %v676, 64
  %v729 = vpop.permute.xlu0 %728
  %730 = vrot.lane.b32.xlu0 %v677, 64
  %v731 = vpop.permute.xlu0 %730
  %732 = vrot.lane.b32.xlu0 %v678, 64
  %v733 = vpop.permute.xlu0 %732
  %734 = vrot.lane.b32.xlu0 %v679, 64
  %v735 = vpop.permute.xlu0 %734
  %736 = vrot.lane.b32.xlu0 %v680, 64
  %v737 = vpop.permute.xlu0 %736
  %738 = vrot.lane.b32.xlu0 %v681, 64
  %v739 = vpop.permute.xlu0 %738
  %740 = vrot.lane.b32.xlu0 %v682, 64
  %v741 = vpop.permute.xlu0 %740
  %742 = vrot.lane.b32.xlu0 %v683, 64
  %v743 = vpop.permute.xlu0 %742
  %744 = vrot.lane.b32.xlu0 %v684, 64
  %v745 = vpop.permute.xlu0 %744
  %746 = vrot.lane.b32.xlu0 %v685, 64
  %v747 = vpop.permute.xlu0 %746
  %748 = vrot.lane.b32.xlu0 %v686, 64
  %v749 = vpop.permute.xlu0 %748
  %750 = vrot.lane.b32.xlu0 %v687, 64
  %v751 = vpop.permute.xlu0 %750
  %v753 = vsel %vm145, %v237, 0
  %v756 = vsel %vm145, %v243, 0
  %v758 = vsel %vm145, %v721, 0
  %v760 = vsel %vm145, %v723, 0
  %v762 = vsel %vm145, %v725, 0
  %v764 = vsel %vm145, %v727, 0
  %v766 = vsel %vm145, %v729, 0
  %v768 = vsel %vm145, %v731, 0
  %v770 = vsel %vm145, %v733, 0
  %v772 = vsel %vm145, %v735, 0
  %v774 = vsel %vm145, %v737, 0
  %v776 = vsel %vm145, %v739, 0
  %v778 = vsel %vm145, %v741, 0
  %v780 = vsel %vm145, %v743, 0
  %v782 = vsel %vm145, %v745, 0
  %v784 = vsel %vm145, %v747, 0
  %v786 = vsel %vm145, %v749, 0
  %v788 = vsel %vm145, %v751, 0
  %790 = vmatprep.subr.mxu0 0.0
  %791 = vmatpush1.xpose.msra.mxu0 %v788
  %792 = vmatprep.subr.mxu0 0.0
  %793 = vmatpush1.xpose.msra.mxu0 %v786
  %794 = vmatprep.subr.mxu0 0.0
  %795 = vmatpush1.xpose.msra.mxu0 %v784
  %796 = vmatprep.subr.mxu0 0.0
  %797 = vmatpush1.xpose.msra.mxu0 %v782
  %798 = vmatprep.subr.mxu0 0.0
  %799 = vmatpush1.xpose.msra.mxu0 %v780
  %800 = vmatprep.subr.mxu0 0.0
  %801 = vmatpush1.xpose.msra.mxu0 %v778
  %802 = vmatprep.subr.mxu0 0.0
  %803 = vmatpush1.xpose.msra.mxu0 %v776
  %804 = vmatprep.subr.mxu0 0.0
  %805 = vmatpush1.xpose.msra.mxu0 %v774
  %806 = vmatprep.subr.mxu0 0.0
  %807 = vmatpush1.xpose.msra.mxu0 %v772
  %808 = vmatprep.subr.mxu0 0.0
  %809 = vmatpush1.xpose.msra.mxu0 %v770
  %810 = vmatprep.subr.mxu0 0.0
  %811 = vmatpush1.xpose.msra.mxu0 %v768
  %812 = vmatprep.subr.mxu0 0.0
  %813 = vmatpush1.xpose.msra.mxu0 %v766
  %814 = vmatprep.subr.mxu0 0.0
  %815 = vmatpush1.xpose.msra.mxu0 %v764
  %816 = vmatprep.subr.mxu0 0.0
  %817 = vmatpush1.xpose.msra.mxu0 %v762
  %818 = vmatprep.subr.mxu0 0.0
  %819 = vmatpush1.xpose.msra.mxu0 %v760
  %820 = vmatprep.subr.mxu0 0.0
  %821 = vmatpush1.xpose.msra.mxu0 %v758
  %822 = vmatprep.subr.mxu0 0.0
  %823 = vmatpush2.xpose.msra.mxu0 0.0
  %824 = vmatprep.subr.mxu0 0.0
  %825 = vmatpush2.xpose.msra.mxu0 0.0
  %826 = vmatprep.subr.mxu0 0.0
  %827 = vmatpush2.xpose.msra.mxu0 0.0
  %828 = vmatprep.subr.mxu0 0.0
  %829 = vmatpush2.xpose.msra.mxu0 0.0
  %830 = vmatprep.subr.mxu0 0.0
  %831 = vmatpush2.xpose.msra.mxu0 0.0
  %832 = vmatprep.subr.mxu0 0.0
  %833 = vmatpush2.xpose.msra.mxu0 0.0
  %834 = vmatprep.subr.mxu0 0.0
  %835 = vmatpush2.xpose.msra.mxu0 0.0
  %836 = vmatprep.subr.mxu0 0.0
  %837 = vmatpush2.xpose.msra.mxu0 0.0
  %838 = vmatprep.subr.mxu0 0.0
  %839 = vmatpush2.xpose.msra.mxu0 0.0
  %840 = vmatprep.subr.mxu0 0.0
  %841 = vmatpush2.xpose.msra.mxu0 0.0
  %842 = vmatprep.subr.mxu0 0.0
  %843 = vmatpush2.xpose.msra.mxu0 0.0
  %844 = vmatprep.subr.mxu0 0.0
  %845 = vmatpush2.xpose.msra.mxu0 0.0
  %846 = vmatprep.subr.mxu0 0.0
  %847 = vmatpush2.xpose.msra.mxu0 0.0
  %848 = vmatprep.subr.mxu0 0.0
  %849 = vmatpush2.xpose.msra.mxu0 0.0
  %850 = vmatprep.subr.mxu0 0.0
  %851 = vmatpush2.xpose.msra.mxu0 0.0
  %852 = vmatprep.subr.mxu0 0.0
  %853 = vmatpush2.xpose.msra.mxu0 0.0
  %854 = vmatprep.mubr.f32.mxu0 0.0
  %855 = vmatmul.mubr.f32.gmra.mxu0 %v753
  %v856 = vpop.f32.mrf.mxu0
  %v857 = vadd.f32 0.0, %v856
  %v858 = vpop.f32.mrf.mxu0
  %859 = vmatprep.mubr.f32.mxu0 0.0
  %860 = vmatmul.mubr.f32.gmra.mxu0 %v756
  %v861 = vpop.f32.mrf.mxu0
  %v862 = vadd.f32 0.0, %v861
  %v863 = vpop.f32.mrf.mxu0
  %864 = vdwg.mxu0
  %v865 = vmul.f32 %v857, 0.35355338
  %v866 = vmul.f32 %v862, 0.35355338
  %v867 = vadd.f32 %v865, %v47
  %v868 = vadd.f32 %v866, %v48
  %869 = vmax.xlane.f32.xlu0 %v867
  %v870 = vpop.xlane.xlu0 %869
  %871 = vmax.xlane.f32.xlu0 %v868
  %v872 = vpop.xlane.xlu0 %871
  %v873 = vsub.f32 %v867, %v870
  %v874 = vsub.f32 %v868, %v872
  %v875 = vmul.f32 %v873, 1.442695
  %v876 = vpow.pop %v875
  %v877 = vmul.f32 %v874, 1.442695
  %v878 = vpow.pop %v877
  %879 = vmatprep.subr.mxu0 0.0
  %880 = vmatpush1.msra.mxu0 %v84
  %881 = vmatprep.subr.mxu0 0.0
  %882 = vmatpush1.msra.mxu0 %v83
  %883 = vmatprep.subr.mxu0 0.0
  %884 = vmatpush1.msra.mxu0 %v82
  %885 = vmatprep.subr.mxu0 0.0
  %886 = vmatpush1.msra.mxu0 %v81
  %887 = vmatprep.subr.mxu0 0.0
  %888 = vmatpush1.msra.mxu0 %v80
  %889 = vmatprep.subr.mxu0 0.0
  %890 = vmatpush1.msra.mxu0 %v79
  %891 = vmatprep.subr.mxu0 0.0
  %892 = vmatpush1.msra.mxu0 %v78
  %893 = vmatprep.subr.mxu0 0.0
  %894 = vmatpush1.msra.mxu0 %v77
  %895 = vmatprep.subr.mxu0 0.0
  %896 = vmatpush1.msra.mxu0 %v76
  %897 = vmatprep.subr.mxu0 0.0
  %898 = vmatpush1.msra.mxu0 %v75
  %899 = vmatprep.subr.mxu0 0.0
  %900 = vmatpush1.msra.mxu0 %v74
  %901 = vmatprep.subr.mxu0 0.0
  %902 = vmatpush1.msra.mxu0 %v73
  %903 = vmatprep.subr.mxu0 0.0
  %904 = vmatpush1.msra.mxu0 %v72
  %905 = vmatprep.subr.mxu0 0.0
  %906 = vmatpush1.msra.mxu0 %v71
  %907 = vmatprep.subr.mxu0 0.0
  %908 = vmatpush1.msra.mxu0 %v70
  %909 = vmatprep.subr.mxu0 0.0
  %910 = vmatpush1.msra.mxu0 %v69
  %911 = vmatprep.subr.mxu0 0.0
  %912 = vmatpush2.msra.mxu0 0.0
  %913 = vmatprep.subr.mxu0 0.0
  %914 = vmatpush2.msra.mxu0 0.0
  %915 = vmatprep.subr.mxu0 0.0
  %916 = vmatpush2.msra.mxu0 0.0
  %917 = vmatprep.subr.mxu0 0.0
  %918 = vmatpush2.msra.mxu0 0.0
  %919 = vmatprep.subr.mxu0 0.0
  %920 = vmatpush2.msra.mxu0 0.0
  %921 = vmatprep.subr.mxu0 0.0
  %922 = vmatpush2.msra.mxu0 0.0
  %923 = vmatprep.subr.mxu0 0.0
  %924 = vmatpush2.msra.mxu0 0.0
  %925 = vmatprep.subr.mxu0 0.0
  %926 = vmatpush2.msra.mxu0 0.0
  %927 = vmatprep.subr.mxu0 0.0
  %928 = vmatpush2.msra.mxu0 0.0
  %929 = vmatprep.subr.mxu0 0.0
  %930 = vmatpush2.msra.mxu0 0.0
  %931 = vmatprep.subr.mxu0 0.0
  %932 = vmatpush2.msra.mxu0 0.0
  %933 = vmatprep.subr.mxu0 0.0
  %934 = vmatpush2.msra.mxu0 0.0
  %935 = vmatprep.subr.mxu0 0.0
  %936 = vmatpush2.msra.mxu0 0.0
  %937 = vmatprep.subr.mxu0 0.0
  %938 = vmatpush2.msra.mxu0 0.0
  %939 = vmatprep.subr.mxu0 0.0
  %940 = vmatpush2.msra.mxu0 0.0
  %941 = vmatprep.subr.mxu0 0.0
  %942 = vmatpush2.msra.mxu0 0.0
  %943 = vmatprep.mubr.f32.mxu0 0.0
  %944 = vmatmul.mubr.f32.gmra.mxu0 %v876
  %v945 = vpop.f32.mrf.mxu0
  %v946 = vadd.f32 0.0, %v945
  %v947 = vpop.f32.mrf.mxu0
  %948 = vmatprep.mubr.f32.mxu0 0.0
  %949 = vmatmul.mubr.f32.gmra.mxu0 %v878
  %v950 = vpop.f32.mrf.mxu0
  %v951 = vadd.f32 0.0, %v950
  %v952 = vpop.f32.mrf.mxu0
  %953 = vdwg.mxu0
  %v954 = vrcp.pop %v946
  %v955 = vmul.f32 %v876, %v954
  %v956 = vrcp.pop %v951
  %v957 = vmul.f32 %v878, %v956
  %958 = vmatprep.subr.mxu0 0.0
  %959 = vmatpush1.msra.mxu0 %v703
  %960 = vmatprep.subr.mxu0 0.0
  %961 = vmatpush1.msra.mxu0 %v702
  %962 = vmatprep.subr.mxu0 0.0
  %963 = vmatpush1.msra.mxu0 %v701
  %964 = vmatprep.subr.mxu0 0.0
  %965 = vmatpush1.msra.mxu0 %v700
  %966 = vmatprep.subr.mxu0 0.0
  %967 = vmatpush1.msra.mxu0 %v699
  %968 = vmatprep.subr.mxu0 0.0
  %969 = vmatpush1.msra.mxu0 %v698
  %970 = vmatprep.subr.mxu0 0.0
  %971 = vmatpush1.msra.mxu0 %v697
  %972 = vmatprep.subr.mxu0 0.0
  %973 = vmatpush1.msra.mxu0 %v696
  %974 = vmatprep.subr.mxu0 0.0
  %975 = vmatpush1.msra.mxu0 %v695
  %976 = vmatprep.subr.mxu0 0.0
  %977 = vmatpush1.msra.mxu0 %v694
  %978 = vmatprep.subr.mxu0 0.0
  %979 = vmatpush1.msra.mxu0 %v693
  %980 = vmatprep.subr.mxu0 0.0
  %981 = vmatpush1.msra.mxu0 %v692
  %982 = vmatprep.subr.mxu0 0.0
  %983 = vmatpush1.msra.mxu0 %v691
  %984 = vmatprep.subr.mxu0 0.0
  %985 = vmatpush1.msra.mxu0 %v690
  %986 = vmatprep.subr.mxu0 0.0
  %987 = vmatpush1.msra.mxu0 %v689
  %988 = vmatprep.subr.mxu0 0.0
  %989 = vmatpush1.msra.mxu0 %v688
  %990 = vmatprep.subr.mxu0 0.0
  %991 = vmatpush2.msra.mxu0 0.0
  %992 = vmatprep.subr.mxu0 0.0
  %993 = vmatpush2.msra.mxu0 0.0
  %994 = vmatprep.subr.mxu0 0.0
  %995 = vmatpush2.msra.mxu0 0.0
  %996 = vmatprep.subr.mxu0 0.0
  %997 = vmatpush2.msra.mxu0 0.0
  %998 = vmatprep.subr.mxu0 0.0
  %999 = vmatpush2.msra.mxu0 0.0
  %1000 = vmatprep.subr.mxu0 0.0
  %1001 = vmatpush2.msra.mxu0 0.0
  %1002 = vmatprep.subr.mxu0 0.0
  %1003 = vmatpush2.msra.mxu0 0.0
  %1004 = vmatprep.subr.mxu0 0.0
  %1005 = vmatpush2.msra.mxu0 0.0
  %1006 = vmatprep.subr.mxu0 0.0
  %1007 = vmatpush2.msra.mxu0 0.0
  %1008 = vmatprep.subr.mxu0 0.0
  %1009 = vmatpush2.msra.mxu0 0.0
  %1010 = vmatprep.subr.mxu0 0.0
  %1011 = vmatpush2.msra.mxu0 0.0
  %1012 = vmatprep.subr.mxu0 0.0
  %1013 = vmatpush2.msra.mxu0 0.0
  %1014 = vmatprep.subr.mxu0 0.0
  %1015 = vmatpush2.msra.mxu0 0.0
  %1016 = vmatprep.subr.mxu0 0.0
  %1017 = vmatpush2.msra.mxu0 0.0
  %1018 = vmatprep.subr.mxu0 0.0
  %1019 = vmatpush2.msra.mxu0 0.0
  %1020 = vmatprep.subr.mxu0 0.0
  %1021 = vmatpush2.msra.mxu0 0.0
  %1022 = vmatprep.mubr.f32.mxu0 0.0
  %1023 = vmatmul.mubr.f32.gmra.mxu0 %v955
  %v1024 = vpop.f32.mrf.mxu0
  %v1025 = vadd.f32 0.0, %v1024
  %v1026 = vpop.f32.mrf.mxu0
  %1027 = vmatprep.mubr.f32.mxu0 0.0
  %1028 = vmatmul.mubr.f32.gmra.mxu0 %v957
  %v1029 = vpop.f32.mrf.mxu0
  %v1030 = vadd.f32 0.0, %v1029
  %v1031 = vpop.f32.mrf.mxu0
  %1032 = vdwg.mxu0
  %1033 = vst [vmem:[%s11] sm:$0xff] %v594
  %1034 = vst [vmem:[%s11 + $0x8] sm:$0xff] %v596
  %1035 = vst [vmem:[%s11 + $0x10] sm:$0xff] %v955
  %1036 = vst [vmem:[%s11 + $0x18] sm:$0xff] %v957
  %v1037 = vld [vmem:[%s4 + $0x8] sm:$0xff]
  %v1038 = vld [vmem:[%s4 + $0x30] sm:$0xff]
  %v1039 = vld [vmem:[%s4 + $0x58] sm:$0xff]
  %v1040 = vld [vmem:[%s4 + $0x80] sm:$0xff]
  %v1041 = vld [vmem:[%s4 + $0xa8] sm:$0xff]
  %v1042 = vld [vmem:[%s4 + $0xd0] sm:$0xff]
  %v1043 = vld [vmem:[%s4 + $0xf8] sm:$0xff]
  %v1044 = vld [vmem:[%s4 + $0x120] sm:$0xff]
  %v1045 = vld [vmem:[%s5 + $0x1] sm:$0x1]
  %v1047 = vlaneseq
  %v1048 = vshrl.u32 %v1047, 7
  %v1049 = vsub.s32 0, %v1048
  %v1050 = vrot.slane %v1045, %v1049
  %1059 = vrot.lane.b32.xlu0 %v1037, 64
  %v1060 = vpop.permute.xlu0 %1059
  %1061 = vrot.lane.b32.xlu0 %v1038, 64
  %v1062 = vpop.permute.xlu0 %1061
  %1063 = vrot.lane.b32.xlu0 %v1039, 64
  %v1064 = vpop.permute.xlu0 %1063
  %1065 = vrot.lane.b32.xlu0 %v1040, 64
  %v1066 = vpop.permute.xlu0 %1065
  %1067 = vrot.lane.b32.xlu0 %v1041, 64
  %v1068 = vpop.permute.xlu0 %1067
  %1069 = vrot.lane.b32.xlu0 %v1042, 64
  %v1070 = vpop.permute.xlu0 %1069
  %1071 = vrot.lane.b32.xlu0 %v1043, 64
  %v1072 = vpop.permute.xlu0 %1071
  %1073 = vrot.lane.b32.xlu0 %v1044, 64
  %v1074 = vpop.permute.xlu0 %1073
  %1083 = vrot.lane.b32.xlu0 %v1050, 64
  %v1084 = vpop.permute.xlu0 %1083
  %v1087 = vsel %vm145, %v664, 0
  %v1090 = vsel %vm145, %v669, 0
  %v1093 = vsel %vm145, %v1025, 0
  %v1096 = vsel %vm145, %v1030, 0
  %1098 = vmatprep.subr.mxu0 0.0
  %1099 = vmatpush1.msra.mxu0 0.0
  %1100 = vmatprep.subr.mxu0 0.0
  %1101 = vmatpush1.msra.mxu0 0.0
  %1102 = vmatprep.subr.mxu0 0.0
  %1103 = vmatpush1.msra.mxu0 0.0
  %1104 = vmatprep.subr.mxu0 0.0
  %1105 = vmatpush1.msra.mxu0 0.0
  %1106 = vmatprep.subr.mxu0 0.0
  %1107 = vmatpush1.msra.mxu0 0.0
  %1108 = vmatprep.subr.mxu0 0.0
  %1109 = vmatpush1.msra.mxu0 0.0
  %1110 = vmatprep.subr.mxu0 0.0
  %1111 = vmatpush1.msra.mxu0 0.0
  %1112 = vmatprep.subr.mxu0 0.0
  %1113 = vmatpush1.msra.mxu0 0.0
  %1114 = vmatprep.subr.mxu0 0.0
  %1115 = vmatpush1.msra.mxu0 %v1074
  %1116 = vmatprep.subr.mxu0 0.0
  %1117 = vmatpush1.msra.mxu0 %v1072
  %1118 = vmatprep.subr.mxu0 0.0
  %1119 = vmatpush1.msra.mxu0 %v1070
  %1120 = vmatprep.subr.mxu0 0.0
  %1121 = vmatpush1.msra.mxu0 %v1068
  %1122 = vmatprep.subr.mxu0 0.0
  %1123 = vmatpush1.msra.mxu0 %v1066
  %1124 = vmatprep.subr.mxu0 0.0
  %1125 = vmatpush1.msra.mxu0 %v1064
  %1126 = vmatprep.subr.mxu0 0.0
  %1127 = vmatpush1.msra.mxu0 %v1062
  %1128 = vmatprep.subr.mxu0 0.0
  %1129 = vmatpush1.msra.mxu0 %v1060
  %1130 = vmatprep.subr.mxu0 0.0
  %1131 = vmatpush2.msra.mxu0 0.0
  %1132 = vmatprep.subr.mxu0 0.0
  %1133 = vmatpush2.msra.mxu0 0.0
  %1134 = vmatprep.subr.mxu0 0.0
  %1135 = vmatpush2.msra.mxu0 0.0
  %1136 = vmatprep.subr.mxu0 0.0
  %1137 = vmatpush2.msra.mxu0 0.0
  %1138 = vmatprep.subr.mxu0 0.0
  %1139 = vmatpush2.msra.mxu0 0.0
  %1140 = vmatprep.subr.mxu0 0.0
  %1141 = vmatpush2.msra.mxu0 0.0
  %1142 = vmatprep.subr.mxu0 0.0
  %1143 = vmatpush2.msra.mxu0 0.0
  %1144 = vmatprep.subr.mxu0 0.0
  %1145 = vmatpush2.msra.mxu0 0.0
  %1146 = vmatprep.subr.mxu0 0.0
  %1147 = vmatpush2.msra.mxu0 0.0
  %1148 = vmatprep.subr.mxu0 0.0
  %1149 = vmatpush2.msra.mxu0 0.0
  %1150 = vmatprep.subr.mxu0 0.0
  %1151 = vmatpush2.msra.mxu0 0.0
  %1152 = vmatprep.subr.mxu0 0.0
  %1153 = vmatpush2.msra.mxu0 0.0
  %1154 = vmatprep.subr.mxu0 0.0
  %1155 = vmatpush2.msra.mxu0 0.0
  %1156 = vmatprep.subr.mxu0 0.0
  %1157 = vmatpush2.msra.mxu0 0.0
  %1158 = vmatprep.subr.mxu0 0.0
  %1159 = vmatpush2.msra.mxu0 0.0
  %1160 = vmatprep.subr.mxu0 0.0
  %1161 = vmatpush2.msra.mxu0 0.0
  %1162 = vmatprep.mubr.f32.mxu0 0.0
  %1163 = vmatmul.mubr.f32.gmra.mxu0 %v1087
  %v1164 = vpop.f32.mrf.mxu0
  %v1165 = vadd.f32 %v1084, %v1164
  %v1166 = vpop.f32.mrf.mxu0
  %1167 = vmatprep.mubr.f32.mxu0 0.0
  %1168 = vmatmul.mubr.f32.gmra.mxu0 %v1090
  %v1169 = vpop.f32.mrf.mxu0
  %v1170 = vadd.f32 %v1084, %v1169
  %v1171 = vpop.f32.mrf.mxu0
  %1172 = vmatprep.mubr.f32.mxu0 0.0
  %1173 = vmatmul.mubr.f32.gmra.mxu0 %v1093
  %v1174 = vpop.f32.mrf.mxu0
  %v1175 = vadd.f32 %v1084, %v1174
  %v1176 = vpop.f32.mrf.mxu0
  %1177 = vmatprep.mubr.f32.mxu0 0.0
  %1178 = vmatmul.mubr.f32.gmra.mxu0 %v1096
  %v1179 = vpop.f32.mrf.mxu0
  %v1180 = vadd.f32 %v1084, %v1179
  %v1181 = vpop.f32.mrf.mxu0
  %1182 = vdwg.mxu0
  %v1183 = vadd.f32 %v37, %v1165
  %v1184 = vadd.f32 %v38, %v1170
  %v1185 = vadd.f32 %v39, %v1175
  %v1186 = vadd.f32 %v40, %v1180
  %v1187 = vld [vmem:[%s5 + $0x2] sm:$0x1]
  %v1188 = vsel %vm145, %v1183, 0.0
  %1189 = vadd.xlane.f32.xlu0 %v1188
  %v1190 = vpop.xlane.xlu0 %1189
  %v1191 = vsel %vm145, %v1184, 0.0
  %1192 = vadd.xlane.f32.xlu0 %v1191
  %v1193 = vpop.xlane.xlu0 %1192
  %v1194 = vsel %vm145, %v1185, 0.0
  %1195 = vadd.xlane.f32.xlu0 %v1194
  %v1196 = vpop.xlane.xlu0 %1195
  %v1197 = vsel %vm145, %v1186, 0.0
  %1198 = vadd.xlane.f32.xlu0 %v1197
  %v1199 = vpop.xlane.xlu0 %1198
  %v1200 = vrcp.pop 64.0
  %v1201 = vmul.f32 %v1190, %v1200
  %v1202 = vmul.f32 %v1193, %v1200
  %v1203 = vmul.f32 %v1196, %v1200
  %v1204 = vmul.f32 %v1199, %v1200
  %v1205 = vsub.f32 %v1183, %v1201
  %v1206 = vsub.f32 %v1184, %v1202
  %v1207 = vsub.f32 %v1185, %v1203
  %v1208 = vsub.f32 %v1186, %v1204
  %v1209 = vmul.f32 %v1205, %v1205
  %v1210 = vmul.f32 %v1206, %v1206
  %v1211 = vmul.f32 %v1207, %v1207
  %v1212 = vmul.f32 %v1208, %v1208
  %v1213 = vsel %vm145, %v1209, 0.0
  %1214 = vadd.xlane.f32.xlu0 %v1213
  %v1215 = vpop.xlane.xlu0 %1214
  %v1216 = vsel %vm145, %v1210, 0.0
  %1217 = vadd.xlane.f32.xlu0 %v1216
  %v1218 = vpop.xlane.xlu0 %1217
  %v1219 = vsel %vm145, %v1211, 0.0
  %1220 = vadd.xlane.f32.xlu0 %v1219
  %v1221 = vpop.xlane.xlu0 %1220
  %v1222 = vsel %vm145, %v1212, 0.0
  %1223 = vadd.xlane.f32.xlu0 %v1222
  %v1224 = vpop.xlane.xlu0 %1223
  %v1225 = vmul.f32 %v1215, %v1200
  %v1226 = vmul.f32 %v1218, %v1200
  %v1227 = vmul.f32 %v1221, %v1200
  %v1228 = vmul.f32 %v1224, %v1200
  %v1229 = vadd.f32 %v1225, 1e-05
  %v1230 = vadd.f32 %v1226, 1e-05
  %v1231 = vadd.f32 %v1227, 1e-05
  %v1232 = vadd.f32 %v1228, 1e-05
  %v1233 = vrsqrt.pop %v1229
  %v1234 = vrsqrt.pop %v1230
  %v1235 = vrsqrt.pop %v1231
  %v1236 = vrsqrt.pop %v1232
  %v1237 = vmul.f32 %v1205, %v1233
  %v1238 = vmul.f32 %v1206, %v1234
  %v1239 = vmul.f32 %v1207, %v1235
  %v1240 = vmul.f32 %v1208, %v1236
  %v1242 = vlaneseq
  %v1243 = vshrl.u32 %v1242, 7
  %v1244 = vsub.s32 0, %v1243
  %v1245 = vrot.slane %v1187, %v1244
  %v1247 = vmul.f32 %v1237, %v1245
  %v1248 = vmul.f32 %v1238, %v1245
  %v1249 = vmul.f32 %v1239, %v1245
  %v1250 = vmul.f32 %v1240, %v1245
  %1251 = vrot.lane.b32.xlu0 %v1245, 64
  %v1252 = vpop.permute.xlu0 %1251
  %v1254 = vadd.f32 %v1247, %v1252
  %v1255 = vadd.f32 %v1248, %v1252
  %v1256 = vadd.f32 %v1249, %v1252
  %v1257 = vadd.f32 %v1250, %v1252
  %v1258 = vld [vmem:[%s4 + $0x10] sm:$0xff]
  %v1259 = vld [vmem:[%s4 + $0x38] sm:$0xff]
  %v1260 = vld [vmem:[%s4 + $0x60] sm:$0xff]
  %v1261 = vld [vmem:[%s4 + $0x88] sm:$0xff]
  %v1262 = vld [vmem:[%s4 + $0xb0] sm:$0xff]
  %v1263 = vld [vmem:[%s4 + $0xd8] sm:$0xff]
  %v1264 = vld [vmem:[%s4 + $0x100] sm:$0xff]
  %v1265 = vld [vmem:[%s4 + $0x128] sm:$0xff]
  %v1266 = vld [vmem:[%s5 + $0x3] sm:$0x1]
  %v1268 = vlaneseq
  %v1269 = vshrl.u32 %v1268, 7
  %v1270 = vsub.s32 0, %v1269
  %v1271 = vrot.slane %v1266, %v1270
  %v1274 = vsel %vm145, %v1254, 0
  %v1277 = vsel %vm145, %v1255, 0
  %v1280 = vsel %vm145, %v1256, 0
  %v1283 = vsel %vm145, %v1257, 0
  %1285 = vmatprep.subr.mxu0 0.0
  %1286 = vmatpush1.msra.mxu0 0.0
  %1287 = vmatprep.subr.mxu0 0.0
  %1288 = vmatpush1.msra.mxu0 0.0
  %1289 = vmatprep.subr.mxu0 0.0
  %1290 = vmatpush1.msra.mxu0 0.0
  %1291 = vmatprep.subr.mxu0 0.0
  %1292 = vmatpush1.msra.mxu0 0.0
  %1293 = vmatprep.subr.mxu0 0.0
  %1294 = vmatpush1.msra.mxu0 0.0
  %1295 = vmatprep.subr.mxu0 0.0
  %1296 = vmatpush1.msra.mxu0 0.0
  %1297 = vmatprep.subr.mxu0 0.0
  %1298 = vmatpush1.msra.mxu0 0.0
  %1299 = vmatprep.subr.mxu0 0.0
  %1300 = vmatpush1.msra.mxu0 0.0
  %1301 = vmatprep.subr.mxu0 0.0
  %1302 = vmatpush1.msra.mxu0 %v1265
  %1303 = vmatprep.subr.mxu0 0.0
  %1304 = vmatpush1.msra.mxu0 %v1264
  %1305 = vmatprep.subr.mxu0 0.0
  %1306 = vmatpush1.msra.mxu0 %v1263
  %1307 = vmatprep.subr.mxu0 0.0
  %1308 = vmatpush1.msra.mxu0 %v1262
  %1309 = vmatprep.subr.mxu0 0.0
  %1310 = vmatpush1.msra.mxu0 %v1261
  %1311 = vmatprep.subr.mxu0 0.0
  %1312 = vmatpush1.msra.mxu0 %v1260
  %1313 = vmatprep.subr.mxu0 0.0
  %1314 = vmatpush1.msra.mxu0 %v1259
  %1315 = vmatprep.subr.mxu0 0.0
  %1316 = vmatpush1.msra.mxu0 %v1258
  %1317 = vmatprep.subr.mxu0 0.0
  %1318 = vmatpush2.msra.mxu0 0.0
  %1319 = vmatprep.subr.mxu0 0.0
  %1320 = vmatpush2.msra.mxu0 0.0
  %1321 = vmatprep.subr.mxu0 0.0
  %1322 = vmatpush2.msra.mxu0 0.0
  %1323 = vmatprep.subr.mxu0 0.0
  %1324 = vmatpush2.msra.mxu0 0.0
  %1325 = vmatprep.subr.mxu0 0.0
  %1326 = vmatpush2.msra.mxu0 0.0
  %1327 = vmatprep.subr.mxu0 0.0
  %1328 = vmatpush2.msra.mxu0 0.0
  %1329 = vmatprep.subr.mxu0 0.0
  %1330 = vmatpush2.msra.mxu0 0.0
  %1331 = vmatprep.subr.mxu0 0.0
  %1332 = vmatpush2.msra.mxu0 0.0
  %1333 = vmatprep.subr.mxu0 0.0
  %1334 = vmatpush2.msra.mxu0 0.0
  %1335 = vmatprep.subr.mxu0 0.0
  %1336 = vmatpush2.msra.mxu0 0.0
  %1337 = vmatprep.subr.mxu0 0.0
  %1338 = vmatpush2.msra.mxu0 0.0
  %1339 = vmatprep.subr.mxu0 0.0
  %1340 = vmatpush2.msra.mxu0 0.0
  %1341 = vmatprep.subr.mxu0 0.0
  %1342 = vmatpush2.msra.mxu0 0.0
  %1343 = vmatprep.subr.mxu0 0.0
  %1344 = vmatpush2.msra.mxu0 0.0
  %1345 = vmatprep.subr.mxu0 0.0
  %1346 = vmatpush2.msra.mxu0 0.0
  %1347 = vmatprep.subr.mxu0 0.0
  %1348 = vmatpush2.msra.mxu0 0.0
  %1349 = vmatprep.mubr.f32.mxu0 0.0
  %1350 = vmatmul.mubr.f32.gmra.mxu0 %v1274
  %v1351 = vpop.f32.mrf.mxu0
  %v1352 = vadd.f32 %v1271, %v1351
  %v1353 = vpop.f32.mrf.mxu0
  %1354 = vmatprep.mubr.f32.mxu0 0.0
  %1355 = vmatmul.mubr.f32.gmra.mxu0 %v1277
  %v1356 = vpop.f32.mrf.mxu0
  %v1357 = vadd.f32 %v1271, %v1356
  %v1358 = vpop.f32.mrf.mxu0
  %1359 = vmatprep.mubr.f32.mxu0 0.0
  %1360 = vmatmul.mubr.f32.gmra.mxu0 %v1280
  %v1361 = vpop.f32.mrf.mxu0
  %v1362 = vadd.f32 %v1271, %v1361
  %v1363 = vpop.f32.mrf.mxu0
  %1364 = vmatprep.mubr.f32.mxu0 0.0
  %1365 = vmatmul.mubr.f32.gmra.mxu0 %v1283
  %v1366 = vpop.f32.mrf.mxu0
  %v1367 = vadd.f32 %v1271, %v1366
  %v1368 = vpop.f32.mrf.mxu0
  %1369 = vdwg.mxu0
  %v1370 = vld [vmem:[%s4 + $0x10] sm:$0xff]
  %v1371 = vld [vmem:[%s4 + $0x18] sm:$0xff]
  %v1372 = vld [vmem:[%s4 + $0x38] sm:$0xff]
  %v1373 = vld [vmem:[%s4 + $0x40] sm:$0xff]
  %v1374 = vld [vmem:[%s4 + $0x60] sm:$0xff]
  %v1375 = vld [vmem:[%s4 + $0x68] sm:$0xff]
  %v1376 = vld [vmem:[%s4 + $0x88] sm:$0xff]
  %v1377 = vld [vmem:[%s4 + $0x90] sm:$0xff]
  %v1378 = vld [vmem:[%s4 + $0xb0] sm:$0xff]
  %v1379 = vld [vmem:[%s4 + $0xb8] sm:$0xff]
  %v1380 = vld [vmem:[%s4 + $0xd8] sm:$0xff]
  %v1381 = vld [vmem:[%s4 + $0xe0] sm:$0xff]
  %v1382 = vld [vmem:[%s4 + $0x100] sm:$0xff]
  %v1383 = vld [vmem:[%s4 + $0x108] sm:$0xff]
  %v1384 = vld [vmem:[%s4 + $0x128] sm:$0xff]
  %v1385 = vld [vmem:[%s4 + $0x130] sm:$0xff]
  %v1386 = vld [vmem:[%s5 + $0x3] sm:$0x3]
  %v1388 = vlaneseq
  %v1389 = vshrl.u32 %v1388, 7
  %v1390 = vsub.s32 0, %v1389
  %v1391 = vrot.slane %v1386, %v1390
  %v1392 = vlaneseq
  %v1393 = vshrl.u32 %v1392, 7
  %v1394 = vsub.s32 1, %v1393
  %v1395 = vrot.slane %v1386, %v1394
  %1412 = vrot.lane.b32.xlu0 %v1370, 64
  %v1413 = vpop.permute.xlu0 %1412
  %1414 = vrot.lane.b32.xlu0 %v1371, 64
  %v1415 = vpop.permute.xlu0 %1414
  %1416 = vrot.lane.b32.xlu0 %v1372, 64
  %v1417 = vpop.permute.xlu0 %1416
  %1418 = vrot.lane.b32.xlu0 %v1373, 64
  %v1419 = vpop.permute.xlu0 %1418
  %1420 = vrot.lane.b32.xlu0 %v1374, 64
  %v1421 = vpop.permute.xlu0 %1420
  %1422 = vrot.lane.b32.xlu0 %v1375, 64
  %v1423 = vpop.permute.xlu0 %1422
  %1424 = vrot.lane.b32.xlu0 %v1376, 64
  %v1425 = vpop.permute.xlu0 %1424
  %1426 = vrot.lane.b32.xlu0 %v1377, 64
  %v1427 = vpop.permute.xlu0 %1426
  %1428 = vrot.lane.b32.xlu0 %v1378, 64
  %v1429 = vpop.permute.xlu0 %1428
  %1430 = vrot.lane.b32.xlu0 %v1379, 64
  %v1431 = vpop.permute.xlu0 %1430
  %1432 = vrot.lane.b32.xlu0 %v1380, 64
  %v1433 = vpop.permute.xlu0 %1432
  %1434 = vrot.lane.b32.xlu0 %v1381, 64
  %v1435 = vpop.permute.xlu0 %1434
  %1436 = vrot.lane.b32.xlu0 %v1382, 64
  %v1437 = vpop.permute.xlu0 %1436
  %1438 = vrot.lane.b32.xlu0 %v1383, 64
  %v1439 = vpop.permute.xlu0 %1438
  %1440 = vrot.lane.b32.xlu0 %v1384, 64
  %v1441 = vpop.permute.xlu0 %1440
  %1442 = vrot.lane.b32.xlu0 %v1385, 64
  %v1443 = vpop.permute.xlu0 %1442
  %v1444 = vsel %vm145, %v1413, %v1415
  %v1445 = vsel %vm145, %v1417, %v1419
  %v1446 = vsel %vm145, %v1421, %v1423
  %v1447 = vsel %vm145, %v1425, %v1427
  %v1448 = vsel %vm145, %v1429, %v1431
  %v1449 = vsel %vm145, %v1433, %v1435
  %v1450 = vsel %vm145, %v1437, %v1439
  %v1451 = vsel %vm145, %v1441, %v1443
  %1460 = vrot.lane.b32.xlu0 %v1391, 64
  %v1461 = vpop.permute.xlu0 %1460
  %1462 = vrot.lane.b32.xlu0 %v1395, 64
  %v1463 = vpop.permute.xlu0 %1462
  %v1464 = vsel %vm145, %v1461, %v1463
  %v1467 = vsel %vm145, %v41, 0
  %v1470 = vsel %vm145, %v42, 0
  %v1473 = vsel %vm145, %v43, 0
  %v1476 = vsel %vm145, %v44, 0
  %1478 = vmatprep.subr.mxu0 0.0
  %1479 = vmatpush1.msra.mxu0 0.0
  %1480 = vmatprep.subr.mxu0 0.0
  %1481 = vmatpush1.msra.mxu0 0.0
  %1482 = vmatprep.subr.mxu0 0.0
  %1483 = vmatpush1.msra.mxu0 0.0
  %1484 = vmatprep.subr.mxu0 0.0
  %1485 = vmatpush1.msra.mxu0 0.0
  %1486 = vmatprep.subr.mxu0 0.0
  %1487 = vmatpush1.msra.mxu0 0.0
  %1488 = vmatprep.subr.mxu0 0.0
  %1489 = vmatpush1.msra.mxu0 0.0
  %1490 = vmatprep.subr.mxu0 0.0
  %1491 = vmatpush1.msra.mxu0 0.0
  %1492 = vmatprep.subr.mxu0 0.0
  %1493 = vmatpush1.msra.mxu0 0.0
  %1494 = vmatprep.subr.mxu0 0.0
  %1495 = vmatpush1.msra.mxu0 %v1451
  %1496 = vmatprep.subr.mxu0 0.0
  %1497 = vmatpush1.msra.mxu0 %v1450
  %1498 = vmatprep.subr.mxu0 0.0
  %1499 = vmatpush1.msra.mxu0 %v1449
  %1500 = vmatprep.subr.mxu0 0.0
  %1501 = vmatpush1.msra.mxu0 %v1448
  %1502 = vmatprep.subr.mxu0 0.0
  %1503 = vmatpush1.msra.mxu0 %v1447
  %1504 = vmatprep.subr.mxu0 0.0
  %1505 = vmatpush1.msra.mxu0 %v1446
  %1506 = vmatprep.subr.mxu0 0.0
  %1507 = vmatpush1.msra.mxu0 %v1445
  %1508 = vmatprep.subr.mxu0 0.0
  %1509 = vmatpush1.msra.mxu0 %v1444
  %1510 = vmatprep.subr.mxu0 0.0
  %1511 = vmatpush2.msra.mxu0 0.0
  %1512 = vmatprep.subr.mxu0 0.0
  %1513 = vmatpush2.msra.mxu0 0.0
  %1514 = vmatprep.subr.mxu0 0.0
  %1515 = vmatpush2.msra.mxu0 0.0
  %1516 = vmatprep.subr.mxu0 0.0
  %1517 = vmatpush2.msra.mxu0 0.0
  %1518 = vmatprep.subr.mxu0 0.0
  %1519 = vmatpush2.msra.mxu0 0.0
  %1520 = vmatprep.subr.mxu0 0.0
  %1521 = vmatpush2.msra.mxu0 0.0
  %1522 = vmatprep.subr.mxu0 0.0
  %1523 = vmatpush2.msra.mxu0 0.0
  %1524 = vmatprep.subr.mxu0 0.0
  %1525 = vmatpush2.msra.mxu0 0.0
  %1526 = vmatprep.subr.mxu0 0.0
  %1527 = vmatpush2.msra.mxu0 0.0
  %1528 = vmatprep.subr.mxu0 0.0
  %1529 = vmatpush2.msra.mxu0 0.0
  %1530 = vmatprep.subr.mxu0 0.0
  %1531 = vmatpush2.msra.mxu0 0.0
  %1532 = vmatprep.subr.mxu0 0.0
  %1533 = vmatpush2.msra.mxu0 0.0
  %1534 = vmatprep.subr.mxu0 0.0
  %1535 = vmatpush2.msra.mxu0 0.0
  %1536 = vmatprep.subr.mxu0 0.0
  %1537 = vmatpush2.msra.mxu0 0.0
  %1538 = vmatprep.subr.mxu0 0.0
  %1539 = vmatpush2.msra.mxu0 0.0
  %1540 = vmatprep.subr.mxu0 0.0
  %1541 = vmatpush2.msra.mxu0 0.0
  %1542 = vmatprep.mubr.f32.mxu0 0.0
  %1543 = vmatmul.mubr.f32.gmra.mxu0 %v1467
  %v1544 = vpop.f32.mrf.mxu0
  %v1545 = vadd.f32 %v1464, %v1544
  %v1546 = vpop.f32.mrf.mxu0
  %1547 = vmatprep.mubr.f32.mxu0 0.0
  %1548 = vmatmul.mubr.f32.gmra.mxu0 %v1470
  %v1549 = vpop.f32.mrf.mxu0
  %v1550 = vadd.f32 %v1464, %v1549
  %v1551 = vpop.f32.mrf.mxu0
  %1552 = vmatprep.mubr.f32.mxu0 0.0
  %1553 = vmatmul.mubr.f32.gmra.mxu0 %v1473
  %v1554 = vpop.f32.mrf.mxu0
  %v1555 = vadd.f32 %v1464, %v1554
  %v1556 = vpop.f32.mrf.mxu0
  %1557 = vmatprep.mubr.f32.mxu0 0.0
  %1558 = vmatmul.mubr.f32.gmra.mxu0 %v1476
  %v1559 = vpop.f32.mrf.mxu0
  %v1560 = vadd.f32 %v1464, %v1559
  %v1561 = vpop.f32.mrf.mxu0
  %1562 = vdwg.mxu0
  %v1563 = vmul.f32 %v1545, %v85
  %v1564 = vmul.f32 %v1550, %v86
  %v1565 = vmul.f32 %v1545, %v87
  %v1566 = vmul.f32 %v1550, %v88
  %v1567 = vmul.f32 %v1545, %v89
  %v1568 = vmul.f32 %v1550, %v90
  %v1569 = vmul.f32 %v1545, %v91
  %v1570 = vmul.f32 %v1550, %v92
  %v1571 = vmul.f32 %v1545, %v93
  %v1572 = vmul.f32 %v1550, %v94
  %v1573 = vmul.f32 %v1545, %v95
  %v1574 = vmul.f32 %v1550, %v96
  %v1575 = vmul.f32 %v1545, %v97
  %v1576 = vmul.f32 %v1550, %v98
  %v1577 = vmul.f32 %v1545, %v99
  %v1578 = vmul.f32 %v1550, %v100
  %1595 = vrot.lane.b32.xlu0 %v85, 64
  %v1596 = vpop.permute.xlu0 %1595
  %1597 = vrot.lane.b32.xlu0 %v86, 64
  %v1598 = vpop.permute.xlu0 %1597
  %1599 = vrot.lane.b32.xlu0 %v87, 64
  %v1600 = vpop.permute.xlu0 %1599
  %1601 = vrot.lane.b32.xlu0 %v88, 64
  %v1602 = vpop.permute.xlu0 %1601
  %1603 = vrot.lane.b32.xlu0 %v89, 64
  %v1604 = vpop.permute.xlu0 %1603
  %1605 = vrot.lane.b32.xlu0 %v90, 64
  %v1606 = vpop.permute.xlu0 %1605
  %1607 = vrot.lane.b32.xlu0 %v91, 64
  %v1608 = vpop.permute.xlu0 %1607
  %1609 = vrot.lane.b32.xlu0 %v92, 64
  %v1610 = vpop.permute.xlu0 %1609
  %1611 = vrot.lane.b32.xlu0 %v93, 64
  %v1612 = vpop.permute.xlu0 %1611
  %1613 = vrot.lane.b32.xlu0 %v94, 64
  %v1614 = vpop.permute.xlu0 %1613
  %1615 = vrot.lane.b32.xlu0 %v95, 64
  %v1616 = vpop.permute.xlu0 %1615
  %1617 = vrot.lane.b32.xlu0 %v96, 64
  %v1618 = vpop.permute.xlu0 %1617
  %1619 = vrot.lane.b32.xlu0 %v97, 64
  %v1620 = vpop.permute.xlu0 %1619
  %1621 = vrot.lane.b32.xlu0 %v98, 64
  %v1622 = vpop.permute.xlu0 %1621
  %1623 = vrot.lane.b32.xlu0 %v99, 64
  %v1624 = vpop.permute.xlu0 %1623
  %1625 = vrot.lane.b32.xlu0 %v100, 64
  %v1626 = vpop.permute.xlu0 %1625
  %v1643 = vmul.f32 %v1545, %v1596
  %v1644 = vmul.f32 %v1550, %v1598
  %v1645 = vmul.f32 %v1545, %v1600
  %v1646 = vmul.f32 %v1550, %v1602
  %v1647 = vmul.f32 %v1545, %v1604
  %v1648 = vmul.f32 %v1550, %v1606
  %v1649 = vmul.f32 %v1545, %v1608
  %v1650 = vmul.f32 %v1550, %v1610
  %v1651 = vmul.f32 %v1545, %v1612
  %v1652 = vmul.f32 %v1550, %v1614
  %v1653 = vmul.f32 %v1545, %v1616
  %v1654 = vmul.f32 %v1550, %v1618
  %v1655 = vmul.f32 %v1545, %v1620
  %v1656 = vmul.f32 %v1550, %v1622
  %v1657 = vmul.f32 %v1545, %v1624
  %v1658 = vmul.f32 %v1550, %v1626
  %v1660 = vsel %vm145, %v1352, 0
  %v1663 = vsel %vm145, %v1357, 0
  %v1666 = vsel %vm145, %v1563, 0
  %v1669 = vsel %vm145, %v1564, 0
  %v1672 = vsel %vm145, %v1565, 0
  %v1675 = vsel %vm145, %v1566, 0
  %v1678 = vsel %vm145, %v1567, 0
  %v1681 = vsel %vm145, %v1568, 0
  %v1684 = vsel %vm145, %v1569, 0
  %v1687 = vsel %vm145, %v1570, 0
  %v1690 = vsel %vm145, %v1571, 0
  %v1693 = vsel %vm145, %v1572, 0
  %v1696 = vsel %vm145, %v1573, 0
  %v1699 = vsel %vm145, %v1574, 0
  %v1702 = vsel %vm145, %v1575, 0
  %v1705 = vsel %vm145, %v1576, 0
  %v1708 = vsel %vm145, %v1577, 0
  %v1711 = vsel %vm145, %v1578, 0
  %1713 = vmatprep.subr.mxu0 0.0
  %1714 = vmatpush1.xpose.msra.mxu0 %v1711
  %1715 = vmatprep.subr.mxu0 0.0
  %1716 = vmatpush1.xpose.msra.mxu0 %v1708
  %1717 = vmatprep.subr.mxu0 0.0
  %1718 = vmatpush1.xpose.msra.mxu0 %v1705
  %1719 = vmatprep.subr.mxu0 0.0
  %1720 = vmatpush1.xpose.msra.mxu0 %v1702
  %1721 = vmatprep.subr.mxu0 0.0
  %1722 = vmatpush1.xpose.msra.mxu0 %v1699
  %1723 = vmatprep.subr.mxu0 0.0
  %1724 = vmatpush1.xpose.msra.mxu0 %v1696
  %1725 = vmatprep.subr.mxu0 0.0
  %1726 = vmatpush1.xpose.msra.mxu0 %v1693
  %1727 = vmatprep.subr.mxu0 0.0
  %1728 = vmatpush1.xpose.msra.mxu0 %v1690
  %1729 = vmatprep.subr.mxu0 0.0
  %1730 = vmatpush1.xpose.msra.mxu0 %v1687
  %1731 = vmatprep.subr.mxu0 0.0
  %1732 = vmatpush1.xpose.msra.mxu0 %v1684
  %1733 = vmatprep.subr.mxu0 0.0
  %1734 = vmatpush1.xpose.msra.mxu0 %v1681
  %1735 = vmatprep.subr.mxu0 0.0
  %1736 = vmatpush1.xpose.msra.mxu0 %v1678
  %1737 = vmatprep.subr.mxu0 0.0
  %1738 = vmatpush1.xpose.msra.mxu0 %v1675
  %1739 = vmatprep.subr.mxu0 0.0
  %1740 = vmatpush1.xpose.msra.mxu0 %v1672
  %1741 = vmatprep.subr.mxu0 0.0
  %1742 = vmatpush1.xpose.msra.mxu0 %v1669
  %1743 = vmatprep.subr.mxu0 0.0
  %1744 = vmatpush1.xpose.msra.mxu0 %v1666
  %1745 = vmatprep.subr.mxu0 0.0
  %1746 = vmatpush2.xpose.msra.mxu0 0.0
  %1747 = vmatprep.subr.mxu0 0.0
  %1748 = vmatpush2.xpose.msra.mxu0 0.0
  %1749 = vmatprep.subr.mxu0 0.0
  %1750 = vmatpush2.xpose.msra.mxu0 0.0
  %1751 = vmatprep.subr.mxu0 0.0
  %1752 = vmatpush2.xpose.msra.mxu0 0.0
  %1753 = vmatprep.subr.mxu0 0.0
  %1754 = vmatpush2.xpose.msra.mxu0 0.0
  %1755 = vmatprep.subr.mxu0 0.0
  %1756 = vmatpush2.xpose.msra.mxu0 0.0
  %1757 = vmatprep.subr.mxu0 0.0
  %1758 = vmatpush2.xpose.msra.mxu0 0.0
  %1759 = vmatprep.subr.mxu0 0.0
  %1760 = vmatpush2.xpose.msra.mxu0 0.0
  %1761 = vmatprep.subr.mxu0 0.0
  %1762 = vmatpush2.xpose.msra.mxu0 0.0
  %1763 = vmatprep.subr.mxu0 0.0
  %1764 = vmatpush2.xpose.msra.mxu0 0.0
  %1765 = vmatprep.subr.mxu0 0.0
  %1766 = vmatpush2.xpose.msra.mxu0 0.0
  %1767 = vmatprep.subr.mxu0 0.0
  %1768 = vmatpush2.xpose.msra.mxu0 0.0
  %1769 = vmatprep.subr.mxu0 0.0
  %1770 = vmatpush2.xpose.msra.mxu0 0.0
  %1771 = vmatprep.subr.mxu0 0.0
  %1772 = vmatpush2.xpose.msra.mxu0 0.0
  %1773 = vmatprep.subr.mxu0 0.0
  %1774 = vmatpush2.xpose.msra.mxu0 0.0
  %1775 = vmatprep.subr.mxu0 0.0
  %1776 = vmatpush2.xpose.msra.mxu0 0.0
  %1777 = vmatprep.mubr.f32.mxu0 0.0
  %1778 = vmatmul.mubr.f32.gmra.mxu0 %v1660
  %v1779 = vpop.f32.mrf.mxu0
  %v1780 = vadd.f32 0.0, %v1779
  %v1781 = vpop.f32.mrf.mxu0
  %1782 = vmatprep.mubr.f32.mxu0 0.0
  %1783 = vmatmul.mubr.f32.gmra.mxu0 %v1663
  %v1784 = vpop.f32.mrf.mxu0
  %v1785 = vadd.f32 0.0, %v1784
  %v1786 = vpop.f32.mrf.mxu0
  %1787 = vdwg.mxu0
  %v1788 = vmul.f32 %v1780, 0.35355338
  %v1789 = vmul.f32 %v1785, 0.35355338
  %v1790 = vadd.f32 %v1788, %v49
  %v1791 = vadd.f32 %v1789, %v50
  %1792 = vmax.xlane.f32.xlu0 %v1790
  %v1793 = vpop.xlane.xlu0 %1792
  %1794 = vmax.xlane.f32.xlu0 %v1791
  %v1795 = vpop.xlane.xlu0 %1794
  %v1796 = vsub.f32 %v1790, %v1793
  %v1797 = vsub.f32 %v1791, %v1795
  %v1798 = vmul.f32 %v1796, 1.442695
  %v1799 = vpow.pop %v1798
  %v1800 = vmul.f32 %v1797, 1.442695
  %v1801 = vpow.pop %v1800
  %1802 = vmatprep.subr.mxu0 0.0
  %1803 = vmatpush1.msra.mxu0 %v116
  %1804 = vmatprep.subr.mxu0 0.0
  %1805 = vmatpush1.msra.mxu0 %v115
  %1806 = vmatprep.subr.mxu0 0.0
  %1807 = vmatpush1.msra.mxu0 %v114
  %1808 = vmatprep.subr.mxu0 0.0
  %1809 = vmatpush1.msra.mxu0 %v113
  %1810 = vmatprep.subr.mxu0 0.0
  %1811 = vmatpush1.msra.mxu0 %v112
  %1812 = vmatprep.subr.mxu0 0.0
  %1813 = vmatpush1.msra.mxu0 %v111
  %1814 = vmatprep.subr.mxu0 0.0
  %1815 = vmatpush1.msra.mxu0 %v110
  %1816 = vmatprep.subr.mxu0 0.0
  %1817 = vmatpush1.msra.mxu0 %v109
  %1818 = vmatprep.subr.mxu0 0.0
  %1819 = vmatpush1.msra.mxu0 %v108
  %1820 = vmatprep.subr.mxu0 0.0
  %1821 = vmatpush1.msra.mxu0 %v107
  %1822 = vmatprep.subr.mxu0 0.0
  %1823 = vmatpush1.msra.mxu0 %v106
  %1824 = vmatprep.subr.mxu0 0.0
  %1825 = vmatpush1.msra.mxu0 %v105
  %1826 = vmatprep.subr.mxu0 0.0
  %1827 = vmatpush1.msra.mxu0 %v104
  %1828 = vmatprep.subr.mxu0 0.0
  %1829 = vmatpush1.msra.mxu0 %v103
  %1830 = vmatprep.subr.mxu0 0.0
  %1831 = vmatpush1.msra.mxu0 %v102
  %1832 = vmatprep.subr.mxu0 0.0
  %1833 = vmatpush1.msra.mxu0 %v101
  %1834 = vmatprep.subr.mxu0 0.0
  %1835 = vmatpush2.msra.mxu0 0.0
  %1836 = vmatprep.subr.mxu0 0.0
  %1837 = vmatpush2.msra.mxu0 0.0
  %1838 = vmatprep.subr.mxu0 0.0
  %1839 = vmatpush2.msra.mxu0 0.0
  %1840 = vmatprep.subr.mxu0 0.0
  %1841 = vmatpush2.msra.mxu0 0.0
  %1842 = vmatprep.subr.mxu0 0.0
  %1843 = vmatpush2.msra.mxu0 0.0
  %1844 = vmatprep.subr.mxu0 0.0
  %1845 = vmatpush2.msra.mxu0 0.0
  %1846 = vmatprep.subr.mxu0 0.0
  %1847 = vmatpush2.msra.mxu0 0.0
  %1848 = vmatprep.subr.mxu0 0.0
  %1849 = vmatpush2.msra.mxu0 0.0
  %1850 = vmatprep.subr.mxu0 0.0
  %1851 = vmatpush2.msra.mxu0 0.0
  %1852 = vmatprep.subr.mxu0 0.0
  %1853 = vmatpush2.msra.mxu0 0.0
  %1854 = vmatprep.subr.mxu0 0.0
  %1855 = vmatpush2.msra.mxu0 0.0
  %1856 = vmatprep.subr.mxu0 0.0
  %1857 = vmatpush2.msra.mxu0 0.0
  %1858 = vmatprep.subr.mxu0 0.0
  %1859 = vmatpush2.msra.mxu0 0.0
  %1860 = vmatprep.subr.mxu0 0.0
  %1861 = vmatpush2.msra.mxu0 0.0
  %1862 = vmatprep.subr.mxu0 0.0
  %1863 = vmatpush2.msra.mxu0 0.0
  %1864 = vmatprep.subr.mxu0 0.0
  %1865 = vmatpush2.msra.mxu0 0.0
  %1866 = vmatprep.mubr.f32.mxu0 0.0
  %1867 = vmatmul.mubr.f32.gmra.mxu0 %v1799
  %v1868 = vpop.f32.mrf.mxu0
  %v1869 = vadd.f32 0.0, %v1868
  %v1870 = vpop.f32.mrf.mxu0
  %1871 = vmatprep.mubr.f32.mxu0 0.0
  %1872 = vmatmul.mubr.f32.gmra.mxu0 %v1801
  %v1873 = vpop.f32.mrf.mxu0
  %v1874 = vadd.f32 0.0, %v1873
  %v1875 = vpop.f32.mrf.mxu0
  %1876 = vdwg.mxu0
  %v1877 = vrcp.pop %v1869
  %v1878 = vmul.f32 %v1799, %v1877
  %v1879 = vrcp.pop %v1874
  %v1880 = vmul.f32 %v1801, %v1879
  %1897 = vrot.lane.b32.xlu0 %v1643, 64
  %v1898 = vpop.permute.xlu0 %1897
  %1899 = vrot.lane.b32.xlu0 %v1644, 64
  %v1900 = vpop.permute.xlu0 %1899
  %1901 = vrot.lane.b32.xlu0 %v1645, 64
  %v1902 = vpop.permute.xlu0 %1901
  %1903 = vrot.lane.b32.xlu0 %v1646, 64
  %v1904 = vpop.permute.xlu0 %1903
  %1905 = vrot.lane.b32.xlu0 %v1647, 64
  %v1906 = vpop.permute.xlu0 %1905
  %1907 = vrot.lane.b32.xlu0 %v1648, 64
  %v1908 = vpop.permute.xlu0 %1907
  %1909 = vrot.lane.b32.xlu0 %v1649, 64
  %v1910 = vpop.permute.xlu0 %1909
  %1911 = vrot.lane.b32.xlu0 %v1650, 64
  %v1912 = vpop.permute.xlu0 %1911
  %1913 = vrot.lane.b32.xlu0 %v1651, 64
  %v1914 = vpop.permute.xlu0 %1913
  %1915 = vrot.lane.b32.xlu0 %v1652, 64
  %v1916 = vpop.permute.xlu0 %1915
  %1917 = vrot.lane.b32.xlu0 %v1653, 64
  %v1918 = vpop.permute.xlu0 %1917
  %1919 = vrot.lane.b32.xlu0 %v1654, 64
  %v1920 = vpop.permute.xlu0 %1919
  %1921 = vrot.lane.b32.xlu0 %v1655, 64
  %v1922 = vpop.permute.xlu0 %1921
  %1923 = vrot.lane.b32.xlu0 %v1656, 64
  %v1924 = vpop.permute.xlu0 %1923
  %1925 = vrot.lane.b32.xlu0 %v1657, 64
  %v1926 = vpop.permute.xlu0 %1925
  %1927 = vrot.lane.b32.xlu0 %v1658, 64
  %v1928 = vpop.permute.xlu0 %1927
  %1945 = vmatprep.subr.mxu0 0.0
  %1946 = vmatpush1.msra.mxu0 %v1928
  %1947 = vmatprep.subr.mxu0 0.0
  %1948 = vmatpush1.msra.mxu0 %v1926
  %1949 = vmatprep.subr.mxu0 0.0
  %1950 = vmatpush1.msra.mxu0 %v1924
  %1951 = vmatprep.subr.mxu0 0.0
  %1952 = vmatpush1.msra.mxu0 %v1922
  %1953 = vmatprep.subr.mxu0 0.0
  %1954 = vmatpush1.msra.mxu0 %v1920
  %1955 = vmatprep.subr.mxu0 0.0
  %1956 = vmatpush1.msra.mxu0 %v1918
  %1957 = vmatprep.subr.mxu0 0.0
  %1958 = vmatpush1.msra.mxu0 %v1916
  %1959 = vmatprep.subr.mxu0 0.0
  %1960 = vmatpush1.msra.mxu0 %v1914
  %1961 = vmatprep.subr.mxu0 0.0
  %1962 = vmatpush1.msra.mxu0 %v1912
  %1963 = vmatprep.subr.mxu0 0.0
  %1964 = vmatpush1.msra.mxu0 %v1910
  %1965 = vmatprep.subr.mxu0 0.0
  %1966 = vmatpush1.msra.mxu0 %v1908
  %1967 = vmatprep.subr.mxu0 0.0
  %1968 = vmatpush1.msra.mxu0 %v1906
  %1969 = vmatprep.subr.mxu0 0.0
  %1970 = vmatpush1.msra.mxu0 %v1904
  %1971 = vmatprep.subr.mxu0 0.0
  %1972 = vmatpush1.msra.mxu0 %v1902
  %1973 = vmatprep.subr.mxu0 0.0
  %1974 = vmatpush1.msra.mxu0 %v1900
  %1975 = vmatprep.subr.mxu0 0.0
  %1976 = vmatpush1.msra.mxu0 %v1898
  %1977 = vmatprep.subr.mxu0 0.0
  %1978 = vmatpush2.msra.mxu0 0.0
  %1979 = vmatprep.subr.mxu0 0.0
  %1980 = vmatpush2.msra.mxu0 0.0
  %1981 = vmatprep.subr.mxu0 0.0
  %1982 = vmatpush2.msra.mxu0 0.0
  %1983 = vmatprep.subr.mxu0 0.0
  %1984 = vmatpush2.msra.mxu0 0.0
  %1985 = vmatprep.subr.mxu0 0.0
  %1986 = vmatpush2.msra.mxu0 0.0
  %1987 = vmatprep.subr.mxu0 0.0
  %1988 = vmatpush2.msra.mxu0 0.0
  %1989 = vmatprep.subr.mxu0 0.0
  %1990 = vmatpush2.msra.mxu0 0.0
  %1991 = vmatprep.subr.mxu0 0.0
  %1992 = vmatpush2.msra.mxu0 0.0
  %1993 = vmatprep.subr.mxu0 0.0
  %1994 = vmatpush2.msra.mxu0 0.0
  %1995 = vmatprep.subr.mxu0 0.0
  %1996 = vmatpush2.msra.mxu0 0.0
  %1997 = vmatprep.subr.mxu0 0.0
  %1998 = vmatpush2.msra.mxu0 0.0
  %1999 = vmatprep.subr.mxu0 0.0
  %2000 = vmatpush2.msra.mxu0 0.0
  %2001 = vmatprep.subr.mxu0 0.0
  %2002 = vmatpush2.msra.mxu0 0.0
  %2003 = vmatprep.subr.mxu0 0.0
  %2004 = vmatpush2.msra.mxu0 0.0
  %2005 = vmatprep.subr.mxu0 0.0
  %2006 = vmatpush2.msra.mxu0 0.0
  %2007 = vmatprep.subr.mxu0 0.0
  %2008 = vmatpush2.msra.mxu0 0.0
  %2009 = vmatprep.mubr.f32.mxu0 0.0
  %2010 = vmatmul.mubr.f32.gmra.mxu0 %v1878
  %v2011 = vpop.f32.mrf.mxu0
  %v2012 = vadd.f32 0.0, %v2011
  %v2013 = vpop.f32.mrf.mxu0
  %2014 = vmatprep.mubr.f32.mxu0 0.0
  %2015 = vmatmul.mubr.f32.gmra.mxu0 %v1880
  %v2016 = vpop.f32.mrf.mxu0
  %v2017 = vadd.f32 0.0, %v2016
  %v2018 = vpop.f32.mrf.mxu0
  %2019 = vdwg.mxu0
  %v2020 = vmul.f32 %v1555, %v85
  %v2021 = vmul.f32 %v1560, %v86
  %v2022 = vmul.f32 %v1555, %v87
  %v2023 = vmul.f32 %v1560, %v88
  %v2024 = vmul.f32 %v1555, %v89
  %v2025 = vmul.f32 %v1560, %v90
  %v2026 = vmul.f32 %v1555, %v91
  %v2027 = vmul.f32 %v1560, %v92
  %v2028 = vmul.f32 %v1555, %v93
  %v2029 = vmul.f32 %v1560, %v94
  %v2030 = vmul.f32 %v1555, %v95
  %v2031 = vmul.f32 %v1560, %v96
  %v2032 = vmul.f32 %v1555, %v97
  %v2033 = vmul.f32 %v1560, %v98
  %v2034 = vmul.f32 %v1555, %v99
  %v2035 = vmul.f32 %v1560, %v100
  %v2036 = vmul.f32 %v1555, %v1596
  %v2037 = vmul.f32 %v1560, %v1598
  %v2038 = vmul.f32 %v1555, %v1600
  %v2039 = vmul.f32 %v1560, %v1602
  %v2040 = vmul.f32 %v1555, %v1604
  %v2041 = vmul.f32 %v1560, %v1606
  %v2042 = vmul.f32 %v1555, %v1608
  %v2043 = vmul.f32 %v1560, %v1610
  %v2044 = vmul.f32 %v1555, %v1612
  %v2045 = vmul.f32 %v1560, %v1614
  %v2046 = vmul.f32 %v1555, %v1616
  %v2047 = vmul.f32 %v1560, %v1618
  %v2048 = vmul.f32 %v1555, %v1620
  %v2049 = vmul.f32 %v1560, %v1622
  %v2050 = vmul.f32 %v1555, %v1624
  %v2051 = vmul.f32 %v1560, %v1626
  %v2053 = vsel %vm145, %v1362, 0
  %v2056 = vsel %vm145, %v1367, 0
  %v2059 = vsel %vm145, %v2020, 0
  %v2062 = vsel %vm145, %v2021, 0
  %v2065 = vsel %vm145, %v2022, 0
  %v2068 = vsel %vm145, %v2023, 0
  %v2071 = vsel %vm145, %v2024, 0
  %v2074 = vsel %vm145, %v2025, 0
  %v2077 = vsel %vm145, %v2026, 0
  %v2080 = vsel %vm145, %v2027, 0
  %v2083 = vsel %vm145, %v2028, 0
  %v2086 = vsel %vm145, %v2029, 0
  %v2089 = vsel %vm145, %v2030, 0
  %v2092 = vsel %vm145, %v2031, 0
  %v2095 = vsel %vm145, %v2032, 0
  %v2098 = vsel %vm145, %v2033, 0
  %v2101 = vsel %vm145, %v2034, 0
  %v2104 = vsel %vm145, %v2035, 0
  %2106 = vmatprep.subr.mxu0 0.0
  %2107 = vmatpush1.xpose.msra.mxu0 %v2104
  %2108 = vmatprep.subr.mxu0 0.0
  %2109 = vmatpush1.xpose.msra.mxu0 %v2101
  %2110 = vmatprep.subr.mxu0 0.0
  %2111 = vmatpush1.xpose.msra.mxu0 %v2098
  %2112 = vmatprep.subr.mxu0 0.0
  %2113 = vmatpush1.xpose.msra.mxu0 %v2095
  %2114 = vmatprep.subr.mxu0 0.0
  %2115 = vmatpush1.xpose.msra.mxu0 %v2092
  %2116 = vmatprep.subr.mxu0 0.0
  %2117 = vmatpush1.xpose.msra.mxu0 %v2089
  %2118 = vmatprep.subr.mxu0 0.0
  %2119 = vmatpush1.xpose.msra.mxu0 %v2086
  %2120 = vmatprep.subr.mxu0 0.0
  %2121 = vmatpush1.xpose.msra.mxu0 %v2083
  %2122 = vmatprep.subr.mxu0 0.0
  %2123 = vmatpush1.xpose.msra.mxu0 %v2080
  %2124 = vmatprep.subr.mxu0 0.0
  %2125 = vmatpush1.xpose.msra.mxu0 %v2077
  %2126 = vmatprep.subr.mxu0 0.0
  %2127 = vmatpush1.xpose.msra.mxu0 %v2074
  %2128 = vmatprep.subr.mxu0 0.0
  %2129 = vmatpush1.xpose.msra.mxu0 %v2071
  %2130 = vmatprep.subr.mxu0 0.0
  %2131 = vmatpush1.xpose.msra.mxu0 %v2068
  %2132 = vmatprep.subr.mxu0 0.0
  %2133 = vmatpush1.xpose.msra.mxu0 %v2065
  %2134 = vmatprep.subr.mxu0 0.0
  %2135 = vmatpush1.xpose.msra.mxu0 %v2062
  %2136 = vmatprep.subr.mxu0 0.0
  %2137 = vmatpush1.xpose.msra.mxu0 %v2059
  %2138 = vmatprep.subr.mxu0 0.0
  %2139 = vmatpush2.xpose.msra.mxu0 0.0
  %2140 = vmatprep.subr.mxu0 0.0
  %2141 = vmatpush2.xpose.msra.mxu0 0.0
  %2142 = vmatprep.subr.mxu0 0.0
  %2143 = vmatpush2.xpose.msra.mxu0 0.0
  %2144 = vmatprep.subr.mxu0 0.0
  %2145 = vmatpush2.xpose.msra.mxu0 0.0
  %2146 = vmatprep.subr.mxu0 0.0
  %2147 = vmatpush2.xpose.msra.mxu0 0.0
  %2148 = vmatprep.subr.mxu0 0.0
  %2149 = vmatpush2.xpose.msra.mxu0 0.0
  %2150 = vmatprep.subr.mxu0 0.0
  %2151 = vmatpush2.xpose.msra.mxu0 0.0
  %2152 = vmatprep.subr.mxu0 0.0
  %2153 = vmatpush2.xpose.msra.mxu0 0.0
  %2154 = vmatprep.subr.mxu0 0.0
  %2155 = vmatpush2.xpose.msra.mxu0 0.0
  %2156 = vmatprep.subr.mxu0 0.0
  %2157 = vmatpush2.xpose.msra.mxu0 0.0
  %2158 = vmatprep.subr.mxu0 0.0
  %2159 = vmatpush2.xpose.msra.mxu0 0.0
  %2160 = vmatprep.subr.mxu0 0.0
  %2161 = vmatpush2.xpose.msra.mxu0 0.0
  %2162 = vmatprep.subr.mxu0 0.0
  %2163 = vmatpush2.xpose.msra.mxu0 0.0
  %2164 = vmatprep.subr.mxu0 0.0
  %2165 = vmatpush2.xpose.msra.mxu0 0.0
  %2166 = vmatprep.subr.mxu0 0.0
  %2167 = vmatpush2.xpose.msra.mxu0 0.0
  %2168 = vmatprep.subr.mxu0 0.0
  %2169 = vmatpush2.xpose.msra.mxu0 0.0
  %2170 = vmatprep.mubr.f32.mxu0 0.0
  %2171 = vmatmul.mubr.f32.gmra.mxu0 %v2053
  %v2172 = vpop.f32.mrf.mxu0
  %v2173 = vadd.f32 0.0, %v2172
  %v2174 = vpop.f32.mrf.mxu0
  %2175 = vmatprep.mubr.f32.mxu0 0.0
  %2176 = vmatmul.mubr.f32.gmra.mxu0 %v2056
  %v2177 = vpop.f32.mrf.mxu0
  %v2178 = vadd.f32 0.0, %v2177
  %v2179 = vpop.f32.mrf.mxu0
  %2180 = vdwg.mxu0
  %v2181 = vmul.f32 %v2173, 0.35355338
  %v2182 = vmul.f32 %v2178, 0.35355338
  %v2183 = vadd.f32 %v2181, %v51
  %v2184 = vadd.f32 %v2182, %v52
  %2185 = vmax.xlane.f32.xlu0 %v2183
  %v2186 = vpop.xlane.xlu0 %2185
  %2187 = vmax.xlane.f32.xlu0 %v2184
  %v2188 = vpop.xlane.xlu0 %2187
  %v2189 = vsub.f32 %v2183, %v2186
  %v2190 = vsub.f32 %v2184, %v2188
  %v2191 = vmul.f32 %v2189, 1.442695
  %v2192 = vpow.pop %v2191
  %v2193 = vmul.f32 %v2190, 1.442695
  %v2194 = vpow.pop %v2193
  %2195 = vmatprep.subr.mxu0 0.0
  %2196 = vmatpush1.msra.mxu0 %v116
  %2197 = vmatprep.subr.mxu0 0.0
  %2198 = vmatpush1.msra.mxu0 %v115
  %2199 = vmatprep.subr.mxu0 0.0
  %2200 = vmatpush1.msra.mxu0 %v114
  %2201 = vmatprep.subr.mxu0 0.0
  %2202 = vmatpush1.msra.mxu0 %v113
  %2203 = vmatprep.subr.mxu0 0.0
  %2204 = vmatpush1.msra.mxu0 %v112
  %2205 = vmatprep.subr.mxu0 0.0
  %2206 = vmatpush1.msra.mxu0 %v111
  %2207 = vmatprep.subr.mxu0 0.0
  %2208 = vmatpush1.msra.mxu0 %v110
  %2209 = vmatprep.subr.mxu0 0.0
  %2210 = vmatpush1.msra.mxu0 %v109
  %2211 = vmatprep.subr.mxu0 0.0
  %2212 = vmatpush1.msra.mxu0 %v108
  %2213 = vmatprep.subr.mxu0 0.0
  %2214 = vmatpush1.msra.mxu0 %v107
  %2215 = vmatprep.subr.mxu0 0.0
  %2216 = vmatpush1.msra.mxu0 %v106
  %2217 = vmatprep.subr.mxu0 0.0
  %2218 = vmatpush1.msra.mxu0 %v105
  %2219 = vmatprep.subr.mxu0 0.0
  %2220 = vmatpush1.msra.mxu0 %v104
  %2221 = vmatprep.subr.mxu0 0.0
  %2222 = vmatpush1.msra.mxu0 %v103
  %2223 = vmatprep.subr.mxu0 0.0
  %2224 = vmatpush1.msra.mxu0 %v102
  %2225 = vmatprep.subr.mxu0 0.0
  %2226 = vmatpush1.msra.mxu0 %v101
  %2227 = vmatprep.subr.mxu0 0.0
  %2228 = vmatpush2.msra.mxu0 0.0
  %2229 = vmatprep.subr.mxu0 0.0
  %2230 = vmatpush2.msra.mxu0 0.0
  %2231 = vmatprep.subr.mxu0 0.0
  %2232 = vmatpush2.msra.mxu0 0.0
  %2233 = vmatprep.subr.mxu0 0.0
  %2234 = vmatpush2.msra.mxu0 0.0
  %2235 = vmatprep.subr.mxu0 0.0
  %2236 = vmatpush2.msra.mxu0 0.0
  %2237 = vmatprep.subr.mxu0 0.0
  %2238 = vmatpush2.msra.mxu0 0.0
  %2239 = vmatprep.subr.mxu0 0.0
  %2240 = vmatpush2.msra.mxu0 0.0
  %2241 = vmatprep.subr.mxu0 0.0
  %2242 = vmatpush2.msra.mxu0 0.0
  %2243 = vmatprep.subr.mxu0 0.0
  %2244 = vmatpush2.msra.mxu0 0.0
  %2245 = vmatprep.subr.mxu0 0.0
  %2246 = vmatpush2.msra.mxu0 0.0
  %2247 = vmatprep.subr.mxu0 0.0
  %2248 = vmatpush2.msra.mxu0 0.0
  %2249 = vmatprep.subr.mxu0 0.0
  %2250 = vmatpush2.msra.mxu0 0.0
  %2251 = vmatprep.subr.mxu0 0.0
  %2252 = vmatpush2.msra.mxu0 0.0
  %2253 = vmatprep.subr.mxu0 0.0
  %2254 = vmatpush2.msra.mxu0 0.0
  %2255 = vmatprep.subr.mxu0 0.0
  %2256 = vmatpush2.msra.mxu0 0.0
  %2257 = vmatprep.subr.mxu0 0.0
  %2258 = vmatpush2.msra.mxu0 0.0
  %2259 = vmatprep.mubr.f32.mxu0 0.0
  %2260 = vmatmul.mubr.f32.gmra.mxu0 %v2192
  %v2261 = vpop.f32.mrf.mxu0
  %v2262 = vadd.f32 0.0, %v2261
  %v2263 = vpop.f32.mrf.mxu0
  %2264 = vmatprep.mubr.f32.mxu0 0.0
  %2265 = vmatmul.mubr.f32.gmra.mxu0 %v2194
  %v2266 = vpop.f32.mrf.mxu0
  %v2267 = vadd.f32 0.0, %v2266
  %v2268 = vpop.f32.mrf.mxu0
  %2269 = vdwg.mxu0
  %v2270 = vrcp.pop %v2262
  %v2271 = vmul.f32 %v2192, %v2270
  %v2272 = vrcp.pop %v2267
  %v2273 = vmul.f32 %v2194, %v2272
  %2290 = vrot.lane.b32.xlu0 %v2036, 64
  %v2291 = vpop.permute.xlu0 %2290
  %2292 = vrot.lane.b32.xlu0 %v2037, 64
  %v2293 = vpop.permute.xlu0 %2292
  %2294 = vrot.lane.b32.xlu0 %v2038, 64
  %v2295 = vpop.permute.xlu0 %2294
  %2296 = vrot.lane.b32.xlu0 %v2039, 64
  %v2297 = vpop.permute.xlu0 %2296
  %2298 = vrot.lane.b32.xlu0 %v2040, 64
  %v2299 = vpop.permute.xlu0 %2298
  %2300 = vrot.lane.b32.xlu0 %v2041, 64
  %v2301 = vpop.permute.xlu0 %2300
  %2302 = vrot.lane.b32.xlu0 %v2042, 64
  %v2303 = vpop.permute.xlu0 %2302
  %2304 = vrot.lane.b32.xlu0 %v2043, 64
  %v2305 = vpop.permute.xlu0 %2304
  %2306 = vrot.lane.b32.xlu0 %v2044, 64
  %v2307 = vpop.permute.xlu0 %2306
  %2308 = vrot.lane.b32.xlu0 %v2045, 64
  %v2309 = vpop.permute.xlu0 %2308
  %2310 = vrot.lane.b32.xlu0 %v2046, 64
  %v2311 = vpop.permute.xlu0 %2310
  %2312 = vrot.lane.b32.xlu0 %v2047, 64
  %v2313 = vpop.permute.xlu0 %2312
  %2314 = vrot.lane.b32.xlu0 %v2048, 64
  %v2315 = vpop.permute.xlu0 %2314
  %2316 = vrot.lane.b32.xlu0 %v2049, 64
  %v2317 = vpop.permute.xlu0 %2316
  %2318 = vrot.lane.b32.xlu0 %v2050, 64
  %v2319 = vpop.permute.xlu0 %2318
  %2320 = vrot.lane.b32.xlu0 %v2051, 64
  %v2321 = vpop.permute.xlu0 %2320
  %2338 = vmatprep.subr.mxu0 0.0
  %2339 = vmatpush1.msra.mxu0 %v2321
  %2340 = vmatprep.subr.mxu0 0.0
  %2341 = vmatpush1.msra.mxu0 %v2319
  %2342 = vmatprep.subr.mxu0 0.0
  %2343 = vmatpush1.msra.mxu0 %v2317
  %2344 = vmatprep.subr.mxu0 0.0
  %2345 = vmatpush1.msra.mxu0 %v2315
  %2346 = vmatprep.subr.mxu0 0.0
  %2347 = vmatpush1.msra.mxu0 %v2313
  %2348 = vmatprep.subr.mxu0 0.0
  %2349 = vmatpush1.msra.mxu0 %v2311
  %2350 = vmatprep.subr.mxu0 0.0
  %2351 = vmatpush1.msra.mxu0 %v2309
  %2352 = vmatprep.subr.mxu0 0.0
  %2353 = vmatpush1.msra.mxu0 %v2307
  %2354 = vmatprep.subr.mxu0 0.0
  %2355 = vmatpush1.msra.mxu0 %v2305
  %2356 = vmatprep.subr.mxu0 0.0
  %2357 = vmatpush1.msra.mxu0 %v2303
  %2358 = vmatprep.subr.mxu0 0.0
  %2359 = vmatpush1.msra.mxu0 %v2301
  %2360 = vmatprep.subr.mxu0 0.0
  %2361 = vmatpush1.msra.mxu0 %v2299
  %2362 = vmatprep.subr.mxu0 0.0
  %2363 = vmatpush1.msra.mxu0 %v2297
  %2364 = vmatprep.subr.mxu0 0.0
  %2365 = vmatpush1.msra.mxu0 %v2295
  %2366 = vmatprep.subr.mxu0 0.0
  %2367 = vmatpush1.msra.mxu0 %v2293
  %2368 = vmatprep.subr.mxu0 0.0
  %2369 = vmatpush1.msra.mxu0 %v2291
  %2370 = vmatprep.subr.mxu0 0.0
  %2371 = vmatpush2.msra.mxu0 0.0
  %2372 = vmatprep.subr.mxu0 0.0
  %2373 = vmatpush2.msra.mxu0 0.0
  %2374 = vmatprep.subr.mxu0 0.0
  %2375 = vmatpush2.msra.mxu0 0.0
  %2376 = vmatprep.subr.mxu0 0.0
  %2377 = vmatpush2.msra.mxu0 0.0
  %2378 = vmatprep.subr.mxu0 0.0
  %2379 = vmatpush2.msra.mxu0 0.0
  %2380 = vmatprep.subr.mxu0 0.0
  %2381 = vmatpush2.msra.mxu0 0.0
  %2382 = vmatprep.subr.mxu0 0.0
  %2383 = vmatpush2.msra.mxu0 0.0
  %2384 = vmatprep.subr.mxu0 0.0
  %2385 = vmatpush2.msra.mxu0 0.0
  %2386 = vmatprep.subr.mxu0 0.0
  %2387 = vmatpush2.msra.mxu0 0.0
  %2388 = vmatprep.subr.mxu0 0.0
  %2389 = vmatpush2.msra.mxu0 0.0
  %2390 = vmatprep.subr.mxu0 0.0
  %2391 = vmatpush2.msra.mxu0 0.0
  %2392 = vmatprep.subr.mxu0 0.0
  %2393 = vmatpush2.msra.mxu0 0.0
  %2394 = vmatprep.subr.mxu0 0.0
  %2395 = vmatpush2.msra.mxu0 0.0
  %2396 = vmatprep.subr.mxu0 0.0
  %2397 = vmatpush2.msra.mxu0 0.0
  %2398 = vmatprep.subr.mxu0 0.0
  %2399 = vmatpush2.msra.mxu0 0.0
  %2400 = vmatprep.subr.mxu0 0.0
  %2401 = vmatpush2.msra.mxu0 0.0
  %2402 = vmatprep.mubr.f32.mxu0 0.0
  %2403 = vmatmul.mubr.f32.gmra.mxu0 %v2271
  %v2404 = vpop.f32.mrf.mxu0
  %v2405 = vadd.f32 0.0, %v2404
  %v2406 = vpop.f32.mrf.mxu0
  %2407 = vmatprep.mubr.f32.mxu0 0.0
  %2408 = vmatmul.mubr.f32.gmra.mxu0 %v2273
  %v2409 = vpop.f32.mrf.mxu0
  %v2410 = vadd.f32 0.0, %v2409
  %v2411 = vpop.f32.mrf.mxu0
  %2412 = vdwg.mxu0
  %v2413 = vld [vmem:[%s5 + $0x4] sm:$0x1]
  %v2415 = vlaneseq
  %v2416 = vshrl.u32 %v2415, 7
  %v2417 = vsub.s32 0, %v2416
  %v2418 = vrot.slane %v2413, %v2417
  %2427 = vrot.lane.b32.xlu0 %v2418, 64
  %v2428 = vpop.permute.xlu0 %2427
  %v2431 = vsel %vm145, %v2012, 0
  %v2434 = vsel %vm145, %v2017, 0
  %v2437 = vsel %vm145, %v2405, 0
  %v2440 = vsel %vm145, %v2410, 0
  %2442 = vmatprep.subr.mxu0 0.0
  %2443 = vmatpush1.msra.mxu0 0.0
  %2444 = vmatprep.subr.mxu0 0.0
  %2445 = vmatpush1.msra.mxu0 0.0
  %2446 = vmatprep.subr.mxu0 0.0
  %2447 = vmatpush1.msra.mxu0 0.0
  %2448 = vmatprep.subr.mxu0 0.0
  %2449 = vmatpush1.msra.mxu0 0.0
  %2450 = vmatprep.subr.mxu0 0.0
  %2451 = vmatpush1.msra.mxu0 0.0
  %2452 = vmatprep.subr.mxu0 0.0
  %2453 = vmatpush1.msra.mxu0 0.0
  %2454 = vmatprep.subr.mxu0 0.0
  %2455 = vmatpush1.msra.mxu0 0.0
  %2456 = vmatprep.subr.mxu0 0.0
  %2457 = vmatpush1.msra.mxu0 0.0
  %2458 = vmatprep.subr.mxu0 0.0
  %2459 = vmatpush1.msra.mxu0 %v1443
  %2460 = vmatprep.subr.mxu0 0.0
  %2461 = vmatpush1.msra.mxu0 %v1439
  %2462 = vmatprep.subr.mxu0 0.0
  %2463 = vmatpush1.msra.mxu0 %v1435
  %2464 = vmatprep.subr.mxu0 0.0
  %2465 = vmatpush1.msra.mxu0 %v1431
  %2466 = vmatprep.subr.mxu0 0.0
  %2467 = vmatpush1.msra.mxu0 %v1427
  %2468 = vmatprep.subr.mxu0 0.0
  %2469 = vmatpush1.msra.mxu0 %v1423
  %2470 = vmatprep.subr.mxu0 0.0
  %2471 = vmatpush1.msra.mxu0 %v1419
  %2472 = vmatprep.subr.mxu0 0.0
  %2473 = vmatpush1.msra.mxu0 %v1415
  %2474 = vmatprep.subr.mxu0 0.0
  %2475 = vmatpush2.msra.mxu0 0.0
  %2476 = vmatprep.subr.mxu0 0.0
  %2477 = vmatpush2.msra.mxu0 0.0
  %2478 = vmatprep.subr.mxu0 0.0
  %2479 = vmatpush2.msra.mxu0 0.0
  %2480 = vmatprep.subr.mxu0 0.0
  %2481 = vmatpush2.msra.mxu0 0.0
  %2482 = vmatprep.subr.mxu0 0.0
  %2483 = vmatpush2.msra.mxu0 0.0
  %2484 = vmatprep.subr.mxu0 0.0
  %2485 = vmatpush2.msra.mxu0 0.0
  %2486 = vmatprep.subr.mxu0 0.0
  %2487 = vmatpush2.msra.mxu0 0.0
  %2488 = vmatprep.subr.mxu0 0.0
  %2489 = vmatpush2.msra.mxu0 0.0
  %2490 = vmatprep.subr.mxu0 0.0
  %2491 = vmatpush2.msra.mxu0 0.0
  %2492 = vmatprep.subr.mxu0 0.0
  %2493 = vmatpush2.msra.mxu0 0.0
  %2494 = vmatprep.subr.mxu0 0.0
  %2495 = vmatpush2.msra.mxu0 0.0
  %2496 = vmatprep.subr.mxu0 0.0
  %2497 = vmatpush2.msra.mxu0 0.0
  %2498 = vmatprep.subr.mxu0 0.0
  %2499 = vmatpush2.msra.mxu0 0.0
  %2500 = vmatprep.subr.mxu0 0.0
  %2501 = vmatpush2.msra.mxu0 0.0
  %2502 = vmatprep.subr.mxu0 0.0
  %2503 = vmatpush2.msra.mxu0 0.0
  %2504 = vmatprep.subr.mxu0 0.0
  %2505 = vmatpush2.msra.mxu0 0.0
  %2506 = vmatprep.mubr.f32.mxu0 0.0
  %2507 = vmatmul.mubr.f32.gmra.mxu0 %v2431
  %v2508 = vpop.f32.mrf.mxu0
  %v2509 = vadd.f32 %v2428, %v2508
  %v2510 = vpop.f32.mrf.mxu0
  %2511 = vmatprep.mubr.f32.mxu0 0.0
  %2512 = vmatmul.mubr.f32.gmra.mxu0 %v2434
  %v2513 = vpop.f32.mrf.mxu0
  %v2514 = vadd.f32 %v2428, %v2513
  %v2515 = vpop.f32.mrf.mxu0
  %2516 = vmatprep.mubr.f32.mxu0 0.0
  %2517 = vmatmul.mubr.f32.gmra.mxu0 %v2437
  %v2518 = vpop.f32.mrf.mxu0
  %v2519 = vadd.f32 %v2428, %v2518
  %v2520 = vpop.f32.mrf.mxu0
  %2521 = vmatprep.mubr.f32.mxu0 0.0
  %2522 = vmatmul.mubr.f32.gmra.mxu0 %v2440
  %v2523 = vpop.f32.mrf.mxu0
  %v2524 = vadd.f32 %v2428, %v2523
  %v2525 = vpop.f32.mrf.mxu0
  %2526 = vdwg.mxu0
  %v2527 = vadd.f32 %v1254, %v2509
  %v2528 = vadd.f32 %v1255, %v2514
  %v2529 = vadd.f32 %v1256, %v2519
  %v2530 = vadd.f32 %v1257, %v2524
  %v2531 = vld [vmem:[%s5 + $0x5] sm:$0x1]
  %v2532 = vsel %vm145, %v2527, 0.0
  %2533 = vadd.xlane.f32.xlu0 %v2532
  %v2534 = vpop.xlane.xlu0 %2533
  %v2535 = vsel %vm145, %v2528, 0.0
  %2536 = vadd.xlane.f32.xlu0 %v2535
  %v2537 = vpop.xlane.xlu0 %2536
  %v2538 = vsel %vm145, %v2529, 0.0
  %2539 = vadd.xlane.f32.xlu0 %v2538
  %v2540 = vpop.xlane.xlu0 %2539
  %v2541 = vsel %vm145, %v2530, 0.0
  %2542 = vadd.xlane.f32.xlu0 %v2541
  %v2543 = vpop.xlane.xlu0 %2542
  %v2544 = vmul.f32 %v2534, %v1200
  %v2545 = vmul.f32 %v2537, %v1200
  %v2546 = vmul.f32 %v2540, %v1200
  %v2547 = vmul.f32 %v2543, %v1200
  %v2548 = vsub.f32 %v2527, %v2544
  %v2549 = vsub.f32 %v2528, %v2545
  %v2550 = vsub.f32 %v2529, %v2546
  %v2551 = vsub.f32 %v2530, %v2547
  %v2552 = vmul.f32 %v2548, %v2548
  %v2553 = vmul.f32 %v2549, %v2549
  %v2554 = vmul.f32 %v2550, %v2550
  %v2555 = vmul.f32 %v2551, %v2551
  %v2556 = vsel %vm145, %v2552, 0.0
  %2557 = vadd.xlane.f32.xlu0 %v2556
  %v2558 = vpop.xlane.xlu0 %2557
  %v2559 = vsel %vm145, %v2553, 0.0
  %2560 = vadd.xlane.f32.xlu0 %v2559
  %v2561 = vpop.xlane.xlu0 %2560
  %v2562 = vsel %vm145, %v2554, 0.0
  %2563 = vadd.xlane.f32.xlu0 %v2562
  %v2564 = vpop.xlane.xlu0 %2563
  %v2565 = vsel %vm145, %v2555, 0.0
  %2566 = vadd.xlane.f32.xlu0 %v2565
  %v2567 = vpop.xlane.xlu0 %2566
  %v2568 = vmul.f32 %v2558, %v1200
  %v2569 = vmul.f32 %v2561, %v1200
  %v2570 = vmul.f32 %v2564, %v1200
  %v2571 = vmul.f32 %v2567, %v1200
  %v2572 = vadd.f32 %v2568, 1e-05
  %v2573 = vadd.f32 %v2569, 1e-05
  %v2574 = vadd.f32 %v2570, 1e-05
  %v2575 = vadd.f32 %v2571, 1e-05
  %v2576 = vrsqrt.pop %v2572
  %v2577 = vrsqrt.pop %v2573
  %v2578 = vrsqrt.pop %v2574
  %v2579 = vrsqrt.pop %v2575
  %v2580 = vmul.f32 %v2548, %v2576
  %v2581 = vmul.f32 %v2549, %v2577
  %v2582 = vmul.f32 %v2550, %v2578
  %v2583 = vmul.f32 %v2551, %v2579
  %v2585 = vlaneseq
  %v2586 = vshrl.u32 %v2585, 7
  %v2587 = vsub.s32 0, %v2586
  %v2588 = vrot.slane %v2531, %v2587
  %v2590 = vmul.f32 %v2580, %v2588
  %v2591 = vmul.f32 %v2581, %v2588
  %v2592 = vmul.f32 %v2582, %v2588
  %v2593 = vmul.f32 %v2583, %v2588
  %2594 = vrot.lane.b32.xlu0 %v2588, 64
  %v2595 = vpop.permute.xlu0 %2594
  %v2597 = vadd.f32 %v2590, %v2595
  %v2598 = vadd.f32 %v2591, %v2595
  %v2599 = vadd.f32 %v2592, %v2595
  %v2600 = vadd.f32 %v2593, %v2595
  %v2601 = vld [vmem:[%s4 + $0x20] sm:$0xff]
  %v2602 = vld [vmem:[%s4 + $0x48] sm:$0xff]
  %v2603 = vld [vmem:[%s4 + $0x70] sm:$0xff]
  %v2604 = vld [vmem:[%s4 + $0x98] sm:$0xff]
  %v2605 = vld [vmem:[%s4 + $0xc0] sm:$0xff]
  %v2606 = vld [vmem:[%s4 + $0xe8] sm:$0xff]
  %v2607 = vld [vmem:[%s4 + $0x110] sm:$0xff]
  %v2608 = vld [vmem:[%s4 + $0x138] sm:$0xff]
  %v2609 = vld [vmem:[%s5 + $0x6] sm:$0x1]
  %v2611 = vlaneseq
  %v2612 = vshrl.u32 %v2611, 7
  %v2613 = vsub.s32 0, %v2612
  %v2614 = vrot.slane %v2609, %v2613
  %v2617 = vsel %vm145, %v2597, 0
  %v2620 = vsel %vm145, %v2598, 0
  %v2623 = vsel %vm145, %v2599, 0
  %v2626 = vsel %vm145, %v2600, 0
  %2628 = vmatprep.subr.mxu0 0.0
  %2629 = vmatpush1.msra.mxu0 0.0
  %2630 = vmatprep.subr.mxu0 0.0
  %2631 = vmatpush1.msra.mxu0 0.0
  %2632 = vmatprep.subr.mxu0 0.0
  %2633 = vmatpush1.msra.mxu0 0.0
  %2634 = vmatprep.subr.mxu0 0.0
  %2635 = vmatpush1.msra.mxu0 0.0
  %2636 = vmatprep.subr.mxu0 0.0
  %2637 = vmatpush1.msra.mxu0 0.0
  %2638 = vmatprep.subr.mxu0 0.0
  %2639 = vmatpush1.msra.mxu0 0.0
  %2640 = vmatprep.subr.mxu0 0.0
  %2641 = vmatpush1.msra.mxu0 0.0
  %2642 = vmatprep.subr.mxu0 0.0
  %2643 = vmatpush1.msra.mxu0 0.0
  %2644 = vmatprep.subr.mxu0 0.0
  %2645 = vmatpush1.msra.mxu0 %v2608
  %2646 = vmatprep.subr.mxu0 0.0
  %2647 = vmatpush1.msra.mxu0 %v2607
  %2648 = vmatprep.subr.mxu0 0.0
  %2649 = vmatpush1.msra.mxu0 %v2606
  %2650 = vmatprep.subr.mxu0 0.0
  %2651 = vmatpush1.msra.mxu0 %v2605
  %2652 = vmatprep.subr.mxu0 0.0
  %2653 = vmatpush1.msra.mxu0 %v2604
  %2654 = vmatprep.subr.mxu0 0.0
  %2655 = vmatpush1.msra.mxu0 %v2603
  %2656 = vmatprep.subr.mxu0 0.0
  %2657 = vmatpush1.msra.mxu0 %v2602
  %2658 = vmatprep.subr.mxu0 0.0
  %2659 = vmatpush1.msra.mxu0 %v2601
  %2660 = vmatprep.subr.mxu0 0.0
  %2661 = vmatpush2.msra.mxu0 0.0
  %2662 = vmatprep.subr.mxu0 0.0
  %2663 = vmatpush2.msra.mxu0 0.0
  %2664 = vmatprep.subr.mxu0 0.0
  %2665 = vmatpush2.msra.mxu0 0.0
  %2666 = vmatprep.subr.mxu0 0.0
  %2667 = vmatpush2.msra.mxu0 0.0
  %2668 = vmatprep.subr.mxu0 0.0
  %2669 = vmatpush2.msra.mxu0 0.0
  %2670 = vmatprep.subr.mxu0 0.0
  %2671 = vmatpush2.msra.mxu0 0.0
  %2672 = vmatprep.subr.mxu0 0.0
  %2673 = vmatpush2.msra.mxu0 0.0
  %2674 = vmatprep.subr.mxu0 0.0
  %2675 = vmatpush2.msra.mxu0 0.0
  %2676 = vmatprep.subr.mxu0 0.0
  %2677 = vmatpush2.msra.mxu0 0.0
  %2678 = vmatprep.subr.mxu0 0.0
  %2679 = vmatpush2.msra.mxu0 0.0
  %2680 = vmatprep.subr.mxu0 0.0
  %2681 = vmatpush2.msra.mxu0 0.0
  %2682 = vmatprep.subr.mxu0 0.0
  %2683 = vmatpush2.msra.mxu0 0.0
  %2684 = vmatprep.subr.mxu0 0.0
  %2685 = vmatpush2.msra.mxu0 0.0
  %2686 = vmatprep.subr.mxu0 0.0
  %2687 = vmatpush2.msra.mxu0 0.0
  %2688 = vmatprep.subr.mxu0 0.0
  %2689 = vmatpush2.msra.mxu0 0.0
  %2690 = vmatprep.subr.mxu0 0.0
  %2691 = vmatpush2.msra.mxu0 0.0
  %2692 = vmatprep.mubr.f32.mxu0 0.0
  %2693 = vmatmul.mubr.f32.gmra.mxu0 %v2617
  %v2694 = vpop.f32.mrf.mxu0
  %v2695 = vadd.f32 %v2614, %v2694
  %v2696 = vpop.f32.mrf.mxu0
  %2697 = vmatprep.mubr.f32.mxu0 0.0
  %2698 = vmatmul.mubr.f32.gmra.mxu0 %v2620
  %v2699 = vpop.f32.mrf.mxu0
  %v2700 = vadd.f32 %v2614, %v2699
  %v2701 = vpop.f32.mrf.mxu0
  %2702 = vmatprep.mubr.f32.mxu0 0.0
  %2703 = vmatmul.mubr.f32.gmra.mxu0 %v2623
  %v2704 = vpop.f32.mrf.mxu0
  %v2705 = vadd.f32 %v2614, %v2704
  %v2706 = vpop.f32.mrf.mxu0
  %2707 = vmatprep.mubr.f32.mxu0 0.0
  %2708 = vmatmul.mubr.f32.gmra.mxu0 %v2626
  %v2709 = vpop.f32.mrf.mxu0
  %v2710 = vadd.f32 %v2614, %v2709
  %v2711 = vpop.f32.mrf.mxu0
  %2712 = vdwg.mxu0
  %v2713 = vmax.f32 %v2695, 0.0
  %v2714 = vmax.f32 %v2700, 0.0
  %v2715 = vmax.f32 %v2705, 0.0
  %v2716 = vmax.f32 %v2710, 0.0
  %2725 = vrot.lane.b32.xlu0 %v2601, 64
  %v2726 = vpop.permute.xlu0 %2725
  %2727 = vrot.lane.b32.xlu0 %v2602, 64
  %v2728 = vpop.permute.xlu0 %2727
  %2729 = vrot.lane.b32.xlu0 %v2603, 64
  %v2730 = vpop.permute.xlu0 %2729
  %2731 = vrot.lane.b32.xlu0 %v2604, 64
  %v2732 = vpop.permute.xlu0 %2731
  %2733 = vrot.lane.b32.xlu0 %v2605, 64
  %v2734 = vpop.permute.xlu0 %2733
  %2735 = vrot.lane.b32.xlu0 %v2606, 64
  %v2736 = vpop.permute.xlu0 %2735
  %2737 = vrot.lane.b32.xlu0 %v2607, 64
  %v2738 = vpop.permute.xlu0 %2737
  %2739 = vrot.lane.b32.xlu0 %v2608, 64
  %v2740 = vpop.permute.xlu0 %2739
  %2749 = vrot.lane.b32.xlu0 %v2614, 64
  %v2750 = vpop.permute.xlu0 %2749
  %v2753 = vsel %vm145, %v2713, 0
  %v2756 = vsel %vm145, %v2714, 0
  %v2759 = vsel %vm145, %v2715, 0
  %v2762 = vsel %vm145, %v2716, 0
  %2764 = vmatprep.subr.mxu0 0.0
  %2765 = vmatpush1.msra.mxu0 0.0
  %2766 = vmatprep.subr.mxu0 0.0
  %2767 = vmatpush1.msra.mxu0 0.0
  %2768 = vmatprep.subr.mxu0 0.0
  %2769 = vmatpush1.msra.mxu0 0.0
  %2770 = vmatprep.subr.mxu0 0.0
  %2771 = vmatpush1.msra.mxu0 0.0
  %2772 = vmatprep.subr.mxu0 0.0
  %2773 = vmatpush1.msra.mxu0 0.0
  %2774 = vmatprep.subr.mxu0 0.0
  %2775 = vmatpush1.msra.mxu0 0.0
  %2776 = vmatprep.subr.mxu0 0.0
  %2777 = vmatpush1.msra.mxu0 0.0
  %2778 = vmatprep.subr.mxu0 0.0
  %2779 = vmatpush1.msra.mxu0 0.0
  %2780 = vmatprep.subr.mxu0 0.0
  %2781 = vmatpush1.msra.mxu0 %v2740
  %2782 = vmatprep.subr.mxu0 0.0
  %2783 = vmatpush1.msra.mxu0 %v2738
  %2784 = vmatprep.subr.mxu0 0.0
  %2785 = vmatpush1.msra.mxu0 %v2736
  %2786 = vmatprep.subr.mxu0 0.0
  %2787 = vmatpush1.msra.mxu0 %v2734
  %2788 = vmatprep.subr.mxu0 0.0
  %2789 = vmatpush1.msra.mxu0 %v2732
  %2790 = vmatprep.subr.mxu0 0.0
  %2791 = vmatpush1.msra.mxu0 %v2730
  %2792 = vmatprep.subr.mxu0 0.0
  %2793 = vmatpush1.msra.mxu0 %v2728
  %2794 = vmatprep.subr.mxu0 0.0
  %2795 = vmatpush1.msra.mxu0 %v2726
  %2796 = vmatprep.subr.mxu0 0.0
  %2797 = vmatpush2.msra.mxu0 0.0
  %2798 = vmatprep.subr.mxu0 0.0
  %2799 = vmatpush2.msra.mxu0 0.0
  %2800 = vmatprep.subr.mxu0 0.0
  %2801 = vmatpush2.msra.mxu0 0.0
  %2802 = vmatprep.subr.mxu0 0.0
  %2803 = vmatpush2.msra.mxu0 0.0
  %2804 = vmatprep.subr.mxu0 0.0
  %2805 = vmatpush2.msra.mxu0 0.0
  %2806 = vmatprep.subr.mxu0 0.0
  %2807 = vmatpush2.msra.mxu0 0.0
  %2808 = vmatprep.subr.mxu0 0.0
  %2809 = vmatpush2.msra.mxu0 0.0
  %2810 = vmatprep.subr.mxu0 0.0
  %2811 = vmatpush2.msra.mxu0 0.0
  %2812 = vmatprep.subr.mxu0 0.0
  %2813 = vmatpush2.msra.mxu0 0.0
  %2814 = vmatprep.subr.mxu0 0.0
  %2815 = vmatpush2.msra.mxu0 0.0
  %2816 = vmatprep.subr.mxu0 0.0
  %2817 = vmatpush2.msra.mxu0 0.0
  %2818 = vmatprep.subr.mxu0 0.0
  %2819 = vmatpush2.msra.mxu0 0.0
  %2820 = vmatprep.subr.mxu0 0.0
  %2821 = vmatpush2.msra.mxu0 0.0
  %2822 = vmatprep.subr.mxu0 0.0
  %2823 = vmatpush2.msra.mxu0 0.0
  %2824 = vmatprep.subr.mxu0 0.0
  %2825 = vmatpush2.msra.mxu0 0.0
  %2826 = vmatprep.subr.mxu0 0.0
  %2827 = vmatpush2.msra.mxu0 0.0
  %2828 = vmatprep.mubr.f32.mxu0 0.0
  %2829 = vmatmul.mubr.f32.gmra.mxu0 %v2753
  %v2830 = vpop.f32.mrf.mxu0
  %v2831 = vadd.f32 %v2750, %v2830
  %v2832 = vpop.f32.mrf.mxu0
  %2833 = vmatprep.mubr.f32.mxu0 0.0
  %2834 = vmatmul.mubr.f32.gmra.mxu0 %v2756
  %v2835 = vpop.f32.mrf.mxu0
  %v2836 = vadd.f32 %v2750, %v2835
  %v2837 = vpop.f32.mrf.mxu0
  %2838 = vmatprep.mubr.f32.mxu0 0.0
  %2839 = vmatmul.mubr.f32.gmra.mxu0 %v2759
  %v2840 = vpop.f32.mrf.mxu0
  %v2841 = vadd.f32 %v2750, %v2840
  %v2842 = vpop.f32.mrf.mxu0
  %2843 = vmatprep.mubr.f32.mxu0 0.0
  %2844 = vmatmul.mubr.f32.gmra.mxu0 %v2762
  %v2845 = vpop.f32.mrf.mxu0
  %v2846 = vadd.f32 %v2750, %v2845
  %v2847 = vpop.f32.mrf.mxu0
  %2848 = vdwg.mxu0
  %v2849 = vadd.f32 %v2597, %v2831
  %v2850 = vadd.f32 %v2598, %v2836
  %v2851 = vadd.f32 %v2599, %v2841
  %v2852 = vadd.f32 %v2600, %v2846
  %v2853 = vld [vmem:[%s5 + $0x7] sm:$0x1]
  %v2854 = vsel %vm145, %v2849, 0.0
  %2855 = vadd.xlane.f32.xlu0 %v2854
  %v2856 = vpop.xlane.xlu0 %2855
  %v2857 = vsel %vm145, %v2850, 0.0
  %2858 = vadd.xlane.f32.xlu0 %v2857
  %v2859 = vpop.xlane.xlu0 %2858
  %v2860 = vsel %vm145, %v2851, 0.0
  %2861 = vadd.xlane.f32.xlu0 %v2860
  %v2862 = vpop.xlane.xlu0 %2861
  %v2863 = vsel %vm145, %v2852, 0.0
  %2864 = vadd.xlane.f32.xlu0 %v2863
  %v2865 = vpop.xlane.xlu0 %2864
  %v2866 = vmul.f32 %v2856, %v1200
  %v2867 = vmul.f32 %v2859, %v1200
  %v2868 = vmul.f32 %v2862, %v1200
  %v2869 = vmul.f32 %v2865, %v1200
  %v2870 = vsub.f32 %v2849, %v2866
  %v2871 = vsub.f32 %v2850, %v2867
  %v2872 = vsub.f32 %v2851, %v2868
  %v2873 = vsub.f32 %v2852, %v2869
  %v2874 = vmul.f32 %v2870, %v2870
  %v2875 = vmul.f32 %v2871, %v2871
  %v2876 = vmul.f32 %v2872, %v2872
  %v2877 = vmul.f32 %v2873, %v2873
  %v2878 = vsel %vm145, %v2874, 0.0
  %2879 = vadd.xlane.f32.xlu0 %v2878
  %v2880 = vpop.xlane.xlu0 %2879
  %v2881 = vsel %vm145, %v2875, 0.0
  %2882 = vadd.xlane.f32.xlu0 %v2881
  %v2883 = vpop.xlane.xlu0 %2882
  %v2884 = vsel %vm145, %v2876, 0.0
  %2885 = vadd.xlane.f32.xlu0 %v2884
  %v2886 = vpop.xlane.xlu0 %2885
  %v2887 = vsel %vm145, %v2877, 0.0
  %2888 = vadd.xlane.f32.xlu0 %v2887
  %v2889 = vpop.xlane.xlu0 %2888
  %v2890 = vmul.f32 %v2880, %v1200
  %v2891 = vmul.f32 %v2883, %v1200
  %v2892 = vmul.f32 %v2886, %v1200
  %v2893 = vmul.f32 %v2889, %v1200
  %v2894 = vadd.f32 %v2890, 1e-05
  %v2895 = vadd.f32 %v2891, 1e-05
  %v2896 = vadd.f32 %v2892, 1e-05
  %v2897 = vadd.f32 %v2893, 1e-05
  %v2898 = vrsqrt.pop %v2894
  %v2899 = vrsqrt.pop %v2895
  %v2900 = vrsqrt.pop %v2896
  %v2901 = vrsqrt.pop %v2897
  %v2902 = vmul.f32 %v2870, %v2898
  %v2903 = vmul.f32 %v2871, %v2899
  %v2904 = vmul.f32 %v2872, %v2900
  %v2905 = vmul.f32 %v2873, %v2901
  %v2907 = vlaneseq
  %v2908 = vshrl.u32 %v2907, 7
  %v2909 = vsub.s32 0, %v2908
  %v2910 = vrot.slane %v2853, %v2909
  %v2912 = vmul.f32 %v2902, %v2910
  %v2913 = vmul.f32 %v2903, %v2910
  %v2914 = vmul.f32 %v2904, %v2910
  %v2915 = vmul.f32 %v2905, %v2910
  %2916 = vrot.lane.b32.xlu0 %v2910, 64
  %v2917 = vpop.permute.xlu0 %2916
  %v2919 = vadd.f32 %v2912, %v2917
  %v2920 = vadd.f32 %v2913, %v2917
  %v2921 = vadd.f32 %v2914, %v2917
  %v2922 = vadd.f32 %v2915, %v2917
  %2925 = vrot.lane.b32.xlu0 %v2921, 64
  %v2926 = vpop.permute.xlu0 %2925
  %2927 = vrot.lane.b32.xlu0 %v2922, 64
  %v2928 = vpop.permute.xlu0 %2927
  %v2931 = vsel %vm145, %v2919, %v2926
  %v2932 = vsel %vm145, %v2920, %v2928
  %2933 = vst [vmem:[%s10] sm:$0xff] %v2931
  %2934 = vst [vmem:[%s10 + $0x8] sm:$0xff] %v2932
  // Predicated region
  $region42: #{concat_attention_layer.1} parent=0 // pred_check
    _
  $region43: #{concat_attention_layer.1} parent=0 // pred_check_branch
    %2936 = sbr.rel (0) target = $region45
  $region44: #{concat_attention_layer.1} parent=0 // pred_region
    _
  $region45: #{concat_attention_layer.1} parent=0 // pred_fallthru
    _
  // Predicated region
  $region46: #{concat_attention_layer.1} parent=0 // pred_check
    _
  $region47: #{concat_attention_layer.1} parent=0 // pred_check_branch
    %2938 = sbr.rel (0) target = $region49
  $region48: #{concat_attention_layer.1} parent=0 // pred_region
    _
  $region49: #{concat_attention_layer.1} parent=0 // pred_fallthru
    _
  // Predicated region
  $region50: #{concat_attention_layer.1} parent=0 // pred_check
    _
  $region51: #{concat_attention_layer.1} parent=0 // pred_check_branch
    %2940 = sbr.rel (0) target = $region53
  $region52: #{concat_attention_layer.1} parent=0 // pred_region
    _
  $region53: #{concat_attention_layer.1} parent=0 // pred_fallthru
    _
  // Predicated region
  $region54: #{concat_attention_layer.1} parent=0 // pred_check
    _
  $region55: #{concat_attention_layer.1} parent=0 // pred_check_branch
    %2942 = sbr.rel (0) target = $region57
  $region56: #{concat_attention_layer.1} parent=0 // pred_region
    _
  $region57: #{concat_attention_layer.1} parent=0 // pred_fallthru
    _

</llo_original>
